<compile_context>
chip_gen: v6e
topology: v6e:2x2x1
jax: 0.10.0
libtpu: 0.0.40
codegen_flags: <defaults>
</compile_context>

<pallas_src>
import numpy as np
import jax
import jax.numpy as jnp
from jax.experimental import pallas as pl
from jax.experimental.pallas import tpu as pltpu

NCPAD = 128          # lane-dense padded width for MLP hiddens / classes
C1COLS = 25 * 14     # conv1 output columns per x-parity: 25 ch x 14 pooled-x positions
C2COLS = 32 * 5      # conv2 output columns per x-parity: 32 ch x 5 pooled-x positions

_VMEM = pl.BlockSpec(memory_space=pltpu.MemorySpace.VMEM)


# ----------------------------------------------------------------------------
# Pallas kernels
# ----------------------------------------------------------------------------

def fc1_bn_relu_kernel(x_ref, w_ref, s_ref, b_ref, o_ref):
    # Linear(in_features, 1024, bias=False) -> ReLU -> BatchNorm1d (eval, folded)
    h = jnp.dot(x_ref[...], w_ref[...], preferred_element_type=jnp.float32)
    h = jnp.maximum(h, 0.0)
    o_ref[...] = h * s_ref[...] + b_ref[...]


def head_kernel(img_ref, m1e_ref, m1o_ref, b2_ref, m2e_ref, m2o_ref, b3_ref,
                wf2_ref, bf2_ref, wf3_ref, bf3_ref, wf4_ref, bf4_ref,
                out_ref, xc1_ref, p1_ref, xc2_ref, p2_ref):
    f32 = jnp.float32

    # ---- Conv2d(1,25,5) + BN2d (scale folded in) + ReLU + MaxPool2d(2,2) ----
    # Banded matmuls: lhs = 28 consecutive image rows; rhs[ky] maps the 32 input
    # columns onto the 350 (= 25 ch x 14 pooled-x) output columns of one x-parity.
    c1e = jnp.zeros((28, C1COLS), f32)
    c1o = jnp.zeros((28, C1COLS), f32)
    for ky in range(5):
        rows = img_ref[pl.ds(ky, 28), :]                              # (28, 32)
        c1e = c1e + jnp.dot(rows, m1e_ref[ky], preferred_element_type=f32)
        c1o = c1o + jnp.dot(rows, m1o_ref[ky], preferred_element_type=f32)
    b2 = b2_ref[...]
    c1e = jnp.maximum(c1e + b2, 0.0)
    c1o = jnp.maximum(c1o + b2, 0.0)
    # x-direction of the pool = max over the two parities (identical layouts);
    # y-direction = max over even/odd rows via stride-2 scratch loads.
    xc1_ref[...] = jnp.maximum(c1e, c1o)                              # (28, 350)
    p1_ref[...] = jnp.maximum(xc1_ref[pl.ds(0, 14, 2), :],
                              xc1_ref[pl.ds(1, 14, 2), :])            # (14, 350)

    # ---- Conv2d(25,32,5) + BN2d + ReLU + MaxPool2d(2,2) ---------------------
    c2e = jnp.zeros((10, C2COLS), f32)
    c2o = jnp.zeros((10, C2COLS), f32)
    for ky in range(5):
        rows = p1_ref[pl.ds(ky, 10), :]                               # (10, 350)
        c2e = c2e + jnp.dot(rows, m2e_ref[ky], preferred_element_type=f32)
        c2o = c2o + jnp.dot(rows, m2o_ref[ky], preferred_element_type=f32)
    b3 = b3_ref[...]
    c2e = jnp.maximum(c2e + b3, 0.0)
    c2o = jnp.maximum(c2o + b3, 0.0)
    xc2_ref[...] = jnp.maximum(c2e, c2o)                              # (10, 160)
    p2_ref[...] = jnp.maximum(xc2_ref[pl.ds(0, 5, 2), :],
                              xc2_ref[pl.ds(1, 5, 2), :])             # (5, 160)

    # ---- Flatten (NCHW order folded into wf2) + MLP + Softmax ---------------
    z = bf2_ref[...]                                                  # (1, 128)
    for py in range(5):
        z = z + jnp.dot(p2_ref[pl.ds(py, 1), :], wf2_ref[py],
                        preferred_element_type=f32)
    z = jnp.maximum(z, 0.0)                                           # Linear(800,120)+ReLU
    z = jnp.maximum(jnp.dot(z, wf3_ref[...], preferred_element_type=f32)
                    + bf3_ref[...], 0.0)                              # Linear(120,84)+ReLU
    logits = (jnp.dot(z, wf4_ref[...], preferred_element_type=f32)
              + bf4_ref[...])                                         # Linear(84,C); pads -1e30
    m = jnp.max(logits, axis=-1, keepdims=True)
    e = jnp.exp(logits - m)
    out_ref[0] = e / jnp.sum(e, axis=-1, keepdims=True)


# ----------------------------------------------------------------------------
# Wrapper
# ----------------------------------------------------------------------------

def skin_lesion_classifier_head(features, prep):
    B = features.shape[0]
    nc = prep["num_classes"]

    # Stage 1: fc1 + ReLU + BatchNorm1d.  Single un-tiled matmul; the 2 MiB bf16
    # weight is the only non-trivial HBM stream of this stage.
    h = pl.pallas_call(
        fc1_bn_relu_kernel,
        out_shape=jax.ShapeDtypeStruct((B, 1024), jnp.float32),
        in_specs=[_VMEM] * 4,
        out_specs=_VMEM,
    )(features.astype(jnp.bfloat16), prep["w1"], prep["s1"], prep["b1"])

    # Unflatten(1, (1, 32, 32)) is a free row-major reshape of an 8 KiB tensor.
    img = h.reshape(B * 32, 32)

    # Stage 2: entire conv/pool/MLP/softmax head, one grid step per batch row.
    probs = pl.pallas_call(
        head_kernel,
        out_shape=jax.ShapeDtypeStruct((B, 1, NCPAD), jnp.float32),
        grid=(B,),
        in_specs=[
            pl.BlockSpec((32, 32), lambda b: (b, 0)),                   # image of batch b
            pl.BlockSpec((5, 32, C1COLS), lambda b: (0, 0, 0)),         # conv1 banded, even x
            pl.BlockSpec((5, 32, C1COLS), lambda b: (0, 0, 0)),         # conv1 banded, odd x
            pl.BlockSpec((1, C1COLS), lambda b: (0, 0)),                # BN2 shift (tiled)
            pl.BlockSpec((5, C1COLS, C2COLS), lambda b: (0, 0, 0)),     # conv2 banded, even x
            pl.BlockSpec((5, C1COLS, C2COLS), lambda b: (0, 0, 0)),     # conv2 banded, odd x
            pl.BlockSpec((1, C2COLS), lambda b: (0, 0)),                # BN3 shift (tiled)
            pl.BlockSpec((5, C2COLS, NCPAD), lambda b: (0, 0, 0)),      # fc2 (flatten folded)
            pl.BlockSpec((1, NCPAD), lambda b: (0, 0)),
            pl.BlockSpec((NCPAD, NCPAD), lambda b: (0, 0)),             # fc3 (padded)
            pl.BlockSpec((1, NCPAD), lambda b: (0, 0)),
            pl.BlockSpec((NCPAD, NCPAD), lambda b: (0, 0)),             # fc4 (padded)
            pl.BlockSpec((1, NCPAD), lambda b: (0, 0)),
        ],
        out_specs=pl.BlockSpec((1, 1, NCPAD), lambda b: (b, 0, 0)),
        scratch_shapes=[
            pltpu.VMEM((28, C1COLS), jnp.float32),   # conv1 post-act, x-pooled
            pltpu.VMEM((14, C1COLS), jnp.float32),   # pool1
            pltpu.VMEM((10, C2COLS), jnp.float32),   # conv2 post-act, x-pooled
            pltpu.VMEM((5, C2COLS), jnp.float32),    # pool2
        ],
        compiler_params=pltpu.CompilerParams(
            dimension_semantics=("parallel",),
            vmem_limit_bytes=32 * 1024 * 1024),
    )(img, prep["m1e"], prep["m1o"], prep["b2t"], prep["m2e"], prep["m2o"],
      prep["b3t"], prep["wf2"], prep["bf2"], prep["wf3"], prep["bf3"],
      prep["wf4"], prep["bf4"])

    return probs.reshape(B, NCPAD)[:, :nc]


# ----------------------------------------------------------------------------
# Parameter preparation (host side, runs once)
# ----------------------------------------------------------------------------

def bn_fold(gamma, beta, mean, var, eps=1e-5, extra_bias=None):
    scale = gamma / jnp.sqrt(var + eps)
    shift = beta - mean * scale
    if extra_bias is not None:          # fold a preceding conv bias into the BN shift
        shift = shift + extra_bias * scale
    return scale.astype(jnp.float32), shift.astype(jnp.float32)


def prepare_params(p, num_classes):
    """Fold BatchNorms, bake conv taps / pool-x parity / NCHW flatten into the
    banded matmul weights, pad MLP widths to 128 lanes, cast w_fc1 to bf16."""
    assert num_classes <= NCPAD

    s1, b1 = bn_fold(**p["bn1"])
    sc2, sh2 = bn_fold(**p["bn2"], extra_bias=p["b_conv1"])
    sc3, sh3 = bn_fold(**p["bn3"], extra_bias=p["b_conv2"])
    sc2, sh2 = np.asarray(sc2, np.float32), np.asarray(sh2, np.float32)
    sc3, sh3 = np.asarray(sc3, np.float32), np.asarray(sh3, np.float32)

    w1 = np.asarray(p["w_conv1"], np.float32)[:, 0] * sc2[:, None, None]    # (25,5,5)
    w2 = np.asarray(p["w_conv2"], np.float32) * sc3[:, None, None, None]    # (32,25,5,5)

    co1 = np.arange(25)
    m1 = np.zeros((2, 5, 32, C1COLS), np.float32)
    # m1[par, ky, x, 14*co + j] = w1[co, ky, x - (2j+par)]   (conv1 ox = 2j+par)
    for par in range(2):
        for ky in range(5):
            for kx in range(5):
                for j in range(14):
                    m1[par, ky, 2 * j + par + kx, 14 * co1 + j] = w1[:, ky, kx]
    b2t = np.repeat(sh2, 14).reshape(1, C1COLS)

    ci = np.arange(25)
    co2 = np.arange(32)
    m2 = np.zeros((2, 5, C1COLS, C2COLS), np.float32)
    # m2[par, ky, 14*ci + px, 5*co2 + m] = w2[co2, ci, ky, px - (2m+par)]
    for par in range(2):
        for ky in range(5):
            for kx in range(5):
                for m in range(5):
                    rows = 14 * ci + (2 * m + par + kx)
                    cols = 5 * co2 + m
                    m2[par, ky, rows[:, None], cols[None, :]] = w2[:, :, ky, kx].T
    b3t = np.repeat(sh3, 5).reshape(1, C2COLS)

    # Linear(800,120) with the torch NCHW flatten of (32,5,5) folded into the
    # kernel's pool2 layout (row py, column 5*co2 + px).
    wfc2 = np.asarray(p["w_fc2"], np.float32)
    wf2 = np.zeros((5, C2COLS, NCPAD), np.float32)
    for py in range(5):
        for px in range(5):
            wf2[py, 5 * co2 + px, :120] = wfc2[25 * co2 + 5 * py + px, :]
    bf2 = np.zeros((1, NCPAD), np.float32)
    bf2[0, :120] = np.asarray(p["b_fc2"], np.float32)

    wf3 = np.zeros((NCPAD, NCPAD), np.float32)
    wf3[:120, :84] = np.asarray(p["w_fc3"], np.float32)
    bf3 = np.zeros((1, NCPAD), np.float32)
    bf3[0, :84] = np.asarray(p["b_fc3"], np.float32)

    wf4 = np.zeros((NCPAD, NCPAD), np.float32)
    wf4[:84, :num_classes] = np.asarray(p["w_fc4"], np.float32)
    bf4 = np.full((1, NCPAD), -1e30, np.float32)     # padded classes -> softmax prob 0
    bf4[0, :num_classes] = np.asarray(p["b_fc4"], np.float32)

    return dict(
        num_classes=num_classes,
        w1=p["w_fc1"].astype(jnp.bfloat16),
        s1=jnp.asarray(s1).reshape(1, -1),
        b1=jnp.asarray(b1).reshape(1, -1),
        m1e=jnp.asarray(m1[0]), m1o=jnp.asarray(m1[1]), b2t=jnp.asarray(b2t),
        m2e=jnp.asarray(m2[0]), m2o=jnp.asarray(m2[1]), b3t=jnp.asarray(b3t),
        wf2=jnp.asarray(wf2), bf2=jnp.asarray(bf2),
        wf3=jnp.asarray(wf3), bf3=jnp.asarray(bf3),
        wf4=jnp.asarray(wf4), bf4=jnp.asarray(bf4),
    )


# ----------------------------------------------------------------------------
# Random parameters matching the PyTorch module structure
# ----------------------------------------------------------------------------

def init_params(key, num_classes, in_features):
    ks = list(jax.random.split(key, 30))
    ki = iter(ks)

    def nrm(shape, s):
        return s * jax.random.normal(next(ki), shape, jnp.float32)

    def bn(n):
        return dict(
            gamma=1.0 + 0.1 * jax.random.normal(next(ki), (n,), jnp.float32),
            beta=0.1 * jax.random.normal(next(ki), (n,), jnp.float32),
            mean=0.1 * jax.random.normal(next(ki), (n,), jnp.float32),
            var=jax.random.uniform(next(ki), (n,), jnp.float32, 0.5, 1.5),
        )

    p = {}
    p["w_fc1"] = nrm((in_features, 1024), 0.02)            # Linear(in_features, 1024, bias=False)
    p["bn1"] = bn(1024)                                    # BatchNorm1d(1024)
    p["w_conv1"] = nrm((25, 1, 5, 5), 0.10)                # Conv2d(1, 25, 5)
    p["b_conv1"] = nrm((25,), 0.10)
    p["bn2"] = bn(25)                                      # BatchNorm2d(25)
    p["w_conv2"] = nrm((32, 25, 5, 5), 0.05)               # Conv2d(25, 32, 5)
    p["b_conv2"] = nrm((32,), 0.05)
    p["bn3"] = bn(32)                                      # BatchNorm2d(32)
    p["w_fc2"] = nrm((800, 120), 0.05); p["b_fc2"] = nrm((120,), 0.05)
    p["w_fc3"] = nrm((120, 84), 0.05);  p["b_fc3"] = nrm((84,), 0.05)
    p["w_fc4"] = nrm((84, num_classes), 0.05); p["b_fc4"] = nrm((num_classes,), 0.05)
    return p


# ----------------------------------------------------------------------------
# Pure-JAX reference (independent ops) for the correctness check
# ----------------------------------------------------------------------------

def _ref_forward(features, p, eps=1e-5):
    bn1 = p["bn1"]
    # Mirror the kernel's intentional bf16 quantization of the fc1 operands.
    xq = features.astype(jnp.bfloat16).astype(jnp.float32)
    w1q = p["w_fc1"].astype(jnp.bfloat16).astype(jnp.float32)
    h = jnp.maximum(xq @ w1q, 0.0)
    h = (h - bn1["mean"]) / jnp.sqrt(bn1["var"] + eps) * bn1["gamma"] + bn1["beta"]
    x = h.reshape(-1, 1, 32, 32)

    def conv(x, w, b):
        y = jax.lax.conv_general_dilated(x, w, (1, 1), "VALID",
                                         dimension_numbers=("NCHW", "OIHW", "NCHW"))
        return y + b[None, :, None, None]

    def bn2d(x, bn):
        return ((x - bn["mean"][None, :, None, None])
                / jnp.sqrt(bn["var"][None, :, None, None] + eps)
                * bn["gamma"][None, :, None, None] + bn["beta"][None, :, None, None])

    def pool(x):
        return jax.lax.reduce_window(x, -jnp.inf, jax.lax.max,
                                     (1, 1, 2, 2), (1, 1, 2, 2), "VALID")

    x = pool(jnp.maximum(bn2d(conv(x, p["w_conv1"], p["b_conv1"]), p["bn2"]), 0.0))
    x = pool(jnp.maximum(bn2d(conv(x, p["w_conv2"], p["b_conv2"]), p["bn3"]), 0.0))
    x = x.reshape(x.shape[0], -1)
    x = jnp.maximum(x @ p["w_fc2"] + p["b_fc2"], 0.0)
    x = jnp.maximum(x @ p["w_fc3"] + p["b_fc3"], 0.0)
    return jax.nn.softmax(x @ p["w_fc4"] + p["b_fc4"], axis=-1)


# ----------------------------------------------------------------------------

if __name__ == "__main__":
    B = 2
    NUM_CLASSES = 7          # e.g. HAM10000 skin-lesion classes
    IN_FEATURES = 1024       # mobilenetv3_small_050 classifier in_features

    key = jax.random.PRNGKey(0)
    k_feat, k_param = jax.random.split(key)
    features = jax.random.normal(k_feat, (B, IN_FEATURES), jnp.float32)
    params = init_params(k_param, NUM_CLASSES, IN_FEATURES)
    prep = prepare_params(params, NUM_CLASSES)

    out = skin_lesion_classifier_head(features, prep)
    out = jax.block_until_ready(out)

    assert out.shape == (B, NUM_CLASSES)
    assert jnp.allclose(jnp.sum(out, axis=-1), 1.0, atol=1e-4)

    ref = jax.block_until_ready(_ref_forward(features, params))
    assert jnp.allclose(out, ref, atol=2e-3, rtol=2e-3), (out, ref)

    print("KERNEL_OK")
</pallas_src>

<mosaic_0001>
module attributes {stable_mosaic.version = 11 : i64} {
  func.func @fc1_bn_relu_kernel(%arg0: memref<2x1024xbf16, #tpu.memory_space<vmem>>, %arg1: memref<1024x1024xbf16, #tpu.memory_space<vmem>>, %arg2: memref<1x1024xf32, #tpu.memory_space<vmem>>, %arg3: memref<1x1024xf32, #tpu.memory_space<vmem>>, %arg4: memref<2x1024xf32, #tpu.memory_space<vmem>>) attributes {dimension_semantics = [], scalar_prefetch = 0 : i64, scratch_operands = 0 : i64, tpu.core_type = #tpu.core_type<tc>} {
    %c0 = arith.constant 0 : index
    %c0_0 = arith.constant 0 : index
    %0 = vector.load %arg0[%c0, %c0_0] : memref<2x1024xbf16, #tpu.memory_space<vmem>>, vector<2x1024xbf16>
    %c0_1 = arith.constant 0 : index
    %c0_2 = arith.constant 0 : index
    %1 = vector.load %arg1[%c0_1, %c0_2] : memref<1024x1024xbf16, #tpu.memory_space<vmem>>, vector<1024x1024xbf16>
    %cst = arith.constant dense<0.000000e+00> : vector<2x1024xf32>
    %2 = tpu.matmul %0, %1, %cst {dimension_numbers = #tpu.dot_dimension_numbers<[1], [0], [0], [1], [0, 0, 1, 1], [], []>} : vector<2x1024xbf16>, vector<1024x1024xbf16>, vector<2x1024xf32> -> vector<2x1024xf32>
    %cst_3 = arith.constant 0.000000e+00 : f32
    %3 = vector.broadcast %cst_3 : f32 to vector<2x1024xf32>
    %4 = arith.maximumf %2, %3 : vector<2x1024xf32>
    %c0_4 = arith.constant 0 : index
    %c0_5 = arith.constant 0 : index
    %5 = vector.load %arg2[%c0_4, %c0_5] : memref<1x1024xf32, #tpu.memory_space<vmem>>, vector<1x1024xf32>
    %6 = vector.broadcast %5 : vector<1x1024xf32> to vector<2x1024xf32>
    %7 = arith.mulf %4, %6 : vector<2x1024xf32>
    %c0_6 = arith.constant 0 : index
    %c0_7 = arith.constant 0 : index
    %8 = vector.load %arg3[%c0_6, %c0_7] : memref<1x1024xf32, #tpu.memory_space<vmem>>, vector<1x1024xf32>
    %9 = vector.broadcast %8 : vector<1x1024xf32> to vector<2x1024xf32>
    %10 = arith.addf %7, %9 : vector<2x1024xf32>
    %c0_8 = arith.constant 0 : index
    %c0_9 = arith.constant 0 : index
    %11 = vector.load %arg4[%c0_8, %c0_9] : memref<2x1024xf32, #tpu.memory_space<vmem>>, vector<2x1024xf32>
    tpu.vector_store %arg4[%c0_8, %c0_9], %10 {strides = array<i32>} : memref<2x1024xf32, #tpu.memory_space<vmem>>, vector<2x1024xf32>,
    return
  }
}

</mosaic_0001>

<llo_original>
// kernel: tpu_custom_call.1
$region0: #{tpu_custom_call.1}
  #allocation0 [shape = 'u32[]', space=smem, size = 0x4, offset = 0x4, fixed_abs, tag = 'smem constant byte address 0x4 - core index']
  #allocation1 [shape = 'u32[144,128]{1,0:T(1,128)}', space=vmem, size = 0x12000, scoped, tag = 'internal scratch']
  %s0 = inlined_call_operand.hbm [shape: bf16[2,1024], index: 0, kind: input, shape index: {}]
  %s1 = inlined_call_operand.hbm [shape: bf16[1024,1024], index: 1, kind: input, shape index: {}]
  %s2 = inlined_call_operand.hbm [shape: f32[1,1024], index: 2, kind: input, shape index: {}]
  %s3 = inlined_call_operand.hbm [shape: f32[1,1024], index: 3, kind: input, shape index: {}]
  %s4 = inlined_call_operand.hbm [shape: f32[2,1024], index: 4, kind: output, shape index: {}]
  %s5 = sld [smem:[#allocation0]]
  $region42: #{tpu_custom_call.1} parent=0
    _
  %s7 = ssub.s32 1, %s5
  %s8 = scalar_select 0, %s7, %s5
  $region1: #{tpu_custom_call.1} parent=0
    #allocation2 [shape = 'u8[4096]{0}', space=vmem, size = 0x1000, scoped, tag = 'input window, operand 0, single buffered']
    #allocation3 [shape = 's32[1]{0}', space=sflag, size = 0x4, scoped, tag = 'scoped memory for tpu_custom_call.1']
    #allocation4 [shape = 's32[1]{0}', space=sflag, size = 0x4, scoped, tag = 'scoped memory for tpu_custom_call.1']
    #allocation5 [shape = 'u8[2097152]{0}', space=vmem, size = 0x200000, scoped, tag = 'input window, operand 1, single buffered']
    #allocation6 [shape = 's32[1]{0}', space=sflag, size = 0x4, scoped, tag = 'scoped memory for tpu_custom_call.1']
    #allocation7 [shape = 'u8[4096]{0}', space=vmem, size = 0x1000, scoped, tag = 'input window, operand 2, single buffered']
    #allocation8 [shape = 'u8[4096]{0}', space=vmem, size = 0x1000, scoped, tag = 'input window, operand 3, single buffered']
    #allocation9 [shape = 's32[1]{0}', space=sflag, size = 0x4, scoped, tag = 'scoped memory for tpu_custom_call.1']
    #allocation10 [shape = 'u8[8192]{0}', space=vmem, size = 0x2000, scoped, tag = 'output window, operand 0, single buffered']
    %9 = vsyncpa [#allocation3], 0
    %10 = vsyncpa [#allocation6], 0
    %11 = vsyncpa [#allocation9], 0
    %12 = vsyncpa [#allocation4], 0
    // Predicated region
    $region2: #{tpu_custom_call.1} parent=1 // pred_check
      _
    $region3: #{tpu_custom_call.1} parent=1 // pred_check_branch
      %14 = sbr.rel (0) target = $region5
    $region4: #{tpu_custom_call.1} parent=1 // pred_region
      %s16 = ssub.s32 128, 128
      %17 = vsyncadd [#allocation3], %s16
      %s19 = sshll.u32 [#allocation2], 4
      %s20 = int_to_ptr.vmem [resolvable:$true] %s19
      %22 = dma.hbm_to_vmem [thread:$0]  %s0, 128, %s20, [#allocation3]
    $region5: #{tpu_custom_call.1} parent=1 // pred_fallthru
      _
    // Predicated region
    $region6: #{tpu_custom_call.1} parent=1 // pred_check
      _
    $region7: #{tpu_custom_call.1} parent=1 // pred_check_branch
      %24 = sbr.rel (0) target = $region9
    $region8: #{tpu_custom_call.1} parent=1 // pred_region
      %s26 = ssub.s32 65536, 65536
      %27 = vsyncadd [#allocation6], %s26
      %s28 = sshll.u32 [#allocation5], 4
      %s29 = int_to_ptr.vmem [resolvable:$true] %s28
      %34 = dma.hbm_to_vmem [thread:$0]  %s1, 65536, %s29, [#allocation6], 512, 512, 32
    $region9: #{tpu_custom_call.1} parent=1 // pred_fallthru
      _
    // Predicated region
    $region10: #{tpu_custom_call.1} parent=1 // pred_check
      _
    $region11: #{tpu_custom_call.1} parent=1 // pred_check_branch
      %36 = sbr.rel (0) target = $region13
    $region12: #{tpu_custom_call.1} parent=1 // pred_region
      %s38 = ssub.s32 128, 128
      %39 = vsyncadd [#allocation6], %s38
      %s41 = sshll.u32 [#allocation7], 4
      %s42 = int_to_ptr.vmem [resolvable:$true] %s41
      %44 = dma.hbm_to_vmem [thread:$0]  %s2, 128, %s42, [#allocation6]
    $region13: #{tpu_custom_call.1} parent=1 // pred_fallthru
      _
    // Predicated region
    $region14: #{tpu_custom_call.1} parent=1 // pred_check
      _
    $region15: #{tpu_custom_call.1} parent=1 // pred_check_branch
      %46 = sbr.rel (0) target = $region17
    $region16: #{tpu_custom_call.1} parent=1 // pred_region
      %s48 = ssub.s32 128, 128
      %49 = vsyncadd [#allocation9], %s48
      %s51 = sshll.u32 [#allocation8], 4
      %s52 = int_to_ptr.vmem [resolvable:$true] %s51
      %54 = dma.hbm_to_vmem [thread:$0]  %s3, 128, %s52, [#allocation9]
    $region17: #{tpu_custom_call.1} parent=1 // pred_fallthru
      _
    // Predicated region
    $region18: #{tpu_custom_call.1} parent=1 // pred_check
      _
    $region19: #{tpu_custom_call.1} parent=1 // pred_check_branch
      %56 = sbr.rel (0) target = $region21
    $region20: #{tpu_custom_call.1} parent=1 // pred_region
      %57 = dma.done [#allocation3], 128
    $region21: #{tpu_custom_call.1} parent=1 // pred_fallthru
      _
    // Predicated region
    $region22: #{tpu_custom_call.1} parent=1 // pred_check
      _
    $region23: #{tpu_custom_call.1} parent=1 // pred_check_branch
      %59 = sbr.rel (0) target = $region25
    $region24: #{tpu_custom_call.1} parent=1 // pred_region
      %60 = dma.done [#allocation6], 65536
    $region25: #{tpu_custom_call.1} parent=1 // pred_fallthru
      _
    // Predicated region
    $region26: #{tpu_custom_call.1} parent=1 // pred_check
      _
    $region27: #{tpu_custom_call.1} parent=1 // pred_check_branch
      %62 = sbr.rel (0) target = $region29
    $region28: #{tpu_custom_call.1} parent=1 // pred_region
      %63 = dma.done [#allocation6], 128
    $region29: #{tpu_custom_call.1} parent=1 // pred_fallthru
      _
    // Predicated region
    $region30: #{tpu_custom_call.1} parent=1 // pred_check
      _
    $region31: #{tpu_custom_call.1} parent=1 // pred_check_branch
      %65 = sbr.rel (0) target = $region33
    $region32: #{tpu_custom_call.1} parent=1 // pred_region
      %66 = dma.done [#allocation9], 128
    $region33: #{tpu_custom_call.1} parent=1 // pred_fallthru
      _
    %v67 = vld [vmem:[#allocation2] sm:$0xff]
    %v68 = vld [vmem:[#allocation5] sm:$0xff]
    %v69 = vld [vmem:[#allocation5 + $0x8] sm:$0xff]
    %v70 = vld [vmem:[#allocation5 + $0x10] sm:$0xff]
    %v71 = vld [vmem:[#allocation5 + $0x18] sm:$0xff]
    %v72 = vld [vmem:[#allocation5 + $0x20] sm:$0xff]
    %v73 = vld [vmem:[#allocation5 + $0x28] sm:$0xff]
    %v74 = vld [vmem:[#allocation5 + $0x30] sm:$0xff]
    %v75 = vld [vmem:[#allocation5 + $0x38] sm:$0xff]
    %v76 = vld [vmem:[#allocation5 + $0x40] sm:$0xff]
    %v77 = vld [vmem:[#allocation5 + $0x48] sm:$0xff]
    %v78 = vld [vmem:[#allocation5 + $0x50] sm:$0xff]
    %v79 = vld [vmem:[#allocation5 + $0x58] sm:$0xff]
    %v80 = vld [vmem:[#allocation5 + $0x60] sm:$0xff]
    %v81 = vld [vmem:[#allocation5 + $0x68] sm:$0xff]
    %v82 = vld [vmem:[#allocation5 + $0x70] sm:$0xff]
    %v83 = vld [vmem:[#allocation5 + $0x78] sm:$0xff]
    %v84 = vld [vmem:[#allocation5 + $0x80] sm:$0xff]
    %v85 = vld [vmem:[#allocation5 + $0x88] sm:$0xff]
    %v86 = vld [vmem:[#allocation5 + $0x90] sm:$0xff]
    %v87 = vld [vmem:[#allocation5 + $0x98] sm:$0xff]
    %v88 = vld [vmem:[#allocation5 + $0xa0] sm:$0xff]
    %v89 = vld [vmem:[#allocation5 + $0xa8] sm:$0xff]
    %v90 = vld [vmem:[#allocation5 + $0xb0] sm:$0xff]
    %v91 = vld [vmem:[#allocation5 + $0xb8] sm:$0xff]
    %v92 = vld [vmem:[#allocation5 + $0xc0] sm:$0xff]
    %v93 = vld [vmem:[#allocation5 + $0xc8] sm:$0xff]
    %v94 = vld [vmem:[#allocation5 + $0xd0] sm:$0xff]
    %v95 = vld [vmem:[#allocation5 + $0xd8] sm:$0xff]
    %v96 = vld [vmem:[#allocation5 + $0xe0] sm:$0xff]
    %v97 = vld [vmem:[#allocation5 + $0xe8] sm:$0xff]
    %v98 = vld [vmem:[#allocation5 + $0xf0] sm:$0xff]
    %v99 = vld [vmem:[#allocation5 + $0xf8] sm:$0xff]
    %v100 = vld [vmem:[#allocation5 + $0x100] sm:$0xff]
    %v101 = vld [vmem:[#allocation5 + $0x108] sm:$0xff]
    %v102 = vld [vmem:[#allocation5 + $0x110] sm:$0xff]
    %v103 = vld [vmem:[#allocation5 + $0x118] sm:$0xff]
    %v104 = vld [vmem:[#allocation5 + $0x120] sm:$0xff]
    %v105 = vld [vmem:[#allocation5 + $0x128] sm:$0xff]
    %v106 = vld [vmem:[#allocation5 + $0x130] sm:$0xff]
    %v107 = vld [vmem:[#allocation5 + $0x138] sm:$0xff]
    %v108 = vld [vmem:[#allocation5 + $0x140] sm:$0xff]
    %v109 = vld [vmem:[#allocation5 + $0x148] sm:$0xff]
    %v110 = vld [vmem:[#allocation5 + $0x150] sm:$0xff]
    %v111 = vld [vmem:[#allocation5 + $0x158] sm:$0xff]
    %v112 = vld [vmem:[#allocation5 + $0x160] sm:$0xff]
    %v113 = vld [vmem:[#allocation5 + $0x168] sm:$0xff]
    %v114 = vld [vmem:[#allocation5 + $0x170] sm:$0xff]
    %v115 = vld [vmem:[#allocation5 + $0x178] sm:$0xff]
    %v116 = vld [vmem:[#allocation5 + $0x180] sm:$0xff]
    %v117 = vld [vmem:[#allocation5 + $0x188] sm:$0xff]
    %v118 = vld [vmem:[#allocation5 + $0x190] sm:$0xff]
    %v119 = vld [vmem:[#allocation5 + $0x198] sm:$0xff]
    %v120 = vld [vmem:[#allocation5 + $0x1a0] sm:$0xff]
    %v121 = vld [vmem:[#allocation5 + $0x1a8] sm:$0xff]
    %v122 = vld [vmem:[#allocation5 + $0x1b0] sm:$0xff]
    %v123 = vld [vmem:[#allocation5 + $0x1b8] sm:$0xff]
    %v124 = vld [vmem:[#allocation5 + $0x1c0] sm:$0xff]
    %v125 = vld [vmem:[#allocation5 + $0x1c8] sm:$0xff]
    %v126 = vld [vmem:[#allocation5 + $0x1d0] sm:$0xff]
    %v127 = vld [vmem:[#allocation5 + $0x1d8] sm:$0xff]
    %v128 = vld [vmem:[#allocation5 + $0x1e0] sm:$0xff]
    %v129 = vld [vmem:[#allocation5 + $0x1e8] sm:$0xff]
    %v130 = vld [vmem:[#allocation5 + $0x1f0] sm:$0xff]
    %v131 = vld [vmem:[#allocation5 + $0x1f8] sm:$0xff]
    %v132 = vld [vmem:[#allocation5 + $0x200] sm:$0xff]
    %v133 = vld [vmem:[#allocation5 + $0x208] sm:$0xff]
    %v134 = vld [vmem:[#allocation5 + $0x210] sm:$0xff]
    %v135 = vld [vmem:[#allocation5 + $0x218] sm:$0xff]
    %v136 = vld [vmem:[#allocation5 + $0x220] sm:$0xff]
    %v137 = vld [vmem:[#allocation5 + $0x228] sm:$0xff]
    %v138 = vld [vmem:[#allocation5 + $0x230] sm:$0xff]
    %v139 = vld [vmem:[#allocation5 + $0x238] sm:$0xff]
    %v140 = vld [vmem:[#allocation5 + $0x240] sm:$0xff]
    %v141 = vld [vmem:[#allocation5 + $0x248] sm:$0xff]
    %v142 = vld [vmem:[#allocation5 + $0x250] sm:$0xff]
    %v143 = vld [vmem:[#allocation5 + $0x258] sm:$0xff]
    %v144 = vld [vmem:[#allocation5 + $0x260] sm:$0xff]
    %v145 = vld [vmem:[#allocation5 + $0x268] sm:$0xff]
    %v146 = vld [vmem:[#allocation5 + $0x270] sm:$0xff]
    %v147 = vld [vmem:[#allocation5 + $0x278] sm:$0xff]
    %v148 = vld [vmem:[#allocation5 + $0x280] sm:$0xff]
    %v149 = vld [vmem:[#allocation5 + $0x288] sm:$0xff]
    %v150 = vld [vmem:[#allocation5 + $0x290] sm:$0xff]
    %v151 = vld [vmem:[#allocation5 + $0x298] sm:$0xff]
    %v152 = vld [vmem:[#allocation5 + $0x2a0] sm:$0xff]
    %v153 = vld [vmem:[#allocation5 + $0x2a8] sm:$0xff]
    %v154 = vld [vmem:[#allocation5 + $0x2b0] sm:$0xff]
    %v155 = vld [vmem:[#allocation5 + $0x2b8] sm:$0xff]
    %v156 = vld [vmem:[#allocation5 + $0x2c0] sm:$0xff]
    %v157 = vld [vmem:[#allocation5 + $0x2c8] sm:$0xff]
    %v158 = vld [vmem:[#allocation5 + $0x2d0] sm:$0xff]
    %v159 = vld [vmem:[#allocation5 + $0x2d8] sm:$0xff]
    %v160 = vld [vmem:[#allocation5 + $0x2e0] sm:$0xff]
    %v161 = vld [vmem:[#allocation5 + $0x2e8] sm:$0xff]
    %v162 = vld [vmem:[#allocation5 + $0x2f0] sm:$0xff]
    %v163 = vld [vmem:[#allocation5 + $0x2f8] sm:$0xff]
    %v164 = vld [vmem:[#allocation5 + $0x300] sm:$0xff]
    %v165 = vld [vmem:[#allocation5 + $0x308] sm:$0xff]
    %v166 = vld [vmem:[#allocation5 + $0x310] sm:$0xff]
    %v167 = vld [vmem:[#allocation5 + $0x318] sm:$0xff]
    %v168 = vld [vmem:[#allocation5 + $0x320] sm:$0xff]
    %v169 = vld [vmem:[#allocation5 + $0x328] sm:$0xff]
    %v170 = vld [vmem:[#allocation5 + $0x330] sm:$0xff]
    %v171 = vld [vmem:[#allocation5 + $0x338] sm:$0xff]
    %v172 = vld [vmem:[#allocation5 + $0x340] sm:$0xff]
    %v173 = vld [vmem:[#allocation5 + $0x348] sm:$0xff]
    %v174 = vld [vmem:[#allocation5 + $0x350] sm:$0xff]
    %v175 = vld [vmem:[#allocation5 + $0x358] sm:$0xff]
    %v176 = vld [vmem:[#allocation5 + $0x360] sm:$0xff]
    %v177 = vld [vmem:[#allocation5 + $0x368] sm:$0xff]
    %v178 = vld [vmem:[#allocation5 + $0x370] sm:$0xff]
    %v179 = vld [vmem:[#allocation5 + $0x378] sm:$0xff]
    %v180 = vld [vmem:[#allocation5 + $0x380] sm:$0xff]
    %v181 = vld [vmem:[#allocation5 + $0x388] sm:$0xff]
    %v182 = vld [vmem:[#allocation5 + $0x390] sm:$0xff]
    %v183 = vld [vmem:[#allocation5 + $0x398] sm:$0xff]
    %v184 = vld [vmem:[#allocation5 + $0x3a0] sm:$0xff]
    %v185 = vld [vmem:[#allocation5 + $0x3a8] sm:$0xff]
    %v186 = vld [vmem:[#allocation5 + $0x3b0] sm:$0xff]
    %v187 = vld [vmem:[#allocation5 + $0x3b8] sm:$0xff]
    %v188 = vld [vmem:[#allocation5 + $0x3c0] sm:$0xff]
    %v189 = vld [vmem:[#allocation5 + $0x3c8] sm:$0xff]
    %v190 = vld [vmem:[#allocation5 + $0x3d0] sm:$0xff]
    %v191 = vld [vmem:[#allocation5 + $0x3d8] sm:$0xff]
    %v192 = vld [vmem:[#allocation5 + $0x3e0] sm:$0xff]
    %v193 = vld [vmem:[#allocation5 + $0x3e8] sm:$0xff]
    %v194 = vld [vmem:[#allocation5 + $0x3f0] sm:$0xff]
    %v195 = vld [vmem:[#allocation5 + $0x3f8] sm:$0xff]
    %v196 = vld [vmem:[#allocation5 + $0x400] sm:$0xff]
    %v197 = vld [vmem:[#allocation5 + $0x408] sm:$0xff]
    %v198 = vld [vmem:[#allocation5 + $0x410] sm:$0xff]
    %v199 = vld [vmem:[#allocation5 + $0x418] sm:$0xff]
    %v200 = vld [vmem:[#allocation5 + $0x420] sm:$0xff]
    %v201 = vld [vmem:[#allocation5 + $0x428] sm:$0xff]
    %v202 = vld [vmem:[#allocation5 + $0x430] sm:$0xff]
    %v203 = vld [vmem:[#allocation5 + $0x438] sm:$0xff]
    %v204 = vld [vmem:[#allocation5 + $0x440] sm:$0xff]
    %v205 = vld [vmem:[#allocation5 + $0x448] sm:$0xff]
    %v206 = vld [vmem:[#allocation5 + $0x450] sm:$0xff]
    %v207 = vld [vmem:[#allocation5 + $0x458] sm:$0xff]
    %v208 = vld [vmem:[#allocation5 + $0x460] sm:$0xff]
    %v209 = vld [vmem:[#allocation5 + $0x468] sm:$0xff]
    %v210 = vld [vmem:[#allocation5 + $0x470] sm:$0xff]
    %v211 = vld [vmem:[#allocation5 + $0x478] sm:$0xff]
    %v212 = vld [vmem:[#allocation5 + $0x480] sm:$0xff]
    %v213 = vld [vmem:[#allocation5 + $0x488] sm:$0xff]
    %v214 = vld [vmem:[#allocation5 + $0x490] sm:$0xff]
    %v215 = vld [vmem:[#allocation5 + $0x498] sm:$0xff]
    %v216 = vld [vmem:[#allocation5 + $0x4a0] sm:$0xff]
    %v217 = vld [vmem:[#allocation5 + $0x4a8] sm:$0xff]
    %v218 = vld [vmem:[#allocation5 + $0x4b0] sm:$0xff]
    %v219 = vld [vmem:[#allocation5 + $0x4b8] sm:$0xff]
    %v220 = vld [vmem:[#allocation5 + $0x4c0] sm:$0xff]
    %v221 = vld [vmem:[#allocation5 + $0x4c8] sm:$0xff]
    %v222 = vld [vmem:[#allocation5 + $0x4d0] sm:$0xff]
    %v223 = vld [vmem:[#allocation5 + $0x4d8] sm:$0xff]
    %v224 = vld [vmem:[#allocation5 + $0x4e0] sm:$0xff]
    %v225 = vld [vmem:[#allocation5 + $0x4e8] sm:$0xff]
    %v226 = vld [vmem:[#allocation5 + $0x4f0] sm:$0xff]
    %v227 = vld [vmem:[#allocation5 + $0x4f8] sm:$0xff]
    %v228 = vld [vmem:[#allocation5 + $0x500] sm:$0xff]
    %v229 = vld [vmem:[#allocation5 + $0x508] sm:$0xff]
    %v230 = vld [vmem:[#allocation5 + $0x510] sm:$0xff]
    %v231 = vld [vmem:[#allocation5 + $0x518] sm:$0xff]
    %v232 = vld [vmem:[#allocation5 + $0x520] sm:$0xff]
    %v233 = vld [vmem:[#allocation5 + $0x528] sm:$0xff]
    %v234 = vld [vmem:[#allocation5 + $0x530] sm:$0xff]
    %v235 = vld [vmem:[#allocation5 + $0x538] sm:$0xff]
    %v236 = vld [vmem:[#allocation5 + $0x540] sm:$0xff]
    %v237 = vld [vmem:[#allocation5 + $0x548] sm:$0xff]
    %v238 = vld [vmem:[#allocation5 + $0x550] sm:$0xff]
    %v239 = vld [vmem:[#allocation5 + $0x558] sm:$0xff]
    %v240 = vld [vmem:[#allocation5 + $0x560] sm:$0xff]
    %v241 = vld [vmem:[#allocation5 + $0x568] sm:$0xff]
    %v242 = vld [vmem:[#allocation5 + $0x570] sm:$0xff]
    %v243 = vld [vmem:[#allocation5 + $0x578] sm:$0xff]
    %v244 = vld [vmem:[#allocation5 + $0x580] sm:$0xff]
    %v245 = vld [vmem:[#allocation5 + $0x588] sm:$0xff]
    %v246 = vld [vmem:[#allocation5 + $0x590] sm:$0xff]
    %v247 = vld [vmem:[#allocation5 + $0x598] sm:$0xff]
    %v248 = vld [vmem:[#allocation5 + $0x5a0] sm:$0xff]
    %v249 = vld [vmem:[#allocation5 + $0x5a8] sm:$0xff]
    %v250 = vld [vmem:[#allocation5 + $0x5b0] sm:$0xff]
    %v251 = vld [vmem:[#allocation5 + $0x5b8] sm:$0xff]
    %v252 = vld [vmem:[#allocation5 + $0x5c0] sm:$0xff]
    %v253 = vld [vmem:[#allocation5 + $0x5c8] sm:$0xff]
    %v254 = vld [vmem:[#allocation5 + $0x5d0] sm:$0xff]
    %v255 = vld [vmem:[#allocation5 + $0x5d8] sm:$0xff]
    %v256 = vld [vmem:[#allocation5 + $0x5e0] sm:$0xff]
    %v257 = vld [vmem:[#allocation5 + $0x5e8] sm:$0xff]
    %v258 = vld [vmem:[#allocation5 + $0x5f0] sm:$0xff]
    %v259 = vld [vmem:[#allocation5 + $0x5f8] sm:$0xff]
    %v260 = vld [vmem:[#allocation5 + $0x600] sm:$0xff]
    %v261 = vld [vmem:[#allocation5 + $0x608] sm:$0xff]
    %v262 = vld [vmem:[#allocation5 + $0x610] sm:$0xff]
    %v263 = vld [vmem:[#allocation5 + $0x618] sm:$0xff]
    %v264 = vld [vmem:[#allocation5 + $0x620] sm:$0xff]
    %v265 = vld [vmem:[#allocation5 + $0x628] sm:$0xff]
    %v266 = vld [vmem:[#allocation5 + $0x630] sm:$0xff]
    %v267 = vld [vmem:[#allocation5 + $0x638] sm:$0xff]
    %v268 = vld [vmem:[#allocation5 + $0x640] sm:$0xff]
    %v269 = vld [vmem:[#allocation5 + $0x648] sm:$0xff]
    %v270 = vld [vmem:[#allocation5 + $0x650] sm:$0xff]
    %v271 = vld [vmem:[#allocation5 + $0x658] sm:$0xff]
    %v272 = vld [vmem:[#allocation5 + $0x660] sm:$0xff]
    %v273 = vld [vmem:[#allocation5 + $0x668] sm:$0xff]
    %v274 = vld [vmem:[#allocation5 + $0x670] sm:$0xff]
    %v275 = vld [vmem:[#allocation5 + $0x678] sm:$0xff]
    %v276 = vld [vmem:[#allocation5 + $0x680] sm:$0xff]
    %v277 = vld [vmem:[#allocation5 + $0x688] sm:$0xff]
    %v278 = vld [vmem:[#allocation5 + $0x690] sm:$0xff]
    %v279 = vld [vmem:[#allocation5 + $0x698] sm:$0xff]
    %v280 = vld [vmem:[#allocation5 + $0x6a0] sm:$0xff]
    %v281 = vld [vmem:[#allocation5 + $0x6a8] sm:$0xff]
    %v282 = vld [vmem:[#allocation5 + $0x6b0] sm:$0xff]
    %v283 = vld [vmem:[#allocation5 + $0x6b8] sm:$0xff]
    %v284 = vld [vmem:[#allocation5 + $0x6c0] sm:$0xff]
    %v285 = vld [vmem:[#allocation5 + $0x6c8] sm:$0xff]
    %v286 = vld [vmem:[#allocation5 + $0x6d0] sm:$0xff]
    %v287 = vld [vmem:[#allocation5 + $0x6d8] sm:$0xff]
    %v288 = vld [vmem:[#allocation5 + $0x6e0] sm:$0xff]
    %v289 = vld [vmem:[#allocation5 + $0x6e8] sm:$0xff]
    %v290 = vld [vmem:[#allocation5 + $0x6f0] sm:$0xff]
    %v291 = vld [vmem:[#allocation5 + $0x6f8] sm:$0xff]
    %v292 = vld [vmem:[#allocation5 + $0x700] sm:$0xff]
    %v293 = vld [vmem:[#allocation5 + $0x708] sm:$0xff]
    %v294 = vld [vmem:[#allocation5 + $0x710] sm:$0xff]
    %v295 = vld [vmem:[#allocation5 + $0x718] sm:$0xff]
    %v296 = vld [vmem:[#allocation5 + $0x720] sm:$0xff]
    %v297 = vld [vmem:[#allocation5 + $0x728] sm:$0xff]
    %v298 = vld [vmem:[#allocation5 + $0x730] sm:$0xff]
    %v299 = vld [vmem:[#allocation5 + $0x738] sm:$0xff]
    %v300 = vld [vmem:[#allocation5 + $0x740] sm:$0xff]
    %v301 = vld [vmem:[#allocation5 + $0x748] sm:$0xff]
    %v302 = vld [vmem:[#allocation5 + $0x750] sm:$0xff]
    %v303 = vld [vmem:[#allocation5 + $0x758] sm:$0xff]
    %v304 = vld [vmem:[#allocation5 + $0x760] sm:$0xff]
    %v305 = vld [vmem:[#allocation5 + $0x768] sm:$0xff]
    %v306 = vld [vmem:[#allocation5 + $0x770] sm:$0xff]
    %v307 = vld [vmem:[#allocation5 + $0x778] sm:$0xff]
    %v308 = vld [vmem:[#allocation5 + $0x780] sm:$0xff]
    %v309 = vld [vmem:[#allocation5 + $0x788] sm:$0xff]
    %v310 = vld [vmem:[#allocation5 + $0x790] sm:$0xff]
    %v311 = vld [vmem:[#allocation5 + $0x798] sm:$0xff]
    %v312 = vld [vmem:[#allocation5 + $0x7a0] sm:$0xff]
    %v313 = vld [vmem:[#allocation5 + $0x7a8] sm:$0xff]
    %v314 = vld [vmem:[#allocation5 + $0x7b0] sm:$0xff]
    %v315 = vld [vmem:[#allocation5 + $0x7b8] sm:$0xff]
    %v316 = vld [vmem:[#allocation5 + $0x7c0] sm:$0xff]
    %v317 = vld [vmem:[#allocation5 + $0x7c8] sm:$0xff]
    %v318 = vld [vmem:[#allocation5 + $0x7d0] sm:$0xff]
    %v319 = vld [vmem:[#allocation5 + $0x7d8] sm:$0xff]
    %v320 = vld [vmem:[#allocation5 + $0x7e0] sm:$0xff]
    %v321 = vld [vmem:[#allocation5 + $0x7e8] sm:$0xff]
    %v322 = vld [vmem:[#allocation5 + $0x7f0] sm:$0xff]
    %v323 = vld [vmem:[#allocation5 + $0x7f8] sm:$0xff]
    %v324 = vld [vmem:[#allocation5 + $0x800] sm:$0xff]
    %v325 = vld [vmem:[#allocation5 + $0x808] sm:$0xff]
    %v326 = vld [vmem:[#allocation5 + $0x810] sm:$0xff]
    %v327 = vld [vmem:[#allocation5 + $0x818] sm:$0xff]
    %v328 = vld [vmem:[#allocation5 + $0x820] sm:$0xff]
    %v329 = vld [vmem:[#allocation5 + $0x828] sm:$0xff]
    %v330 = vld [vmem:[#allocation5 + $0x830] sm:$0xff]
    %v331 = vld [vmem:[#allocation5 + $0x838] sm:$0xff]
    %v332 = vld [vmem:[#allocation5 + $0x840] sm:$0xff]
    %v333 = vld [vmem:[#allocation5 + $0x848] sm:$0xff]
    %v334 = vld [vmem:[#allocation5 + $0x850] sm:$0xff]
    %v335 = vld [vmem:[#allocation5 + $0x858] sm:$0xff]
    %v336 = vld [vmem:[#allocation5 + $0x860] sm:$0xff]
    %v337 = vld [vmem:[#allocation5 + $0x868] sm:$0xff]
    %v338 = vld [vmem:[#allocation5 + $0x870] sm:$0xff]
    %v339 = vld [vmem:[#allocation5 + $0x878] sm:$0xff]
    %v340 = vld [vmem:[#allocation5 + $0x880] sm:$0xff]
    %v341 = vld [vmem:[#allocation5 + $0x888] sm:$0xff]
    %v342 = vld [vmem:[#allocation5 + $0x890] sm:$0xff]
    %v343 = vld [vmem:[#allocation5 + $0x898] sm:$0xff]
    %v344 = vld [vmem:[#allocation5 + $0x8a0] sm:$0xff]
    %v345 = vld [vmem:[#allocation5 + $0x8a8] sm:$0xff]
    %v346 = vld [vmem:[#allocation5 + $0x8b0] sm:$0xff]
    %v347 = vld [vmem:[#allocation5 + $0x8b8] sm:$0xff]
    %v348 = vld [vmem:[#allocation5 + $0x8c0] sm:$0xff]
    %v349 = vld [vmem:[#allocation5 + $0x8c8] sm:$0xff]
    %v350 = vld [vmem:[#allocation5 + $0x8d0] sm:$0xff]
    %v351 = vld [vmem:[#allocation5 + $0x8d8] sm:$0xff]
    %v352 = vld [vmem:[#allocation5 + $0x8e0] sm:$0xff]
    %v353 = vld [vmem:[#allocation5 + $0x8e8] sm:$0xff]
    %v354 = vld [vmem:[#allocation5 + $0x8f0] sm:$0xff]
    %v355 = vld [vmem:[#allocation5 + $0x8f8] sm:$0xff]
    %v356 = vld [vmem:[#allocation5 + $0x900] sm:$0xff]
    %v357 = vld [vmem:[#allocation5 + $0x908] sm:$0xff]
    %v358 = vld [vmem:[#allocation5 + $0x910] sm:$0xff]
    %v359 = vld [vmem:[#allocation5 + $0x918] sm:$0xff]
    %v360 = vld [vmem:[#allocation5 + $0x920] sm:$0xff]
    %v361 = vld [vmem:[#allocation5 + $0x928] sm:$0xff]
    %v362 = vld [vmem:[#allocation5 + $0x930] sm:$0xff]
    %v363 = vld [vmem:[#allocation5 + $0x938] sm:$0xff]
    %v364 = vld [vmem:[#allocation5 + $0x940] sm:$0xff]
    %v365 = vld [vmem:[#allocation5 + $0x948] sm:$0xff]
    %v366 = vld [vmem:[#allocation5 + $0x950] sm:$0xff]
    %v367 = vld [vmem:[#allocation5 + $0x958] sm:$0xff]
    %v368 = vld [vmem:[#allocation5 + $0x960] sm:$0xff]
    %v369 = vld [vmem:[#allocation5 + $0x968] sm:$0xff]
    %v370 = vld [vmem:[#allocation5 + $0x970] sm:$0xff]
    %v371 = vld [vmem:[#allocation5 + $0x978] sm:$0xff]
    %v372 = vld [vmem:[#allocation5 + $0x980] sm:$0xff]
    %v373 = vld [vmem:[#allocation5 + $0x988] sm:$0xff]
    %v374 = vld [vmem:[#allocation5 + $0x990] sm:$0xff]
    %v375 = vld [vmem:[#allocation5 + $0x998] sm:$0xff]
    %v376 = vld [vmem:[#allocation5 + $0x9a0] sm:$0xff]
    %v377 = vld [vmem:[#allocation5 + $0x9a8] sm:$0xff]
    %v378 = vld [vmem:[#allocation5 + $0x9b0] sm:$0xff]
    %v379 = vld [vmem:[#allocation5 + $0x9b8] sm:$0xff]
    %v380 = vld [vmem:[#allocation5 + $0x9c0] sm:$0xff]
    %v381 = vld [vmem:[#allocation5 + $0x9c8] sm:$0xff]
    %v382 = vld [vmem:[#allocation5 + $0x9d0] sm:$0xff]
    %v383 = vld [vmem:[#allocation5 + $0x9d8] sm:$0xff]
    %v384 = vld [vmem:[#allocation5 + $0x9e0] sm:$0xff]
    %v385 = vld [vmem:[#allocation5 + $0x9e8] sm:$0xff]
    %v386 = vld [vmem:[#allocation5 + $0x9f0] sm:$0xff]
    %v387 = vld [vmem:[#allocation5 + $0x9f8] sm:$0xff]
    %v388 = vld [vmem:[#allocation5 + $0xa00] sm:$0xff]
    %v389 = vld [vmem:[#allocation5 + $0xa08] sm:$0xff]
    %v390 = vld [vmem:[#allocation5 + $0xa10] sm:$0xff]
    %v391 = vld [vmem:[#allocation5 + $0xa18] sm:$0xff]
    %v392 = vld [vmem:[#allocation5 + $0xa20] sm:$0xff]
    %v393 = vld [vmem:[#allocation5 + $0xa28] sm:$0xff]
    %v394 = vld [vmem:[#allocation5 + $0xa30] sm:$0xff]
    %v395 = vld [vmem:[#allocation5 + $0xa38] sm:$0xff]
    %v396 = vld [vmem:[#allocation5 + $0xa40] sm:$0xff]
    %v397 = vld [vmem:[#allocation5 + $0xa48] sm:$0xff]
    %v398 = vld [vmem:[#allocation5 + $0xa50] sm:$0xff]
    %v399 = vld [vmem:[#allocation5 + $0xa58] sm:$0xff]
    %v400 = vld [vmem:[#allocation5 + $0xa60] sm:$0xff]
    %v401 = vld [vmem:[#allocation5 + $0xa68] sm:$0xff]
    %v402 = vld [vmem:[#allocation5 + $0xa70] sm:$0xff]
    %v403 = vld [vmem:[#allocation5 + $0xa78] sm:$0xff]
    %v404 = vld [vmem:[#allocation5 + $0xa80] sm:$0xff]
    %v405 = vld [vmem:[#allocation5 + $0xa88] sm:$0xff]
    %v406 = vld [vmem:[#allocation5 + $0xa90] sm:$0xff]
    %v407 = vld [vmem:[#allocation5 + $0xa98] sm:$0xff]
    %v408 = vld [vmem:[#allocation5 + $0xaa0] sm:$0xff]
    %v409 = vld [vmem:[#allocation5 + $0xaa8] sm:$0xff]
    %v410 = vld [vmem:[#allocation5 + $0xab0] sm:$0xff]
    %v411 = vld [vmem:[#allocation5 + $0xab8] sm:$0xff]
    %v412 = vld [vmem:[#allocation5 + $0xac0] sm:$0xff]
    %v413 = vld [vmem:[#allocation5 + $0xac8] sm:$0xff]
    %v414 = vld [vmem:[#allocation5 + $0xad0] sm:$0xff]
    %v415 = vld [vmem:[#allocation5 + $0xad8] sm:$0xff]
    %v416 = vld [vmem:[#allocation5 + $0xae0] sm:$0xff]
    %v417 = vld [vmem:[#allocation5 + $0xae8] sm:$0xff]
    %v418 = vld [vmem:[#allocation5 + $0xaf0] sm:$0xff]
    %v419 = vld [vmem:[#allocation5 + $0xaf8] sm:$0xff]
    %v420 = vld [vmem:[#allocation5 + $0xb00] sm:$0xff]
    %v421 = vld [vmem:[#allocation5 + $0xb08] sm:$0xff]
    %v422 = vld [vmem:[#allocation5 + $0xb10] sm:$0xff]
    %v423 = vld [vmem:[#allocation5 + $0xb18] sm:$0xff]
    %v424 = vld [vmem:[#allocation5 + $0xb20] sm:$0xff]
    %v425 = vld [vmem:[#allocation5 + $0xb28] sm:$0xff]
    %v426 = vld [vmem:[#allocation5 + $0xb30] sm:$0xff]
    %v427 = vld [vmem:[#allocation5 + $0xb38] sm:$0xff]
    %v428 = vld [vmem:[#allocation5 + $0xb40] sm:$0xff]
    %v429 = vld [vmem:[#allocation5 + $0xb48] sm:$0xff]
    %v430 = vld [vmem:[#allocation5 + $0xb50] sm:$0xff]
    %v431 = vld [vmem:[#allocation5 + $0xb58] sm:$0xff]
    %v432 = vld [vmem:[#allocation5 + $0xb60] sm:$0xff]
    %v433 = vld [vmem:[#allocation5 + $0xb68] sm:$0xff]
    %v434 = vld [vmem:[#allocation5 + $0xb70] sm:$0xff]
    %v435 = vld [vmem:[#allocation5 + $0xb78] sm:$0xff]
    %v436 = vld [vmem:[#allocation5 + $0xb80] sm:$0xff]
    %v437 = vld [vmem:[#allocation5 + $0xb88] sm:$0xff]
    %v438 = vld [vmem:[#allocation5 + $0xb90] sm:$0xff]
    %v439 = vld [vmem:[#allocation5 + $0xb98] sm:$0xff]
    %v440 = vld [vmem:[#allocation5 + $0xba0] sm:$0xff]
    %v441 = vld [vmem:[#allocation5 + $0xba8] sm:$0xff]
    %v442 = vld [vmem:[#allocation5 + $0xbb0] sm:$0xff]
    %v443 = vld [vmem:[#allocation5 + $0xbb8] sm:$0xff]
    %v444 = vld [vmem:[#allocation5 + $0xbc0] sm:$0xff]
    %v445 = vld [vmem:[#allocation5 + $0xbc8] sm:$0xff]
    %v446 = vld [vmem:[#allocation5 + $0xbd0] sm:$0xff]
    %v447 = vld [vmem:[#allocation5 + $0xbd8] sm:$0xff]
    %v448 = vld [vmem:[#allocation5 + $0xbe0] sm:$0xff]
    %v449 = vld [vmem:[#allocation5 + $0xbe8] sm:$0xff]
    %v450 = vld [vmem:[#allocation5 + $0xbf0] sm:$0xff]
    %v451 = vld [vmem:[#allocation5 + $0xbf8] sm:$0xff]
    %v452 = vld [vmem:[#allocation5 + $0xc00] sm:$0xff]
    %v453 = vld [vmem:[#allocation5 + $0xc08] sm:$0xff]
    %v454 = vld [vmem:[#allocation5 + $0xc10] sm:$0xff]
    %v455 = vld [vmem:[#allocation5 + $0xc18] sm:$0xff]
    %v456 = vld [vmem:[#allocation5 + $0xc20] sm:$0xff]
    %v457 = vld [vmem:[#allocation5 + $0xc28] sm:$0xff]
    %v458 = vld [vmem:[#allocation5 + $0xc30] sm:$0xff]
    %v459 = vld [vmem:[#allocation5 + $0xc38] sm:$0xff]
    %v460 = vld [vmem:[#allocation5 + $0xc40] sm:$0xff]
    %v461 = vld [vmem:[#allocation5 + $0xc48] sm:$0xff]
    %v462 = vld [vmem:[#allocation5 + $0xc50] sm:$0xff]
    %v463 = vld [vmem:[#allocation5 + $0xc58] sm:$0xff]
    %v464 = vld [vmem:[#allocation5 + $0xc60] sm:$0xff]
    %v465 = vld [vmem:[#allocation5 + $0xc68] sm:$0xff]
    %v466 = vld [vmem:[#allocation5 + $0xc70] sm:$0xff]
    %v467 = vld [vmem:[#allocation5 + $0xc78] sm:$0xff]
    %v468 = vld [vmem:[#allocation5 + $0xc80] sm:$0xff]
    %v469 = vld [vmem:[#allocation5 + $0xc88] sm:$0xff]
    %v470 = vld [vmem:[#allocation5 + $0xc90] sm:$0xff]
    %v471 = vld [vmem:[#allocation5 + $0xc98] sm:$0xff]
    %v472 = vld [vmem:[#allocation5 + $0xca0] sm:$0xff]
    %v473 = vld [vmem:[#allocation5 + $0xca8] sm:$0xff]
    %v474 = vld [vmem:[#allocation5 + $0xcb0] sm:$0xff]
    %v475 = vld [vmem:[#allocation5 + $0xcb8] sm:$0xff]
    %v476 = vld [vmem:[#allocation5 + $0xcc0] sm:$0xff]
    %v477 = vld [vmem:[#allocation5 + $0xcc8] sm:$0xff]
    %v478 = vld [vmem:[#allocation5 + $0xcd0] sm:$0xff]
    %v479 = vld [vmem:[#allocation5 + $0xcd8] sm:$0xff]
    %v480 = vld [vmem:[#allocation5 + $0xce0] sm:$0xff]
    %v481 = vld [vmem:[#allocation5 + $0xce8] sm:$0xff]
    %v482 = vld [vmem:[#allocation5 + $0xcf0] sm:$0xff]
    %v483 = vld [vmem:[#allocation5 + $0xcf8] sm:$0xff]
    %v484 = vld [vmem:[#allocation5 + $0xd00] sm:$0xff]
    %v485 = vld [vmem:[#allocation5 + $0xd08] sm:$0xff]
    %v486 = vld [vmem:[#allocation5 + $0xd10] sm:$0xff]
    %v487 = vld [vmem:[#allocation5 + $0xd18] sm:$0xff]
    %v488 = vld [vmem:[#allocation5 + $0xd20] sm:$0xff]
    %v489 = vld [vmem:[#allocation5 + $0xd28] sm:$0xff]
    %v490 = vld [vmem:[#allocation5 + $0xd30] sm:$0xff]
    %v491 = vld [vmem:[#allocation5 + $0xd38] sm:$0xff]
    %v492 = vld [vmem:[#allocation5 + $0xd40] sm:$0xff]
    %v493 = vld [vmem:[#allocation5 + $0xd48] sm:$0xff]
    %v494 = vld [vmem:[#allocation5 + $0xd50] sm:$0xff]
    %v495 = vld [vmem:[#allocation5 + $0xd58] sm:$0xff]
    %v496 = vld [vmem:[#allocation5 + $0xd60] sm:$0xff]
    %v497 = vld [vmem:[#allocation5 + $0xd68] sm:$0xff]
    %v498 = vld [vmem:[#allocation5 + $0xd70] sm:$0xff]
    %v499 = vld [vmem:[#allocation5 + $0xd78] sm:$0xff]
    %v500 = vld [vmem:[#allocation5 + $0xd80] sm:$0xff]
    %v501 = vld [vmem:[#allocation5 + $0xd88] sm:$0xff]
    %v502 = vld [vmem:[#allocation5 + $0xd90] sm:$0xff]
    %v503 = vld [vmem:[#allocation5 + $0xd98] sm:$0xff]
    %v504 = vld [vmem:[#allocation5 + $0xda0] sm:$0xff]
    %v505 = vld [vmem:[#allocation5 + $0xda8] sm:$0xff]
    %v506 = vld [vmem:[#allocation5 + $0xdb0] sm:$0xff]
    %v507 = vld [vmem:[#allocation5 + $0xdb8] sm:$0xff]
    %v508 = vld [vmem:[#allocation5 + $0xdc0] sm:$0xff]
    %v509 = vld [vmem:[#allocation5 + $0xdc8] sm:$0xff]
    %v510 = vld [vmem:[#allocation5 + $0xdd0] sm:$0xff]
    %v511 = vld [vmem:[#allocation5 + $0xdd8] sm:$0xff]
    %v512 = vld [vmem:[#allocation5 + $0xde0] sm:$0xff]
    %v513 = vld [vmem:[#allocation5 + $0xde8] sm:$0xff]
    %v514 = vld [vmem:[#allocation5 + $0xdf0] sm:$0xff]
    %v515 = vld [vmem:[#allocation5 + $0xdf8] sm:$0xff]
    %v516 = vld [vmem:[#allocation5 + $0xe00] sm:$0xff]
    %v517 = vld [vmem:[#allocation5 + $0xe08] sm:$0xff]
    %v518 = vld [vmem:[#allocation5 + $0xe10] sm:$0xff]
    %v519 = vld [vmem:[#allocation5 + $0xe18] sm:$0xff]
    %v520 = vld [vmem:[#allocation5 + $0xe20] sm:$0xff]
    %v521 = vld [vmem:[#allocation5 + $0xe28] sm:$0xff]
    %v522 = vld [vmem:[#allocation5 + $0xe30] sm:$0xff]
    %v523 = vld [vmem:[#allocation5 + $0xe38] sm:$0xff]
    %v524 = vld [vmem:[#allocation5 + $0xe40] sm:$0xff]
    %v525 = vld [vmem:[#allocation5 + $0xe48] sm:$0xff]
    %v526 = vld [vmem:[#allocation5 + $0xe50] sm:$0xff]
    %v527 = vld [vmem:[#allocation5 + $0xe58] sm:$0xff]
    %v528 = vld [vmem:[#allocation5 + $0xe60] sm:$0xff]
    %v529 = vld [vmem:[#allocation5 + $0xe68] sm:$0xff]
    %v530 = vld [vmem:[#allocation5 + $0xe70] sm:$0xff]
    %v531 = vld [vmem:[#allocation5 + $0xe78] sm:$0xff]
    %v532 = vld [vmem:[#allocation5 + $0xe80] sm:$0xff]
    %v533 = vld [vmem:[#allocation5 + $0xe88] sm:$0xff]
    %v534 = vld [vmem:[#allocation5 + $0xe90] sm:$0xff]
    %v535 = vld [vmem:[#allocation5 + $0xe98] sm:$0xff]
    %v536 = vld [vmem:[#allocation5 + $0xea0] sm:$0xff]
    %v537 = vld [vmem:[#allocation5 + $0xea8] sm:$0xff]
    %v538 = vld [vmem:[#allocation5 + $0xeb0] sm:$0xff]
    %v539 = vld [vmem:[#allocation5 + $0xeb8] sm:$0xff]
    %v540 = vld [vmem:[#allocation5 + $0xec0] sm:$0xff]
    %v541 = vld [vmem:[#allocation5 + $0xec8] sm:$0xff]
    %v542 = vld [vmem:[#allocation5 + $0xed0] sm:$0xff]
    %v543 = vld [vmem:[#allocation5 + $0xed8] sm:$0xff]
    %v544 = vld [vmem:[#allocation5 + $0xee0] sm:$0xff]
    %v545 = vld [vmem:[#allocation5 + $0xee8] sm:$0xff]
    %v546 = vld [vmem:[#allocation5 + $0xef0] sm:$0xff]
    %v547 = vld [vmem:[#allocation5 + $0xef8] sm:$0xff]
    %v548 = vld [vmem:[#allocation5 + $0xf00] sm:$0xff]
    %v549 = vld [vmem:[#allocation5 + $0xf08] sm:$0xff]
    %v550 = vld [vmem:[#allocation5 + $0xf10] sm:$0xff]
    %v551 = vld [vmem:[#allocation5 + $0xf18] sm:$0xff]
    %v552 = vld [vmem:[#allocation5 + $0xf20] sm:$0xff]
    %v553 = vld [vmem:[#allocation5 + $0xf28] sm:$0xff]
    %v554 = vld [vmem:[#allocation5 + $0xf30] sm:$0xff]
    %v555 = vld [vmem:[#allocation5 + $0xf38] sm:$0xff]
    %v556 = vld [vmem:[#allocation5 + $0xf40] sm:$0xff]
    %v557 = vld [vmem:[#allocation5 + $0xf48] sm:$0xff]
    %v558 = vld [vmem:[#allocation5 + $0xf50] sm:$0xff]
    %v559 = vld [vmem:[#allocation5 + $0xf58] sm:$0xff]
    %v560 = vld [vmem:[#allocation5 + $0xf60] sm:$0xff]
    %v561 = vld [vmem:[#allocation5 + $0xf68] sm:$0xff]
    %v562 = vld [vmem:[#allocation5 + $0xf70] sm:$0xff]
    %v563 = vld [vmem:[#allocation5 + $0xf78] sm:$0xff]
    %v564 = vld [vmem:[#allocation5 + $0xf80] sm:$0xff]
    %v565 = vld [vmem:[#allocation5 + $0xf88] sm:$0xff]
    %v566 = vld [vmem:[#allocation5 + $0xf90] sm:$0xff]
    %v567 = vld [vmem:[#allocation5 + $0xf98] sm:$0xff]
    %v568 = vld [vmem:[#allocation5 + $0xfa0] sm:$0xff]
    %v569 = vld [vmem:[#allocation5 + $0xfa8] sm:$0xff]
    %v570 = vld [vmem:[#allocation5 + $0xfb0] sm:$0xff]
    %v571 = vld [vmem:[#allocation5 + $0xfb8] sm:$0xff]
    %v572 = vld [vmem:[#allocation5 + $0xfc0] sm:$0xff]
    %v573 = vld [vmem:[#allocation5 + $0xfc8] sm:$0xff]
    %v574 = vld [vmem:[#allocation5 + $0xfd0] sm:$0xff]
    %v575 = vld [vmem:[#allocation5 + $0xfd8] sm:$0xff]
    %v576 = vld [vmem:[#allocation5 + $0xfe0] sm:$0xff]
    %v577 = vld [vmem:[#allocation5 + $0xfe8] sm:$0xff]
    %v578 = vld [vmem:[#allocation5 + $0xff0] sm:$0xff]
    %v579 = vld [vmem:[#allocation5 + $0xff8] sm:$0xff]
    %v581 = vcombine.high %v67, %v67
    %v583 = vunpack.c.l.s4 1966171168
    %v584 = vunpack.c.0.s8 %v583
    %v585 = vlaneseq
    %v586 = vshrl.u32 %v585, 7
    %v587 = vsub.s32 %v584, %v586
    %v588 = vrot.slane %v67, %v587
    %v590 = vunpack.c.l.s4 1966171168
    %v591 = vunpack.c.0.s8 %v590
    %v592 = vlaneseq
    %v593 = vshrl.u32 %v592, 7
    %v594 = vsub.s32 %v591, %v593
    %v595 = vrot.slane %v581, %v594
    %v596 = vcombine.high %v588, %v588
    %v597 = vcombine.high %v595, %v595
    %v599 = vunpack.c.l.s4 1966171168
    %v600 = vunpack.c.0.s8 %v599
    %v601 = vlaneseq
    %v602 = vshrl.u32 %v601, 7
    %v603 = vsub.s32 %v600, %v602
    %v604 = vrot.slane %v588, %v603
    %v606 = vunpack.c.l.s4 1966171168
    %v607 = vunpack.c.0.s8 %v606
    %v608 = vlaneseq
    %v609 = vshrl.u32 %v608, 7
    %v610 = vsub.s32 %v607, %v609
    %v611 = vrot.slane %v595, %v610
    %v613 = vunpack.c.l.s4 1966171168
    %v614 = vunpack.c.0.s8 %v613
    %v615 = vlaneseq
    %v616 = vshrl.u32 %v615, 7
    %v617 = vsub.s32 %v614, %v616
    %v618 = vrot.slane %v596, %v617
    %v620 = vunpack.c.l.s4 1966171168
    %v621 = vunpack.c.0.s8 %v620
    %v622 = vlaneseq
    %v623 = vshrl.u32 %v622, 7
    %v624 = vsub.s32 %v621, %v623
    %v625 = vrot.slane %v597, %v624
    %v626 = vcombine.high %v604, %v604
    %v627 = vcombine.high %v611, %v611
    %v628 = vcombine.high %v618, %v618
    %v629 = vcombine.high %v625, %v625
    %v1150 = vunpack.c.l.b16 %v68
    %v1151 = vunpack.c.h.b16 %v68
    %v1152 = vunpack.c.l.b16 %v69
    %v1153 = vunpack.c.h.b16 %v69
    %v1154 = vunpack.c.l.b16 %v70
    %v1155 = vunpack.c.h.b16 %v70
    %v1156 = vunpack.c.l.b16 %v71
    %v1157 = vunpack.c.h.b16 %v71
    %v1158 = vunpack.c.l.b16 %v72
    %v1159 = vunpack.c.h.b16 %v72
    %v1160 = vunpack.c.l.b16 %v73
    %v1161 = vunpack.c.h.b16 %v73
    %v1162 = vunpack.c.l.b16 %v74
    %v1163 = vunpack.c.h.b16 %v74
    %v1164 = vunpack.c.l.b16 %v75
    %v1165 = vunpack.c.h.b16 %v75
    %v1166 = vunpack.c.l.b16 %v76
    %v1167 = vunpack.c.h.b16 %v76
    %v1168 = vunpack.c.l.b16 %v77
    %v1169 = vunpack.c.h.b16 %v77
    %v1170 = vunpack.c.l.b16 %v78
    %v1171 = vunpack.c.h.b16 %v78
    %v1172 = vunpack.c.l.b16 %v79
    %v1173 = vunpack.c.h.b16 %v79
    %v1174 = vunpack.c.l.b16 %v80
    %v1175 = vunpack.c.h.b16 %v80
    %v1176 = vunpack.c.l.b16 %v81
    %v1177 = vunpack.c.h.b16 %v81
    %v1178 = vunpack.c.l.b16 %v82
    %v1179 = vunpack.c.h.b16 %v82
    %v1180 = vunpack.c.l.b16 %v83
    %v1181 = vunpack.c.h.b16 %v83
    %v1182 = vunpack.c.l.b16 %v84
    %v1183 = vunpack.c.h.b16 %v84
    %v1184 = vunpack.c.l.b16 %v85
    %v1185 = vunpack.c.h.b16 %v85
    %v1186 = vunpack.c.l.b16 %v86
    %v1187 = vunpack.c.h.b16 %v86
    %v1188 = vunpack.c.l.b16 %v87
    %v1189 = vunpack.c.h.b16 %v87
    %v1190 = vunpack.c.l.b16 %v88
    %v1191 = vunpack.c.h.b16 %v88
    %v1192 = vunpack.c.l.b16 %v89
    %v1193 = vunpack.c.h.b16 %v89
    %v1194 = vunpack.c.l.b16 %v90
    %v1195 = vunpack.c.h.b16 %v90
    %v1196 = vunpack.c.l.b16 %v91
    %v1197 = vunpack.c.h.b16 %v91
    %v1198 = vunpack.c.l.b16 %v92
    %v1199 = vunpack.c.h.b16 %v92
    %v1200 = vunpack.c.l.b16 %v93
    %v1201 = vunpack.c.h.b16 %v93
    %v1202 = vunpack.c.l.b16 %v94
    %v1203 = vunpack.c.h.b16 %v94
    %v1204 = vunpack.c.l.b16 %v95
    %v1205 = vunpack.c.h.b16 %v95
    %v1206 = vunpack.c.l.b16 %v96
    %v1207 = vunpack.c.h.b16 %v96
    %v1208 = vunpack.c.l.b16 %v97
    %v1209 = vunpack.c.h.b16 %v97
    %v1210 = vunpack.c.l.b16 %v98
    %v1211 = vunpack.c.h.b16 %v98
    %v1212 = vunpack.c.l.b16 %v99
    %v1213 = vunpack.c.h.b16 %v99
    %v1214 = vunpack.c.l.b16 %v100
    %v1215 = vunpack.c.h.b16 %v100
    %v1216 = vunpack.c.l.b16 %v101
    %v1217 = vunpack.c.h.b16 %v101
    %v1218 = vunpack.c.l.b16 %v102
    %v1219 = vunpack.c.h.b16 %v102
    %v1220 = vunpack.c.l.b16 %v103
    %v1221 = vunpack.c.h.b16 %v103
    %v1222 = vunpack.c.l.b16 %v104
    %v1223 = vunpack.c.h.b16 %v104
    %v1224 = vunpack.c.l.b16 %v105
    %v1225 = vunpack.c.h.b16 %v105
    %v1226 = vunpack.c.l.b16 %v106
    %v1227 = vunpack.c.h.b16 %v106
    %v1228 = vunpack.c.l.b16 %v107
    %v1229 = vunpack.c.h.b16 %v107
    %v1230 = vunpack.c.l.b16 %v108
    %v1231 = vunpack.c.h.b16 %v108
    %v1232 = vunpack.c.l.b16 %v109
    %v1233 = vunpack.c.h.b16 %v109
    %v1234 = vunpack.c.l.b16 %v110
    %v1235 = vunpack.c.h.b16 %v110
    %v1236 = vunpack.c.l.b16 %v111
    %v1237 = vunpack.c.h.b16 %v111
    %v1238 = vunpack.c.l.b16 %v112
    %v1239 = vunpack.c.h.b16 %v112
    %v1240 = vunpack.c.l.b16 %v113
    %v1241 = vunpack.c.h.b16 %v113
    %v1242 = vunpack.c.l.b16 %v114
    %v1243 = vunpack.c.h.b16 %v114
    %v1244 = vunpack.c.l.b16 %v115
    %v1245 = vunpack.c.h.b16 %v115
    %v1246 = vunpack.c.l.b16 %v116
    %v1247 = vunpack.c.h.b16 %v116
    %v1248 = vunpack.c.l.b16 %v117
    %v1249 = vunpack.c.h.b16 %v117
    %v1250 = vunpack.c.l.b16 %v118
    %v1251 = vunpack.c.h.b16 %v118
    %v1252 = vunpack.c.l.b16 %v119
    %v1253 = vunpack.c.h.b16 %v119
    %v1254 = vunpack.c.l.b16 %v120
    %v1255 = vunpack.c.h.b16 %v120
    %v1256 = vunpack.c.l.b16 %v121
    %v1257 = vunpack.c.h.b16 %v121
    %v1258 = vunpack.c.l.b16 %v122
    %v1259 = vunpack.c.h.b16 %v122
    %v1260 = vunpack.c.l.b16 %v123
    %v1261 = vunpack.c.h.b16 %v123
    %v1262 = vunpack.c.l.b16 %v124
    %v1263 = vunpack.c.h.b16 %v124
    %v1264 = vunpack.c.l.b16 %v125
    %v1265 = vunpack.c.h.b16 %v125
    %v1266 = vunpack.c.l.b16 %v126
    %v1267 = vunpack.c.h.b16 %v126
    %v1268 = vunpack.c.l.b16 %v127
    %v1269 = vunpack.c.h.b16 %v127
    %v1270 = vunpack.c.l.b16 %v128
    %v1271 = vunpack.c.h.b16 %v128
    %v1272 = vunpack.c.l.b16 %v129
    %v1273 = vunpack.c.h.b16 %v129
    %v1274 = vunpack.c.l.b16 %v130
    %v1275 = vunpack.c.h.b16 %v130
    %v1276 = vunpack.c.l.b16 %v131
    %v1277 = vunpack.c.h.b16 %v131
    %v1278 = vunpack.c.l.b16 %v132
    %v1279 = vunpack.c.h.b16 %v132
    %v1280 = vunpack.c.l.b16 %v133
    %v1281 = vunpack.c.h.b16 %v133
    %v1282 = vunpack.c.l.b16 %v134
    %v1283 = vunpack.c.h.b16 %v134
    %v1284 = vunpack.c.l.b16 %v135
    %v1285 = vunpack.c.h.b16 %v135
    %v1286 = vunpack.c.l.b16 %v136
    %v1287 = vunpack.c.h.b16 %v136
    %v1288 = vunpack.c.l.b16 %v137
    %v1289 = vunpack.c.h.b16 %v137
    %v1290 = vunpack.c.l.b16 %v138
    %v1291 = vunpack.c.h.b16 %v138
    %v1292 = vunpack.c.l.b16 %v139
    %v1293 = vunpack.c.h.b16 %v139
    %v1294 = vunpack.c.l.b16 %v140
    %v1295 = vunpack.c.h.b16 %v140
    %v1296 = vunpack.c.l.b16 %v141
    %v1297 = vunpack.c.h.b16 %v141
    %v1298 = vunpack.c.l.b16 %v142
    %v1299 = vunpack.c.h.b16 %v142
    %v1300 = vunpack.c.l.b16 %v143
    %v1301 = vunpack.c.h.b16 %v143
    %v1302 = vunpack.c.l.b16 %v144
    %v1303 = vunpack.c.h.b16 %v144
    %v1304 = vunpack.c.l.b16 %v145
    %v1305 = vunpack.c.h.b16 %v145
    %v1306 = vunpack.c.l.b16 %v146
    %v1307 = vunpack.c.h.b16 %v146
    %v1308 = vunpack.c.l.b16 %v147
    %v1309 = vunpack.c.h.b16 %v147
    %v1310 = vunpack.c.l.b16 %v148
    %v1311 = vunpack.c.h.b16 %v148
    %v1312 = vunpack.c.l.b16 %v149
    %v1313 = vunpack.c.h.b16 %v149
    %v1314 = vunpack.c.l.b16 %v150
    %v1315 = vunpack.c.h.b16 %v150
    %v1316 = vunpack.c.l.b16 %v151
    %v1317 = vunpack.c.h.b16 %v151
    %v1318 = vunpack.c.l.b16 %v152
    %v1319 = vunpack.c.h.b16 %v152
    %v1320 = vunpack.c.l.b16 %v153
    %v1321 = vunpack.c.h.b16 %v153
    %v1322 = vunpack.c.l.b16 %v154
    %v1323 = vunpack.c.h.b16 %v154
    %v1324 = vunpack.c.l.b16 %v155
    %v1325 = vunpack.c.h.b16 %v155
    %v1326 = vunpack.c.l.b16 %v156
    %v1327 = vunpack.c.h.b16 %v156
    %v1328 = vunpack.c.l.b16 %v157
    %v1329 = vunpack.c.h.b16 %v157
    %v1330 = vunpack.c.l.b16 %v158
    %v1331 = vunpack.c.h.b16 %v158
    %v1332 = vunpack.c.l.b16 %v159
    %v1333 = vunpack.c.h.b16 %v159
    %v1334 = vunpack.c.l.b16 %v160
    %v1335 = vunpack.c.h.b16 %v160
    %v1336 = vunpack.c.l.b16 %v161
    %v1337 = vunpack.c.h.b16 %v161
    %v1338 = vunpack.c.l.b16 %v162
    %v1339 = vunpack.c.h.b16 %v162
    %v1340 = vunpack.c.l.b16 %v163
    %v1341 = vunpack.c.h.b16 %v163
    %v1342 = vunpack.c.l.b16 %v164
    %v1343 = vunpack.c.h.b16 %v164
    %v1344 = vunpack.c.l.b16 %v165
    %v1345 = vunpack.c.h.b16 %v165
    %v1346 = vunpack.c.l.b16 %v166
    %v1347 = vunpack.c.h.b16 %v166
    %v1348 = vunpack.c.l.b16 %v167
    %v1349 = vunpack.c.h.b16 %v167
    %v1350 = vunpack.c.l.b16 %v168
    %v1351 = vunpack.c.h.b16 %v168
    %v1352 = vunpack.c.l.b16 %v169
    %v1353 = vunpack.c.h.b16 %v169
    %v1354 = vunpack.c.l.b16 %v170
    %v1355 = vunpack.c.h.b16 %v170
    %v1356 = vunpack.c.l.b16 %v171
    %v1357 = vunpack.c.h.b16 %v171
    %v1358 = vunpack.c.l.b16 %v172
    %v1359 = vunpack.c.h.b16 %v172
    %v1360 = vunpack.c.l.b16 %v173
    %v1361 = vunpack.c.h.b16 %v173
    %v1362 = vunpack.c.l.b16 %v174
    %v1363 = vunpack.c.h.b16 %v174
    %v1364 = vunpack.c.l.b16 %v175
    %v1365 = vunpack.c.h.b16 %v175
    %v1366 = vunpack.c.l.b16 %v176
    %v1367 = vunpack.c.h.b16 %v176
    %v1368 = vunpack.c.l.b16 %v177
    %v1369 = vunpack.c.h.b16 %v177
    %v1370 = vunpack.c.l.b16 %v178
    %v1371 = vunpack.c.h.b16 %v178
    %v1372 = vunpack.c.l.b16 %v179
    %v1373 = vunpack.c.h.b16 %v179
    %v1374 = vunpack.c.l.b16 %v180
    %v1375 = vunpack.c.h.b16 %v180
    %v1376 = vunpack.c.l.b16 %v181
    %v1377 = vunpack.c.h.b16 %v181
    %v1378 = vunpack.c.l.b16 %v182
    %v1379 = vunpack.c.h.b16 %v182
    %v1380 = vunpack.c.l.b16 %v183
    %v1381 = vunpack.c.h.b16 %v183
    %v1382 = vunpack.c.l.b16 %v184
    %v1383 = vunpack.c.h.b16 %v184
    %v1384 = vunpack.c.l.b16 %v185
    %v1385 = vunpack.c.h.b16 %v185
    %v1386 = vunpack.c.l.b16 %v186
    %v1387 = vunpack.c.h.b16 %v186
    %v1388 = vunpack.c.l.b16 %v187
    %v1389 = vunpack.c.h.b16 %v187
    %v1390 = vunpack.c.l.b16 %v188
    %v1391 = vunpack.c.h.b16 %v188
    %v1392 = vunpack.c.l.b16 %v189
    %v1393 = vunpack.c.h.b16 %v189
    %v1394 = vunpack.c.l.b16 %v190
    %v1395 = vunpack.c.h.b16 %v190
    %v1396 = vunpack.c.l.b16 %v191
    %v1397 = vunpack.c.h.b16 %v191
    %v1398 = vunpack.c.l.b16 %v192
    %v1399 = vunpack.c.h.b16 %v192
    %v1400 = vunpack.c.l.b16 %v193
    %v1401 = vunpack.c.h.b16 %v193
    %v1402 = vunpack.c.l.b16 %v194
    %v1403 = vunpack.c.h.b16 %v194
    %v1404 = vunpack.c.l.b16 %v195
    %v1405 = vunpack.c.h.b16 %v195
    %v1406 = vunpack.c.l.b16 %v196
    %v1407 = vunpack.c.h.b16 %v196
    %v1408 = vunpack.c.l.b16 %v197
    %v1409 = vunpack.c.h.b16 %v197
    %v1410 = vunpack.c.l.b16 %v198
    %v1411 = vunpack.c.h.b16 %v198
    %v1412 = vunpack.c.l.b16 %v199
    %v1413 = vunpack.c.h.b16 %v199
    %v1414 = vunpack.c.l.b16 %v200
    %v1415 = vunpack.c.h.b16 %v200
    %v1416 = vunpack.c.l.b16 %v201
    %v1417 = vunpack.c.h.b16 %v201
    %v1418 = vunpack.c.l.b16 %v202
    %v1419 = vunpack.c.h.b16 %v202
    %v1420 = vunpack.c.l.b16 %v203
    %v1421 = vunpack.c.h.b16 %v203
    %v1422 = vunpack.c.l.b16 %v204
    %v1423 = vunpack.c.h.b16 %v204
    %v1424 = vunpack.c.l.b16 %v205
    %v1425 = vunpack.c.h.b16 %v205
    %v1426 = vunpack.c.l.b16 %v206
    %v1427 = vunpack.c.h.b16 %v206
    %v1428 = vunpack.c.l.b16 %v207
    %v1429 = vunpack.c.h.b16 %v207
    %v1430 = vunpack.c.l.b16 %v208
    %v1431 = vunpack.c.h.b16 %v208
    %v1432 = vunpack.c.l.b16 %v209
    %v1433 = vunpack.c.h.b16 %v209
    %v1434 = vunpack.c.l.b16 %v210
    %v1435 = vunpack.c.h.b16 %v210
    %v1436 = vunpack.c.l.b16 %v211
    %v1437 = vunpack.c.h.b16 %v211
    %v1438 = vunpack.c.l.b16 %v212
    %v1439 = vunpack.c.h.b16 %v212
    %v1440 = vunpack.c.l.b16 %v213
    %v1441 = vunpack.c.h.b16 %v213
    %v1442 = vunpack.c.l.b16 %v214
    %v1443 = vunpack.c.h.b16 %v214
    %v1444 = vunpack.c.l.b16 %v215
    %v1445 = vunpack.c.h.b16 %v215
    %v1446 = vunpack.c.l.b16 %v216
    %v1447 = vunpack.c.h.b16 %v216
    %v1448 = vunpack.c.l.b16 %v217
    %v1449 = vunpack.c.h.b16 %v217
    %v1450 = vunpack.c.l.b16 %v218
    %v1451 = vunpack.c.h.b16 %v218
    %v1452 = vunpack.c.l.b16 %v219
    %v1453 = vunpack.c.h.b16 %v219
    %v1454 = vunpack.c.l.b16 %v220
    %v1455 = vunpack.c.h.b16 %v220
    %v1456 = vunpack.c.l.b16 %v221
    %v1457 = vunpack.c.h.b16 %v221
    %v1458 = vunpack.c.l.b16 %v222
    %v1459 = vunpack.c.h.b16 %v222
    %v1460 = vunpack.c.l.b16 %v223
    %v1461 = vunpack.c.h.b16 %v223
    %v1462 = vunpack.c.l.b16 %v224
    %v1463 = vunpack.c.h.b16 %v224
    %v1464 = vunpack.c.l.b16 %v225
    %v1465 = vunpack.c.h.b16 %v225
    %v1466 = vunpack.c.l.b16 %v226
    %v1467 = vunpack.c.h.b16 %v226
    %v1468 = vunpack.c.l.b16 %v227
    %v1469 = vunpack.c.h.b16 %v227
    %v1470 = vunpack.c.l.b16 %v228
    %v1471 = vunpack.c.h.b16 %v228
    %v1472 = vunpack.c.l.b16 %v229
    %v1473 = vunpack.c.h.b16 %v229
    %v1474 = vunpack.c.l.b16 %v230
    %v1475 = vunpack.c.h.b16 %v230
    %v1476 = vunpack.c.l.b16 %v231
    %v1477 = vunpack.c.h.b16 %v231
    %v1478 = vunpack.c.l.b16 %v232
    %v1479 = vunpack.c.h.b16 %v232
    %v1480 = vunpack.c.l.b16 %v233
    %v1481 = vunpack.c.h.b16 %v233
    %v1482 = vunpack.c.l.b16 %v234
    %v1483 = vunpack.c.h.b16 %v234
    %v1484 = vunpack.c.l.b16 %v235
    %v1485 = vunpack.c.h.b16 %v235
    %v1486 = vunpack.c.l.b16 %v236
    %v1487 = vunpack.c.h.b16 %v236
    %v1488 = vunpack.c.l.b16 %v237
    %v1489 = vunpack.c.h.b16 %v237
    %v1490 = vunpack.c.l.b16 %v238
    %v1491 = vunpack.c.h.b16 %v238
    %v1492 = vunpack.c.l.b16 %v239
    %v1493 = vunpack.c.h.b16 %v239
    %v1494 = vunpack.c.l.b16 %v240
    %v1495 = vunpack.c.h.b16 %v240
    %v1496 = vunpack.c.l.b16 %v241
    %v1497 = vunpack.c.h.b16 %v241
    %v1498 = vunpack.c.l.b16 %v242
    %v1499 = vunpack.c.h.b16 %v242
    %v1500 = vunpack.c.l.b16 %v243
    %v1501 = vunpack.c.h.b16 %v243
    %v1502 = vunpack.c.l.b16 %v244
    %v1503 = vunpack.c.h.b16 %v244
    %v1504 = vunpack.c.l.b16 %v245
    %v1505 = vunpack.c.h.b16 %v245
    %v1506 = vunpack.c.l.b16 %v246
    %v1507 = vunpack.c.h.b16 %v246
    %v1508 = vunpack.c.l.b16 %v247
    %v1509 = vunpack.c.h.b16 %v247
    %v1510 = vunpack.c.l.b16 %v248
    %v1511 = vunpack.c.h.b16 %v248
    %v1512 = vunpack.c.l.b16 %v249
    %v1513 = vunpack.c.h.b16 %v249
    %v1514 = vunpack.c.l.b16 %v250
    %v1515 = vunpack.c.h.b16 %v250
    %v1516 = vunpack.c.l.b16 %v251
    %v1517 = vunpack.c.h.b16 %v251
    %v1518 = vunpack.c.l.b16 %v252
    %v1519 = vunpack.c.h.b16 %v252
    %v1520 = vunpack.c.l.b16 %v253
    %v1521 = vunpack.c.h.b16 %v253
    %v1522 = vunpack.c.l.b16 %v254
    %v1523 = vunpack.c.h.b16 %v254
    %v1524 = vunpack.c.l.b16 %v255
    %v1525 = vunpack.c.h.b16 %v255
    %v1526 = vunpack.c.l.b16 %v256
    %v1527 = vunpack.c.h.b16 %v256
    %v1528 = vunpack.c.l.b16 %v257
    %v1529 = vunpack.c.h.b16 %v257
    %v1530 = vunpack.c.l.b16 %v258
    %v1531 = vunpack.c.h.b16 %v258
    %v1532 = vunpack.c.l.b16 %v259
    %v1533 = vunpack.c.h.b16 %v259
    %v1534 = vunpack.c.l.b16 %v260
    %v1535 = vunpack.c.h.b16 %v260
    %v1536 = vunpack.c.l.b16 %v261
    %v1537 = vunpack.c.h.b16 %v261
    %v1538 = vunpack.c.l.b16 %v262
    %v1539 = vunpack.c.h.b16 %v262
    %v1540 = vunpack.c.l.b16 %v263
    %v1541 = vunpack.c.h.b16 %v263
    %v1542 = vunpack.c.l.b16 %v264
    %v1543 = vunpack.c.h.b16 %v264
    %v1544 = vunpack.c.l.b16 %v265
    %v1545 = vunpack.c.h.b16 %v265
    %v1546 = vunpack.c.l.b16 %v266
    %v1547 = vunpack.c.h.b16 %v266
    %v1548 = vunpack.c.l.b16 %v267
    %v1549 = vunpack.c.h.b16 %v267
    %v1550 = vunpack.c.l.b16 %v268
    %v1551 = vunpack.c.h.b16 %v268
    %v1552 = vunpack.c.l.b16 %v269
    %v1553 = vunpack.c.h.b16 %v269
    %v1554 = vunpack.c.l.b16 %v270
    %v1555 = vunpack.c.h.b16 %v270
    %v1556 = vunpack.c.l.b16 %v271
    %v1557 = vunpack.c.h.b16 %v271
    %v1558 = vunpack.c.l.b16 %v272
    %v1559 = vunpack.c.h.b16 %v272
    %v1560 = vunpack.c.l.b16 %v273
    %v1561 = vunpack.c.h.b16 %v273
    %v1562 = vunpack.c.l.b16 %v274
    %v1563 = vunpack.c.h.b16 %v274
    %v1564 = vunpack.c.l.b16 %v275
    %v1565 = vunpack.c.h.b16 %v275
    %v1566 = vunpack.c.l.b16 %v276
    %v1567 = vunpack.c.h.b16 %v276
    %v1568 = vunpack.c.l.b16 %v277
    %v1569 = vunpack.c.h.b16 %v277
    %v1570 = vunpack.c.l.b16 %v278
    %v1571 = vunpack.c.h.b16 %v278
    %v1572 = vunpack.c.l.b16 %v279
    %v1573 = vunpack.c.h.b16 %v279
    %v1574 = vunpack.c.l.b16 %v280
    %v1575 = vunpack.c.h.b16 %v280
    %v1576 = vunpack.c.l.b16 %v281
    %v1577 = vunpack.c.h.b16 %v281
    %v1578 = vunpack.c.l.b16 %v282
    %v1579 = vunpack.c.h.b16 %v282
    %v1580 = vunpack.c.l.b16 %v283
    %v1581 = vunpack.c.h.b16 %v283
    %v1582 = vunpack.c.l.b16 %v284
    %v1583 = vunpack.c.h.b16 %v284
    %v1584 = vunpack.c.l.b16 %v285
    %v1585 = vunpack.c.h.b16 %v285
    %v1586 = vunpack.c.l.b16 %v286
    %v1587 = vunpack.c.h.b16 %v286
    %v1588 = vunpack.c.l.b16 %v287
    %v1589 = vunpack.c.h.b16 %v287
    %v1590 = vunpack.c.l.b16 %v288
    %v1591 = vunpack.c.h.b16 %v288
    %v1592 = vunpack.c.l.b16 %v289
    %v1593 = vunpack.c.h.b16 %v289
    %v1594 = vunpack.c.l.b16 %v290
    %v1595 = vunpack.c.h.b16 %v290
    %v1596 = vunpack.c.l.b16 %v291
    %v1597 = vunpack.c.h.b16 %v291
    %v1598 = vunpack.c.l.b16 %v292
    %v1599 = vunpack.c.h.b16 %v292
    %v1600 = vunpack.c.l.b16 %v293
    %v1601 = vunpack.c.h.b16 %v293
    %v1602 = vunpack.c.l.b16 %v294
    %v1603 = vunpack.c.h.b16 %v294
    %v1604 = vunpack.c.l.b16 %v295
    %v1605 = vunpack.c.h.b16 %v295
    %v1606 = vunpack.c.l.b16 %v296
    %v1607 = vunpack.c.h.b16 %v296
    %v1608 = vunpack.c.l.b16 %v297
    %v1609 = vunpack.c.h.b16 %v297
    %v1610 = vunpack.c.l.b16 %v298
    %v1611 = vunpack.c.h.b16 %v298
    %v1612 = vunpack.c.l.b16 %v299
    %v1613 = vunpack.c.h.b16 %v299
    %v1614 = vunpack.c.l.b16 %v300
    %v1615 = vunpack.c.h.b16 %v300
    %v1616 = vunpack.c.l.b16 %v301
    %v1617 = vunpack.c.h.b16 %v301
    %v1618 = vunpack.c.l.b16 %v302
    %v1619 = vunpack.c.h.b16 %v302
    %v1620 = vunpack.c.l.b16 %v303
    %v1621 = vunpack.c.h.b16 %v303
    %v1622 = vunpack.c.l.b16 %v304
    %v1623 = vunpack.c.h.b16 %v304
    %v1624 = vunpack.c.l.b16 %v305
    %v1625 = vunpack.c.h.b16 %v305
    %v1626 = vunpack.c.l.b16 %v306
    %v1627 = vunpack.c.h.b16 %v306
    %v1628 = vunpack.c.l.b16 %v307
    %v1629 = vunpack.c.h.b16 %v307
    %v1630 = vunpack.c.l.b16 %v308
    %v1631 = vunpack.c.h.b16 %v308
    %v1632 = vunpack.c.l.b16 %v309
    %v1633 = vunpack.c.h.b16 %v309
    %v1634 = vunpack.c.l.b16 %v310
    %v1635 = vunpack.c.h.b16 %v310
    %v1636 = vunpack.c.l.b16 %v311
    %v1637 = vunpack.c.h.b16 %v311
    %v1638 = vunpack.c.l.b16 %v312
    %v1639 = vunpack.c.h.b16 %v312
    %v1640 = vunpack.c.l.b16 %v313
    %v1641 = vunpack.c.h.b16 %v313
    %v1642 = vunpack.c.l.b16 %v314
    %v1643 = vunpack.c.h.b16 %v314
    %v1644 = vunpack.c.l.b16 %v315
    %v1645 = vunpack.c.h.b16 %v315
    %v1646 = vunpack.c.l.b16 %v316
    %v1647 = vunpack.c.h.b16 %v316
    %v1648 = vunpack.c.l.b16 %v317
    %v1649 = vunpack.c.h.b16 %v317
    %v1650 = vunpack.c.l.b16 %v318
    %v1651 = vunpack.c.h.b16 %v318
    %v1652 = vunpack.c.l.b16 %v319
    %v1653 = vunpack.c.h.b16 %v319
    %v1654 = vunpack.c.l.b16 %v320
    %v1655 = vunpack.c.h.b16 %v320
    %v1656 = vunpack.c.l.b16 %v321
    %v1657 = vunpack.c.h.b16 %v321
    %v1658 = vunpack.c.l.b16 %v322
    %v1659 = vunpack.c.h.b16 %v322
    %v1660 = vunpack.c.l.b16 %v323
    %v1661 = vunpack.c.h.b16 %v323
    %v1662 = vunpack.c.l.b16 %v324
    %v1663 = vunpack.c.h.b16 %v324
    %v1664 = vunpack.c.l.b16 %v325
    %v1665 = vunpack.c.h.b16 %v325
    %v1666 = vunpack.c.l.b16 %v326
    %v1667 = vunpack.c.h.b16 %v326
    %v1668 = vunpack.c.l.b16 %v327
    %v1669 = vunpack.c.h.b16 %v327
    %v1670 = vunpack.c.l.b16 %v328
    %v1671 = vunpack.c.h.b16 %v328
    %v1672 = vunpack.c.l.b16 %v329
    %v1673 = vunpack.c.h.b16 %v329
    %v1674 = vunpack.c.l.b16 %v330
    %v1675 = vunpack.c.h.b16 %v330
    %v1676 = vunpack.c.l.b16 %v331
    %v1677 = vunpack.c.h.b16 %v331
    %v1678 = vunpack.c.l.b16 %v332
    %v1679 = vunpack.c.h.b16 %v332
    %v1680 = vunpack.c.l.b16 %v333
    %v1681 = vunpack.c.h.b16 %v333
    %v1682 = vunpack.c.l.b16 %v334
    %v1683 = vunpack.c.h.b16 %v334
    %v1684 = vunpack.c.l.b16 %v335
    %v1685 = vunpack.c.h.b16 %v335
    %v1686 = vunpack.c.l.b16 %v336
    %v1687 = vunpack.c.h.b16 %v336
    %v1688 = vunpack.c.l.b16 %v337
    %v1689 = vunpack.c.h.b16 %v337
    %v1690 = vunpack.c.l.b16 %v338
    %v1691 = vunpack.c.h.b16 %v338
    %v1692 = vunpack.c.l.b16 %v339
    %v1693 = vunpack.c.h.b16 %v339
    %v1694 = vunpack.c.l.b16 %v340
    %v1695 = vunpack.c.h.b16 %v340
    %v1696 = vunpack.c.l.b16 %v341
    %v1697 = vunpack.c.h.b16 %v341
    %v1698 = vunpack.c.l.b16 %v342
    %v1699 = vunpack.c.h.b16 %v342
    %v1700 = vunpack.c.l.b16 %v343
    %v1701 = vunpack.c.h.b16 %v343
    %v1702 = vunpack.c.l.b16 %v344
    %v1703 = vunpack.c.h.b16 %v344
    %v1704 = vunpack.c.l.b16 %v345
    %v1705 = vunpack.c.h.b16 %v345
    %v1706 = vunpack.c.l.b16 %v346
    %v1707 = vunpack.c.h.b16 %v346
    %v1708 = vunpack.c.l.b16 %v347
    %v1709 = vunpack.c.h.b16 %v347
    %v1710 = vunpack.c.l.b16 %v348
    %v1711 = vunpack.c.h.b16 %v348
    %v1712 = vunpack.c.l.b16 %v349
    %v1713 = vunpack.c.h.b16 %v349
    %v1714 = vunpack.c.l.b16 %v350
    %v1715 = vunpack.c.h.b16 %v350
    %v1716 = vunpack.c.l.b16 %v351
    %v1717 = vunpack.c.h.b16 %v351
    %v1718 = vunpack.c.l.b16 %v352
    %v1719 = vunpack.c.h.b16 %v352
    %v1720 = vunpack.c.l.b16 %v353
    %v1721 = vunpack.c.h.b16 %v353
    %v1722 = vunpack.c.l.b16 %v354
    %v1723 = vunpack.c.h.b16 %v354
    %v1724 = vunpack.c.l.b16 %v355
    %v1725 = vunpack.c.h.b16 %v355
    %v1726 = vunpack.c.l.b16 %v356
    %v1727 = vunpack.c.h.b16 %v356
    %v1728 = vunpack.c.l.b16 %v357
    %v1729 = vunpack.c.h.b16 %v357
    %v1730 = vunpack.c.l.b16 %v358
    %v1731 = vunpack.c.h.b16 %v358
    %v1732 = vunpack.c.l.b16 %v359
    %v1733 = vunpack.c.h.b16 %v359
    %v1734 = vunpack.c.l.b16 %v360
    %v1735 = vunpack.c.h.b16 %v360
    %v1736 = vunpack.c.l.b16 %v361
    %v1737 = vunpack.c.h.b16 %v361
    %v1738 = vunpack.c.l.b16 %v362
    %v1739 = vunpack.c.h.b16 %v362
    %v1740 = vunpack.c.l.b16 %v363
    %v1741 = vunpack.c.h.b16 %v363
    %v1742 = vunpack.c.l.b16 %v364
    %v1743 = vunpack.c.h.b16 %v364
    %v1744 = vunpack.c.l.b16 %v365
    %v1745 = vunpack.c.h.b16 %v365
    %v1746 = vunpack.c.l.b16 %v366
    %v1747 = vunpack.c.h.b16 %v366
    %v1748 = vunpack.c.l.b16 %v367
    %v1749 = vunpack.c.h.b16 %v367
    %v1750 = vunpack.c.l.b16 %v368
    %v1751 = vunpack.c.h.b16 %v368
    %v1752 = vunpack.c.l.b16 %v369
    %v1753 = vunpack.c.h.b16 %v369
    %v1754 = vunpack.c.l.b16 %v370
    %v1755 = vunpack.c.h.b16 %v370
    %v1756 = vunpack.c.l.b16 %v371
    %v1757 = vunpack.c.h.b16 %v371
    %v1758 = vunpack.c.l.b16 %v372
    %v1759 = vunpack.c.h.b16 %v372
    %v1760 = vunpack.c.l.b16 %v373
    %v1761 = vunpack.c.h.b16 %v373
    %v1762 = vunpack.c.l.b16 %v374
    %v1763 = vunpack.c.h.b16 %v374
    %v1764 = vunpack.c.l.b16 %v375
    %v1765 = vunpack.c.h.b16 %v375
    %v1766 = vunpack.c.l.b16 %v376
    %v1767 = vunpack.c.h.b16 %v376
    %v1768 = vunpack.c.l.b16 %v377
    %v1769 = vunpack.c.h.b16 %v377
    %v1770 = vunpack.c.l.b16 %v378
    %v1771 = vunpack.c.h.b16 %v378
    %v1772 = vunpack.c.l.b16 %v379
    %v1773 = vunpack.c.h.b16 %v379
    %v1774 = vunpack.c.l.b16 %v380
    %v1775 = vunpack.c.h.b16 %v380
    %v1776 = vunpack.c.l.b16 %v381
    %v1777 = vunpack.c.h.b16 %v381
    %v1778 = vunpack.c.l.b16 %v382
    %v1779 = vunpack.c.h.b16 %v382
    %v1780 = vunpack.c.l.b16 %v383
    %v1781 = vunpack.c.h.b16 %v383
    %v1782 = vunpack.c.l.b16 %v384
    %v1783 = vunpack.c.h.b16 %v384
    %v1784 = vunpack.c.l.b16 %v385
    %v1785 = vunpack.c.h.b16 %v385
    %v1786 = vunpack.c.l.b16 %v386
    %v1787 = vunpack.c.h.b16 %v386
    %v1788 = vunpack.c.l.b16 %v387
    %v1789 = vunpack.c.h.b16 %v387
    %v1790 = vunpack.c.l.b16 %v388
    %v1791 = vunpack.c.h.b16 %v388
    %v1792 = vunpack.c.l.b16 %v389
    %v1793 = vunpack.c.h.b16 %v389
    %v1794 = vunpack.c.l.b16 %v390
    %v1795 = vunpack.c.h.b16 %v390
    %v1796 = vunpack.c.l.b16 %v391
    %v1797 = vunpack.c.h.b16 %v391
    %v1798 = vunpack.c.l.b16 %v392
    %v1799 = vunpack.c.h.b16 %v392
    %v1800 = vunpack.c.l.b16 %v393
    %v1801 = vunpack.c.h.b16 %v393
    %v1802 = vunpack.c.l.b16 %v394
    %v1803 = vunpack.c.h.b16 %v394
    %v1804 = vunpack.c.l.b16 %v395
    %v1805 = vunpack.c.h.b16 %v395
    %v1806 = vunpack.c.l.b16 %v396
    %v1807 = vunpack.c.h.b16 %v396
    %v1808 = vunpack.c.l.b16 %v397
    %v1809 = vunpack.c.h.b16 %v397
    %v1810 = vunpack.c.l.b16 %v398
    %v1811 = vunpack.c.h.b16 %v398
    %v1812 = vunpack.c.l.b16 %v399
    %v1813 = vunpack.c.h.b16 %v399
    %v1814 = vunpack.c.l.b16 %v400
    %v1815 = vunpack.c.h.b16 %v400
    %v1816 = vunpack.c.l.b16 %v401
    %v1817 = vunpack.c.h.b16 %v401
    %v1818 = vunpack.c.l.b16 %v402
    %v1819 = vunpack.c.h.b16 %v402
    %v1820 = vunpack.c.l.b16 %v403
    %v1821 = vunpack.c.h.b16 %v403
    %v1822 = vunpack.c.l.b16 %v404
    %v1823 = vunpack.c.h.b16 %v404
    %v1824 = vunpack.c.l.b16 %v405
    %v1825 = vunpack.c.h.b16 %v405
    %v1826 = vunpack.c.l.b16 %v406
    %v1827 = vunpack.c.h.b16 %v406
    %v1828 = vunpack.c.l.b16 %v407
    %v1829 = vunpack.c.h.b16 %v407
    %v1830 = vunpack.c.l.b16 %v408
    %v1831 = vunpack.c.h.b16 %v408
    %v1832 = vunpack.c.l.b16 %v409
    %v1833 = vunpack.c.h.b16 %v409
    %v1834 = vunpack.c.l.b16 %v410
    %v1835 = vunpack.c.h.b16 %v410
    %v1836 = vunpack.c.l.b16 %v411
    %v1837 = vunpack.c.h.b16 %v411
    %v1838 = vunpack.c.l.b16 %v412
    %v1839 = vunpack.c.h.b16 %v412
    %v1840 = vunpack.c.l.b16 %v413
    %v1841 = vunpack.c.h.b16 %v413
    %v1842 = vunpack.c.l.b16 %v414
    %v1843 = vunpack.c.h.b16 %v414
    %v1844 = vunpack.c.l.b16 %v415
    %v1845 = vunpack.c.h.b16 %v415
    %v1846 = vunpack.c.l.b16 %v416
    %v1847 = vunpack.c.h.b16 %v416
    %v1848 = vunpack.c.l.b16 %v417
    %v1849 = vunpack.c.h.b16 %v417
    %v1850 = vunpack.c.l.b16 %v418
    %v1851 = vunpack.c.h.b16 %v418
    %v1852 = vunpack.c.l.b16 %v419
    %v1853 = vunpack.c.h.b16 %v419
    %v1854 = vunpack.c.l.b16 %v420
    %v1855 = vunpack.c.h.b16 %v420
    %v1856 = vunpack.c.l.b16 %v421
    %v1857 = vunpack.c.h.b16 %v421
    %v1858 = vunpack.c.l.b16 %v422
    %v1859 = vunpack.c.h.b16 %v422
    %v1860 = vunpack.c.l.b16 %v423
    %v1861 = vunpack.c.h.b16 %v423
    %v1862 = vunpack.c.l.b16 %v424
    %v1863 = vunpack.c.h.b16 %v424
    %v1864 = vunpack.c.l.b16 %v425
    %v1865 = vunpack.c.h.b16 %v425
    %v1866 = vunpack.c.l.b16 %v426
    %v1867 = vunpack.c.h.b16 %v426
    %v1868 = vunpack.c.l.b16 %v427
    %v1869 = vunpack.c.h.b16 %v427
    %v1870 = vunpack.c.l.b16 %v428
    %v1871 = vunpack.c.h.b16 %v428
    %v1872 = vunpack.c.l.b16 %v429
    %v1873 = vunpack.c.h.b16 %v429
    %v1874 = vunpack.c.l.b16 %v430
    %v1875 = vunpack.c.h.b16 %v430
    %v1876 = vunpack.c.l.b16 %v431
    %v1877 = vunpack.c.h.b16 %v431
    %v1878 = vunpack.c.l.b16 %v432
    %v1879 = vunpack.c.h.b16 %v432
    %v1880 = vunpack.c.l.b16 %v433
    %v1881 = vunpack.c.h.b16 %v433
    %v1882 = vunpack.c.l.b16 %v434
    %v1883 = vunpack.c.h.b16 %v434
    %v1884 = vunpack.c.l.b16 %v435
    %v1885 = vunpack.c.h.b16 %v435
    %v1886 = vunpack.c.l.b16 %v436
    %v1887 = vunpack.c.h.b16 %v436
    %v1888 = vunpack.c.l.b16 %v437
    %v1889 = vunpack.c.h.b16 %v437
    %v1890 = vunpack.c.l.b16 %v438
    %v1891 = vunpack.c.h.b16 %v438
    %v1892 = vunpack.c.l.b16 %v439
    %v1893 = vunpack.c.h.b16 %v439
    %v1894 = vunpack.c.l.b16 %v440
    %v1895 = vunpack.c.h.b16 %v440
    %v1896 = vunpack.c.l.b16 %v441
    %v1897 = vunpack.c.h.b16 %v441
    %v1898 = vunpack.c.l.b16 %v442
    %v1899 = vunpack.c.h.b16 %v442
    %v1900 = vunpack.c.l.b16 %v443
    %v1901 = vunpack.c.h.b16 %v443
    %v1902 = vunpack.c.l.b16 %v444
    %v1903 = vunpack.c.h.b16 %v444
    %v1904 = vunpack.c.l.b16 %v445
    %v1905 = vunpack.c.h.b16 %v445
    %v1906 = vunpack.c.l.b16 %v446
    %v1907 = vunpack.c.h.b16 %v446
    %v1908 = vunpack.c.l.b16 %v447
    %v1909 = vunpack.c.h.b16 %v447
    %v1910 = vunpack.c.l.b16 %v448
    %v1911 = vunpack.c.h.b16 %v448
    %v1912 = vunpack.c.l.b16 %v449
    %v1913 = vunpack.c.h.b16 %v449
    %v1914 = vunpack.c.l.b16 %v450
    %v1915 = vunpack.c.h.b16 %v450
    %v1916 = vunpack.c.l.b16 %v451
    %v1917 = vunpack.c.h.b16 %v451
    %v1918 = vunpack.c.l.b16 %v452
    %v1919 = vunpack.c.h.b16 %v452
    %v1920 = vunpack.c.l.b16 %v453
    %v1921 = vunpack.c.h.b16 %v453
    %v1922 = vunpack.c.l.b16 %v454
    %v1923 = vunpack.c.h.b16 %v454
    %v1924 = vunpack.c.l.b16 %v455
    %v1925 = vunpack.c.h.b16 %v455
    %v1926 = vunpack.c.l.b16 %v456
    %v1927 = vunpack.c.h.b16 %v456
    %v1928 = vunpack.c.l.b16 %v457
    %v1929 = vunpack.c.h.b16 %v457
    %v1930 = vunpack.c.l.b16 %v458
    %v1931 = vunpack.c.h.b16 %v458
    %v1932 = vunpack.c.l.b16 %v459
    %v1933 = vunpack.c.h.b16 %v459
    %v1934 = vunpack.c.l.b16 %v460
    %v1935 = vunpack.c.h.b16 %v460
    %v1936 = vunpack.c.l.b16 %v461
    %v1937 = vunpack.c.h.b16 %v461
    %v1938 = vunpack.c.l.b16 %v462
    %v1939 = vunpack.c.h.b16 %v462
    %v1940 = vunpack.c.l.b16 %v463
    %v1941 = vunpack.c.h.b16 %v463
    %v1942 = vunpack.c.l.b16 %v464
    %v1943 = vunpack.c.h.b16 %v464
    %v1944 = vunpack.c.l.b16 %v465
    %v1945 = vunpack.c.h.b16 %v465
    %v1946 = vunpack.c.l.b16 %v466
    %v1947 = vunpack.c.h.b16 %v466
    %v1948 = vunpack.c.l.b16 %v467
    %v1949 = vunpack.c.h.b16 %v467
    %v1950 = vunpack.c.l.b16 %v468
    %v1951 = vunpack.c.h.b16 %v468
    %v1952 = vunpack.c.l.b16 %v469
    %v1953 = vunpack.c.h.b16 %v469
    %v1954 = vunpack.c.l.b16 %v470
    %v1955 = vunpack.c.h.b16 %v470
    %v1956 = vunpack.c.l.b16 %v471
    %v1957 = vunpack.c.h.b16 %v471
    %v1958 = vunpack.c.l.b16 %v472
    %v1959 = vunpack.c.h.b16 %v472
    %v1960 = vunpack.c.l.b16 %v473
    %v1961 = vunpack.c.h.b16 %v473
    %v1962 = vunpack.c.l.b16 %v474
    %v1963 = vunpack.c.h.b16 %v474
    %v1964 = vunpack.c.l.b16 %v475
    %v1965 = vunpack.c.h.b16 %v475
    %v1966 = vunpack.c.l.b16 %v476
    %v1967 = vunpack.c.h.b16 %v476
    %v1968 = vunpack.c.l.b16 %v477
    %v1969 = vunpack.c.h.b16 %v477
    %v1970 = vunpack.c.l.b16 %v478
    %v1971 = vunpack.c.h.b16 %v478
    %v1972 = vunpack.c.l.b16 %v479
    %v1973 = vunpack.c.h.b16 %v479
    %v1974 = vunpack.c.l.b16 %v480
    %v1975 = vunpack.c.h.b16 %v480
    %v1976 = vunpack.c.l.b16 %v481
    %v1977 = vunpack.c.h.b16 %v481
    %v1978 = vunpack.c.l.b16 %v482
    %v1979 = vunpack.c.h.b16 %v482
    %v1980 = vunpack.c.l.b16 %v483
    %v1981 = vunpack.c.h.b16 %v483
    %v1982 = vunpack.c.l.b16 %v484
    %v1983 = vunpack.c.h.b16 %v484
    %v1984 = vunpack.c.l.b16 %v485
    %v1985 = vunpack.c.h.b16 %v485
    %v1986 = vunpack.c.l.b16 %v486
    %v1987 = vunpack.c.h.b16 %v486
    %v1988 = vunpack.c.l.b16 %v487
    %v1989 = vunpack.c.h.b16 %v487
    %v1990 = vunpack.c.l.b16 %v488
    %v1991 = vunpack.c.h.b16 %v488
    %v1992 = vunpack.c.l.b16 %v489
    %v1993 = vunpack.c.h.b16 %v489
    %v1994 = vunpack.c.l.b16 %v490
    %v1995 = vunpack.c.h.b16 %v490
    %v1996 = vunpack.c.l.b16 %v491
    %v1997 = vunpack.c.h.b16 %v491
    %v1998 = vunpack.c.l.b16 %v492
    %v1999 = vunpack.c.h.b16 %v492
    %v2000 = vunpack.c.l.b16 %v493
    %v2001 = vunpack.c.h.b16 %v493
    %v2002 = vunpack.c.l.b16 %v494
    %v2003 = vunpack.c.h.b16 %v494
    %v2004 = vunpack.c.l.b16 %v495
    %v2005 = vunpack.c.h.b16 %v495
    %v2006 = vunpack.c.l.b16 %v496
    %v2007 = vunpack.c.h.b16 %v496
    %v2008 = vunpack.c.l.b16 %v497
    %v2009 = vunpack.c.h.b16 %v497
    %v2010 = vunpack.c.l.b16 %v498
    %v2011 = vunpack.c.h.b16 %v498
    %v2012 = vunpack.c.l.b16 %v499
    %v2013 = vunpack.c.h.b16 %v499
    %v2014 = vunpack.c.l.b16 %v500
    %v2015 = vunpack.c.h.b16 %v500
    %v2016 = vunpack.c.l.b16 %v501
    %v2017 = vunpack.c.h.b16 %v501
    %v2018 = vunpack.c.l.b16 %v502
    %v2019 = vunpack.c.h.b16 %v502
    %v2020 = vunpack.c.l.b16 %v503
    %v2021 = vunpack.c.h.b16 %v503
    %v2022 = vunpack.c.l.b16 %v504
    %v2023 = vunpack.c.h.b16 %v504
    %v2024 = vunpack.c.l.b16 %v505
    %v2025 = vunpack.c.h.b16 %v505
    %v2026 = vunpack.c.l.b16 %v506
    %v2027 = vunpack.c.h.b16 %v506
    %v2028 = vunpack.c.l.b16 %v507
    %v2029 = vunpack.c.h.b16 %v507
    %v2030 = vunpack.c.l.b16 %v508
    %v2031 = vunpack.c.h.b16 %v508
    %v2032 = vunpack.c.l.b16 %v509
    %v2033 = vunpack.c.h.b16 %v509
    %v2034 = vunpack.c.l.b16 %v510
    %v2035 = vunpack.c.h.b16 %v510
    %v2036 = vunpack.c.l.b16 %v511
    %v2037 = vunpack.c.h.b16 %v511
    %v2038 = vunpack.c.l.b16 %v512
    %v2039 = vunpack.c.h.b16 %v512
    %v2040 = vunpack.c.l.b16 %v513
    %v2041 = vunpack.c.h.b16 %v513
    %v2042 = vunpack.c.l.b16 %v514
    %v2043 = vunpack.c.h.b16 %v514
    %v2044 = vunpack.c.l.b16 %v515
    %v2045 = vunpack.c.h.b16 %v515
    %v2046 = vunpack.c.l.b16 %v516
    %v2047 = vunpack.c.h.b16 %v516
    %v2048 = vunpack.c.l.b16 %v517
    %v2049 = vunpack.c.h.b16 %v517
    %v2050 = vunpack.c.l.b16 %v518
    %v2051 = vunpack.c.h.b16 %v518
    %v2052 = vunpack.c.l.b16 %v519
    %v2053 = vunpack.c.h.b16 %v519
    %v2054 = vunpack.c.l.b16 %v520
    %v2055 = vunpack.c.h.b16 %v520
    %v2056 = vunpack.c.l.b16 %v521
    %v2057 = vunpack.c.h.b16 %v521
    %v2058 = vunpack.c.l.b16 %v522
    %v2059 = vunpack.c.h.b16 %v522
    %v2060 = vunpack.c.l.b16 %v523
    %v2061 = vunpack.c.h.b16 %v523
    %v2062 = vunpack.c.l.b16 %v524
    %v2063 = vunpack.c.h.b16 %v524
    %v2064 = vunpack.c.l.b16 %v525
    %v2065 = vunpack.c.h.b16 %v525
    %v2066 = vunpack.c.l.b16 %v526
    %v2067 = vunpack.c.h.b16 %v526
    %v2068 = vunpack.c.l.b16 %v527
    %v2069 = vunpack.c.h.b16 %v527
    %v2070 = vunpack.c.l.b16 %v528
    %v2071 = vunpack.c.h.b16 %v528
    %v2072 = vunpack.c.l.b16 %v529
    %v2073 = vunpack.c.h.b16 %v529
    %v2074 = vunpack.c.l.b16 %v530
    %v2075 = vunpack.c.h.b16 %v530
    %v2076 = vunpack.c.l.b16 %v531
    %v2077 = vunpack.c.h.b16 %v531
    %v2078 = vunpack.c.l.b16 %v532
    %v2079 = vunpack.c.h.b16 %v532
    %v2080 = vunpack.c.l.b16 %v533
    %v2081 = vunpack.c.h.b16 %v533
    %v2082 = vunpack.c.l.b16 %v534
    %v2083 = vunpack.c.h.b16 %v534
    %v2084 = vunpack.c.l.b16 %v535
    %v2085 = vunpack.c.h.b16 %v535
    %v2086 = vunpack.c.l.b16 %v536
    %v2087 = vunpack.c.h.b16 %v536
    %v2088 = vunpack.c.l.b16 %v537
    %v2089 = vunpack.c.h.b16 %v537
    %v2090 = vunpack.c.l.b16 %v538
    %v2091 = vunpack.c.h.b16 %v538
    %v2092 = vunpack.c.l.b16 %v539
    %v2093 = vunpack.c.h.b16 %v539
    %v2094 = vunpack.c.l.b16 %v540
    %v2095 = vunpack.c.h.b16 %v540
    %v2096 = vunpack.c.l.b16 %v541
    %v2097 = vunpack.c.h.b16 %v541
    %v2098 = vunpack.c.l.b16 %v542
    %v2099 = vunpack.c.h.b16 %v542
    %v2100 = vunpack.c.l.b16 %v543
    %v2101 = vunpack.c.h.b16 %v543
    %v2102 = vunpack.c.l.b16 %v544
    %v2103 = vunpack.c.h.b16 %v544
    %v2104 = vunpack.c.l.b16 %v545
    %v2105 = vunpack.c.h.b16 %v545
    %v2106 = vunpack.c.l.b16 %v546
    %v2107 = vunpack.c.h.b16 %v546
    %v2108 = vunpack.c.l.b16 %v547
    %v2109 = vunpack.c.h.b16 %v547
    %v2110 = vunpack.c.l.b16 %v548
    %v2111 = vunpack.c.h.b16 %v548
    %v2112 = vunpack.c.l.b16 %v549
    %v2113 = vunpack.c.h.b16 %v549
    %v2114 = vunpack.c.l.b16 %v550
    %v2115 = vunpack.c.h.b16 %v550
    %v2116 = vunpack.c.l.b16 %v551
    %v2117 = vunpack.c.h.b16 %v551
    %v2118 = vunpack.c.l.b16 %v552
    %v2119 = vunpack.c.h.b16 %v552
    %v2120 = vunpack.c.l.b16 %v553
    %v2121 = vunpack.c.h.b16 %v553
    %v2122 = vunpack.c.l.b16 %v554
    %v2123 = vunpack.c.h.b16 %v554
    %v2124 = vunpack.c.l.b16 %v555
    %v2125 = vunpack.c.h.b16 %v555
    %v2126 = vunpack.c.l.b16 %v556
    %v2127 = vunpack.c.h.b16 %v556
    %v2128 = vunpack.c.l.b16 %v557
    %v2129 = vunpack.c.h.b16 %v557
    %v2130 = vunpack.c.l.b16 %v558
    %v2131 = vunpack.c.h.b16 %v558
    %v2132 = vunpack.c.l.b16 %v559
    %v2133 = vunpack.c.h.b16 %v559
    %v2134 = vunpack.c.l.b16 %v560
    %v2135 = vunpack.c.h.b16 %v560
    %v2136 = vunpack.c.l.b16 %v561
    %v2137 = vunpack.c.h.b16 %v561
    %v2138 = vunpack.c.l.b16 %v562
    %v2139 = vunpack.c.h.b16 %v562
    %v2140 = vunpack.c.l.b16 %v563
    %v2141 = vunpack.c.h.b16 %v563
    %v2142 = vunpack.c.l.b16 %v564
    %v2143 = vunpack.c.h.b16 %v564
    %v2144 = vunpack.c.l.b16 %v565
    %v2145 = vunpack.c.h.b16 %v565
    %v2146 = vunpack.c.l.b16 %v566
    %v2147 = vunpack.c.h.b16 %v566
    %v2148 = vunpack.c.l.b16 %v567
    %v2149 = vunpack.c.h.b16 %v567
    %v2150 = vunpack.c.l.b16 %v568
    %v2151 = vunpack.c.h.b16 %v568
    %v2152 = vunpack.c.l.b16 %v569
    %v2153 = vunpack.c.h.b16 %v569
    %v2154 = vunpack.c.l.b16 %v570
    %v2155 = vunpack.c.h.b16 %v570
    %v2156 = vunpack.c.l.b16 %v571
    %v2157 = vunpack.c.h.b16 %v571
    %v2158 = vunpack.c.l.b16 %v572
    %v2159 = vunpack.c.h.b16 %v572
    %v2160 = vunpack.c.l.b16 %v573
    %v2161 = vunpack.c.h.b16 %v573
    %v2162 = vunpack.c.l.b16 %v574
    %v2163 = vunpack.c.h.b16 %v574
    %v2164 = vunpack.c.l.b16 %v575
    %v2165 = vunpack.c.h.b16 %v575
    %v2166 = vunpack.c.l.b16 %v576
    %v2167 = vunpack.c.h.b16 %v576
    %v2168 = vunpack.c.l.b16 %v577
    %v2169 = vunpack.c.h.b16 %v577
    %v2170 = vunpack.c.l.b16 %v578
    %v2171 = vunpack.c.h.b16 %v578
    %v2172 = vunpack.c.l.b16 %v579
    %v2173 = vunpack.c.h.b16 %v579
    %v2174 = vpack.c.b16 %v1158, %v1150
    %v2175 = vpack.c.b16 %v1159, %v1151
    %v2176 = vpack.c.b16 %v1160, %v1152
    %v2177 = vpack.c.b16 %v1161, %v1153
    %v2178 = vpack.c.b16 %v1162, %v1154
    %v2179 = vpack.c.b16 %v1163, %v1155
    %v2180 = vpack.c.b16 %v1164, %v1156
    %v2181 = vpack.c.b16 %v1165, %v1157
    %v2182 = vpack.c.b16 %v1174, %v1166
    %v2183 = vpack.c.b16 %v1175, %v1167
    %v2184 = vpack.c.b16 %v1176, %v1168
    %v2185 = vpack.c.b16 %v1177, %v1169
    %v2186 = vpack.c.b16 %v1178, %v1170
    %v2187 = vpack.c.b16 %v1179, %v1171
    %v2188 = vpack.c.b16 %v1180, %v1172
    %v2189 = vpack.c.b16 %v1181, %v1173
    %v2190 = vpack.c.b16 %v1190, %v1182
    %v2191 = vpack.c.b16 %v1191, %v1183
    %v2192 = vpack.c.b16 %v1192, %v1184
    %v2193 = vpack.c.b16 %v1193, %v1185
    %v2194 = vpack.c.b16 %v1194, %v1186
    %v2195 = vpack.c.b16 %v1195, %v1187
    %v2196 = vpack.c.b16 %v1196, %v1188
    %v2197 = vpack.c.b16 %v1197, %v1189
    %v2198 = vpack.c.b16 %v1206, %v1198
    %v2199 = vpack.c.b16 %v1207, %v1199
    %v2200 = vpack.c.b16 %v1208, %v1200
    %v2201 = vpack.c.b16 %v1209, %v1201
    %v2202 = vpack.c.b16 %v1210, %v1202
    %v2203 = vpack.c.b16 %v1211, %v1203
    %v2204 = vpack.c.b16 %v1212, %v1204
    %v2205 = vpack.c.b16 %v1213, %v1205
    %v2206 = vpack.c.b16 %v1222, %v1214
    %v2207 = vpack.c.b16 %v1223, %v1215
    %v2208 = vpack.c.b16 %v1224, %v1216
    %v2209 = vpack.c.b16 %v1225, %v1217
    %v2210 = vpack.c.b16 %v1226, %v1218
    %v2211 = vpack.c.b16 %v1227, %v1219
    %v2212 = vpack.c.b16 %v1228, %v1220
    %v2213 = vpack.c.b16 %v1229, %v1221
    %v2214 = vpack.c.b16 %v1238, %v1230
    %v2215 = vpack.c.b16 %v1239, %v1231
    %v2216 = vpack.c.b16 %v1240, %v1232
    %v2217 = vpack.c.b16 %v1241, %v1233
    %v2218 = vpack.c.b16 %v1242, %v1234
    %v2219 = vpack.c.b16 %v1243, %v1235
    %v2220 = vpack.c.b16 %v1244, %v1236
    %v2221 = vpack.c.b16 %v1245, %v1237
    %v2222 = vpack.c.b16 %v1254, %v1246
    %v2223 = vpack.c.b16 %v1255, %v1247
    %v2224 = vpack.c.b16 %v1256, %v1248
    %v2225 = vpack.c.b16 %v1257, %v1249
    %v2226 = vpack.c.b16 %v1258, %v1250
    %v2227 = vpack.c.b16 %v1259, %v1251
    %v2228 = vpack.c.b16 %v1260, %v1252
    %v2229 = vpack.c.b16 %v1261, %v1253
    %v2230 = vpack.c.b16 %v1270, %v1262
    %v2231 = vpack.c.b16 %v1271, %v1263
    %v2232 = vpack.c.b16 %v1272, %v1264
    %v2233 = vpack.c.b16 %v1273, %v1265
    %v2234 = vpack.c.b16 %v1274, %v1266
    %v2235 = vpack.c.b16 %v1275, %v1267
    %v2236 = vpack.c.b16 %v1276, %v1268
    %v2237 = vpack.c.b16 %v1277, %v1269
    %v2238 = vpack.c.b16 %v1286, %v1278
    %v2239 = vpack.c.b16 %v1287, %v1279
    %v2240 = vpack.c.b16 %v1288, %v1280
    %v2241 = vpack.c.b16 %v1289, %v1281
    %v2242 = vpack.c.b16 %v1290, %v1282
    %v2243 = vpack.c.b16 %v1291, %v1283
    %v2244 = vpack.c.b16 %v1292, %v1284
    %v2245 = vpack.c.b16 %v1293, %v1285
    %v2246 = vpack.c.b16 %v1302, %v1294
    %v2247 = vpack.c.b16 %v1303, %v1295
    %v2248 = vpack.c.b16 %v1304, %v1296
    %v2249 = vpack.c.b16 %v1305, %v1297
    %v2250 = vpack.c.b16 %v1306, %v1298
    %v2251 = vpack.c.b16 %v1307, %v1299
    %v2252 = vpack.c.b16 %v1308, %v1300
    %v2253 = vpack.c.b16 %v1309, %v1301
    %v2254 = vpack.c.b16 %v1318, %v1310
    %v2255 = vpack.c.b16 %v1319, %v1311
    %v2256 = vpack.c.b16 %v1320, %v1312
    %v2257 = vpack.c.b16 %v1321, %v1313
    %v2258 = vpack.c.b16 %v1322, %v1314
    %v2259 = vpack.c.b16 %v1323, %v1315
    %v2260 = vpack.c.b16 %v1324, %v1316
    %v2261 = vpack.c.b16 %v1325, %v1317
    %v2262 = vpack.c.b16 %v1334, %v1326
    %v2263 = vpack.c.b16 %v1335, %v1327
    %v2264 = vpack.c.b16 %v1336, %v1328
    %v2265 = vpack.c.b16 %v1337, %v1329
    %v2266 = vpack.c.b16 %v1338, %v1330
    %v2267 = vpack.c.b16 %v1339, %v1331
    %v2268 = vpack.c.b16 %v1340, %v1332
    %v2269 = vpack.c.b16 %v1341, %v1333
    %v2270 = vpack.c.b16 %v1350, %v1342
    %v2271 = vpack.c.b16 %v1351, %v1343
    %v2272 = vpack.c.b16 %v1352, %v1344
    %v2273 = vpack.c.b16 %v1353, %v1345
    %v2274 = vpack.c.b16 %v1354, %v1346
    %v2275 = vpack.c.b16 %v1355, %v1347
    %v2276 = vpack.c.b16 %v1356, %v1348
    %v2277 = vpack.c.b16 %v1357, %v1349
    %v2278 = vpack.c.b16 %v1366, %v1358
    %v2279 = vpack.c.b16 %v1367, %v1359
    %v2280 = vpack.c.b16 %v1368, %v1360
    %v2281 = vpack.c.b16 %v1369, %v1361
    %v2282 = vpack.c.b16 %v1370, %v1362
    %v2283 = vpack.c.b16 %v1371, %v1363
    %v2284 = vpack.c.b16 %v1372, %v1364
    %v2285 = vpack.c.b16 %v1373, %v1365
    %v2286 = vpack.c.b16 %v1382, %v1374
    %v2287 = vpack.c.b16 %v1383, %v1375
    %v2288 = vpack.c.b16 %v1384, %v1376
    %v2289 = vpack.c.b16 %v1385, %v1377
    %v2290 = vpack.c.b16 %v1386, %v1378
    %v2291 = vpack.c.b16 %v1387, %v1379
    %v2292 = vpack.c.b16 %v1388, %v1380
    %v2293 = vpack.c.b16 %v1389, %v1381
    %v2294 = vpack.c.b16 %v1398, %v1390
    %v2295 = vpack.c.b16 %v1399, %v1391
    %v2296 = vpack.c.b16 %v1400, %v1392
    %v2297 = vpack.c.b16 %v1401, %v1393
    %v2298 = vpack.c.b16 %v1402, %v1394
    %v2299 = vpack.c.b16 %v1403, %v1395
    %v2300 = vpack.c.b16 %v1404, %v1396
    %v2301 = vpack.c.b16 %v1405, %v1397
    %v2302 = vpack.c.b16 %v1414, %v1406
    %v2303 = vpack.c.b16 %v1415, %v1407
    %v2304 = vpack.c.b16 %v1416, %v1408
    %v2305 = vpack.c.b16 %v1417, %v1409
    %v2306 = vpack.c.b16 %v1418, %v1410
    %v2307 = vpack.c.b16 %v1419, %v1411
    %v2308 = vpack.c.b16 %v1420, %v1412
    %v2309 = vpack.c.b16 %v1421, %v1413
    %v2310 = vpack.c.b16 %v1430, %v1422
    %v2311 = vpack.c.b16 %v1431, %v1423
    %v2312 = vpack.c.b16 %v1432, %v1424
    %v2313 = vpack.c.b16 %v1433, %v1425
    %v2314 = vpack.c.b16 %v1434, %v1426
    %v2315 = vpack.c.b16 %v1435, %v1427
    %v2316 = vpack.c.b16 %v1436, %v1428
    %v2317 = vpack.c.b16 %v1437, %v1429
    %v2318 = vpack.c.b16 %v1446, %v1438
    %v2319 = vpack.c.b16 %v1447, %v1439
    %v2320 = vpack.c.b16 %v1448, %v1440
    %v2321 = vpack.c.b16 %v1449, %v1441
    %v2322 = vpack.c.b16 %v1450, %v1442
    %v2323 = vpack.c.b16 %v1451, %v1443
    %v2324 = vpack.c.b16 %v1452, %v1444
    %v2325 = vpack.c.b16 %v1453, %v1445
    %v2326 = vpack.c.b16 %v1462, %v1454
    %v2327 = vpack.c.b16 %v1463, %v1455
    %v2328 = vpack.c.b16 %v1464, %v1456
    %v2329 = vpack.c.b16 %v1465, %v1457
    %v2330 = vpack.c.b16 %v1466, %v1458
    %v2331 = vpack.c.b16 %v1467, %v1459
    %v2332 = vpack.c.b16 %v1468, %v1460
    %v2333 = vpack.c.b16 %v1469, %v1461
    %v2334 = vpack.c.b16 %v1478, %v1470
    %v2335 = vpack.c.b16 %v1479, %v1471
    %v2336 = vpack.c.b16 %v1480, %v1472
    %v2337 = vpack.c.b16 %v1481, %v1473
    %v2338 = vpack.c.b16 %v1482, %v1474
    %v2339 = vpack.c.b16 %v1483, %v1475
    %v2340 = vpack.c.b16 %v1484, %v1476
    %v2341 = vpack.c.b16 %v1485, %v1477
    %v2342 = vpack.c.b16 %v1494, %v1486
    %v2343 = vpack.c.b16 %v1495, %v1487
    %v2344 = vpack.c.b16 %v1496, %v1488
    %v2345 = vpack.c.b16 %v1497, %v1489
    %v2346 = vpack.c.b16 %v1498, %v1490
    %v2347 = vpack.c.b16 %v1499, %v1491
    %v2348 = vpack.c.b16 %v1500, %v1492
    %v2349 = vpack.c.b16 %v1501, %v1493
    %v2350 = vpack.c.b16 %v1510, %v1502
    %v2351 = vpack.c.b16 %v1511, %v1503
    %v2352 = vpack.c.b16 %v1512, %v1504
    %v2353 = vpack.c.b16 %v1513, %v1505
    %v2354 = vpack.c.b16 %v1514, %v1506
    %v2355 = vpack.c.b16 %v1515, %v1507
    %v2356 = vpack.c.b16 %v1516, %v1508
    %v2357 = vpack.c.b16 %v1517, %v1509
    %v2358 = vpack.c.b16 %v1526, %v1518
    %v2359 = vpack.c.b16 %v1527, %v1519
    %v2360 = vpack.c.b16 %v1528, %v1520
    %v2361 = vpack.c.b16 %v1529, %v1521
    %v2362 = vpack.c.b16 %v1530, %v1522
    %v2363 = vpack.c.b16 %v1531, %v1523
    %v2364 = vpack.c.b16 %v1532, %v1524
    %v2365 = vpack.c.b16 %v1533, %v1525
    %v2366 = vpack.c.b16 %v1542, %v1534
    %v2367 = vpack.c.b16 %v1543, %v1535
    %v2368 = vpack.c.b16 %v1544, %v1536
    %v2369 = vpack.c.b16 %v1545, %v1537
    %v2370 = vpack.c.b16 %v1546, %v1538
    %v2371 = vpack.c.b16 %v1547, %v1539
    %v2372 = vpack.c.b16 %v1548, %v1540
    %v2373 = vpack.c.b16 %v1549, %v1541
    %v2374 = vpack.c.b16 %v1558, %v1550
    %v2375 = vpack.c.b16 %v1559, %v1551
    %v2376 = vpack.c.b16 %v1560, %v1552
    %v2377 = vpack.c.b16 %v1561, %v1553
    %v2378 = vpack.c.b16 %v1562, %v1554
    %v2379 = vpack.c.b16 %v1563, %v1555
    %v2380 = vpack.c.b16 %v1564, %v1556
    %v2381 = vpack.c.b16 %v1565, %v1557
    %v2382 = vpack.c.b16 %v1574, %v1566
    %v2383 = vpack.c.b16 %v1575, %v1567
    %v2384 = vpack.c.b16 %v1576, %v1568
    %v2385 = vpack.c.b16 %v1577, %v1569
    %v2386 = vpack.c.b16 %v1578, %v1570
    %v2387 = vpack.c.b16 %v1579, %v1571
    %v2388 = vpack.c.b16 %v1580, %v1572
    %v2389 = vpack.c.b16 %v1581, %v1573
    %v2390 = vpack.c.b16 %v1590, %v1582
    %v2391 = vpack.c.b16 %v1591, %v1583
    %v2392 = vpack.c.b16 %v1592, %v1584
    %v2393 = vpack.c.b16 %v1593, %v1585
    %v2394 = vpack.c.b16 %v1594, %v1586
    %v2395 = vpack.c.b16 %v1595, %v1587
    %v2396 = vpack.c.b16 %v1596, %v1588
    %v2397 = vpack.c.b16 %v1597, %v1589
    %v2398 = vpack.c.b16 %v1606, %v1598
    %v2399 = vpack.c.b16 %v1607, %v1599
    %v2400 = vpack.c.b16 %v1608, %v1600
    %v2401 = vpack.c.b16 %v1609, %v1601
    %v2402 = vpack.c.b16 %v1610, %v1602
    %v2403 = vpack.c.b16 %v1611, %v1603
    %v2404 = vpack.c.b16 %v1612, %v1604
    %v2405 = vpack.c.b16 %v1613, %v1605
    %v2406 = vpack.c.b16 %v1622, %v1614
    %v2407 = vpack.c.b16 %v1623, %v1615
    %v2408 = vpack.c.b16 %v1624, %v1616
    %v2409 = vpack.c.b16 %v1625, %v1617
    %v2410 = vpack.c.b16 %v1626, %v1618
    %v2411 = vpack.c.b16 %v1627, %v1619
    %v2412 = vpack.c.b16 %v1628, %v1620
    %v2413 = vpack.c.b16 %v1629, %v1621
    %v2414 = vpack.c.b16 %v1638, %v1630
    %v2415 = vpack.c.b16 %v1639, %v1631
    %v2416 = vpack.c.b16 %v1640, %v1632
    %v2417 = vpack.c.b16 %v1641, %v1633
    %v2418 = vpack.c.b16 %v1642, %v1634
    %v2419 = vpack.c.b16 %v1643, %v1635
    %v2420 = vpack.c.b16 %v1644, %v1636
    %v2421 = vpack.c.b16 %v1645, %v1637
    %v2422 = vpack.c.b16 %v1654, %v1646
    %v2423 = vpack.c.b16 %v1655, %v1647
    %v2424 = vpack.c.b16 %v1656, %v1648
    %v2425 = vpack.c.b16 %v1657, %v1649
    %v2426 = vpack.c.b16 %v1658, %v1650
    %v2427 = vpack.c.b16 %v1659, %v1651
    %v2428 = vpack.c.b16 %v1660, %v1652
    %v2429 = vpack.c.b16 %v1661, %v1653
    %v2430 = vpack.c.b16 %v1670, %v1662
    %v2431 = vpack.c.b16 %v1671, %v1663
    %v2432 = vpack.c.b16 %v1672, %v1664
    %v2433 = vpack.c.b16 %v1673, %v1665
    %v2434 = vpack.c.b16 %v1674, %v1666
    %v2435 = vpack.c.b16 %v1675, %v1667
    %v2436 = vpack.c.b16 %v1676, %v1668
    %v2437 = vpack.c.b16 %v1677, %v1669
    %v2438 = vpack.c.b16 %v1686, %v1678
    %v2439 = vpack.c.b16 %v1687, %v1679
    %v2440 = vpack.c.b16 %v1688, %v1680
    %v2441 = vpack.c.b16 %v1689, %v1681
    %v2442 = vpack.c.b16 %v1690, %v1682
    %v2443 = vpack.c.b16 %v1691, %v1683
    %v2444 = vpack.c.b16 %v1692, %v1684
    %v2445 = vpack.c.b16 %v1693, %v1685
    %v2446 = vpack.c.b16 %v1702, %v1694
    %v2447 = vpack.c.b16 %v1703, %v1695
    %v2448 = vpack.c.b16 %v1704, %v1696
    %v2449 = vpack.c.b16 %v1705, %v1697
    %v2450 = vpack.c.b16 %v1706, %v1698
    %v2451 = vpack.c.b16 %v1707, %v1699
    %v2452 = vpack.c.b16 %v1708, %v1700
    %v2453 = vpack.c.b16 %v1709, %v1701
    %v2454 = vpack.c.b16 %v1718, %v1710
    %v2455 = vpack.c.b16 %v1719, %v1711
    %v2456 = vpack.c.b16 %v1720, %v1712
    %v2457 = vpack.c.b16 %v1721, %v1713
    %v2458 = vpack.c.b16 %v1722, %v1714
    %v2459 = vpack.c.b16 %v1723, %v1715
    %v2460 = vpack.c.b16 %v1724, %v1716
    %v2461 = vpack.c.b16 %v1725, %v1717
    %v2462 = vpack.c.b16 %v1734, %v1726
    %v2463 = vpack.c.b16 %v1735, %v1727
    %v2464 = vpack.c.b16 %v1736, %v1728
    %v2465 = vpack.c.b16 %v1737, %v1729
    %v2466 = vpack.c.b16 %v1738, %v1730
    %v2467 = vpack.c.b16 %v1739, %v1731
    %v2468 = vpack.c.b16 %v1740, %v1732
    %v2469 = vpack.c.b16 %v1741, %v1733
    %v2470 = vpack.c.b16 %v1750, %v1742
    %v2471 = vpack.c.b16 %v1751, %v1743
    %v2472 = vpack.c.b16 %v1752, %v1744
    %v2473 = vpack.c.b16 %v1753, %v1745
    %v2474 = vpack.c.b16 %v1754, %v1746
    %v2475 = vpack.c.b16 %v1755, %v1747
    %v2476 = vpack.c.b16 %v1756, %v1748
    %v2477 = vpack.c.b16 %v1757, %v1749
    %v2478 = vpack.c.b16 %v1766, %v1758
    %v2479 = vpack.c.b16 %v1767, %v1759
    %v2480 = vpack.c.b16 %v1768, %v1760
    %v2481 = vpack.c.b16 %v1769, %v1761
    %v2482 = vpack.c.b16 %v1770, %v1762
    %v2483 = vpack.c.b16 %v1771, %v1763
    %v2484 = vpack.c.b16 %v1772, %v1764
    %v2485 = vpack.c.b16 %v1773, %v1765
    %v2486 = vpack.c.b16 %v1782, %v1774
    %v2487 = vpack.c.b16 %v1783, %v1775
    %v2488 = vpack.c.b16 %v1784, %v1776
    %v2489 = vpack.c.b16 %v1785, %v1777
    %v2490 = vpack.c.b16 %v1786, %v1778
    %v2491 = vpack.c.b16 %v1787, %v1779
    %v2492 = vpack.c.b16 %v1788, %v1780
    %v2493 = vpack.c.b16 %v1789, %v1781
    %v2494 = vpack.c.b16 %v1798, %v1790
    %v2495 = vpack.c.b16 %v1799, %v1791
    %v2496 = vpack.c.b16 %v1800, %v1792
    %v2497 = vpack.c.b16 %v1801, %v1793
    %v2498 = vpack.c.b16 %v1802, %v1794
    %v2499 = vpack.c.b16 %v1803, %v1795
    %v2500 = vpack.c.b16 %v1804, %v1796
    %v2501 = vpack.c.b16 %v1805, %v1797
    %v2502 = vpack.c.b16 %v1814, %v1806
    %v2503 = vpack.c.b16 %v1815, %v1807
    %v2504 = vpack.c.b16 %v1816, %v1808
    %v2505 = vpack.c.b16 %v1817, %v1809
    %v2506 = vpack.c.b16 %v1818, %v1810
    %v2507 = vpack.c.b16 %v1819, %v1811
    %v2508 = vpack.c.b16 %v1820, %v1812
    %v2509 = vpack.c.b16 %v1821, %v1813
    %v2510 = vpack.c.b16 %v1830, %v1822
    %v2511 = vpack.c.b16 %v1831, %v1823
    %v2512 = vpack.c.b16 %v1832, %v1824
    %v2513 = vpack.c.b16 %v1833, %v1825
    %v2514 = vpack.c.b16 %v1834, %v1826
    %v2515 = vpack.c.b16 %v1835, %v1827
    %v2516 = vpack.c.b16 %v1836, %v1828
    %v2517 = vpack.c.b16 %v1837, %v1829
    %v2518 = vpack.c.b16 %v1846, %v1838
    %v2519 = vpack.c.b16 %v1847, %v1839
    %v2520 = vpack.c.b16 %v1848, %v1840
    %v2521 = vpack.c.b16 %v1849, %v1841
    %v2522 = vpack.c.b16 %v1850, %v1842
    %v2523 = vpack.c.b16 %v1851, %v1843
    %v2524 = vpack.c.b16 %v1852, %v1844
    %v2525 = vpack.c.b16 %v1853, %v1845
    %v2526 = vpack.c.b16 %v1862, %v1854
    %v2527 = vpack.c.b16 %v1863, %v1855
    %v2528 = vpack.c.b16 %v1864, %v1856
    %v2529 = vpack.c.b16 %v1865, %v1857
    %v2530 = vpack.c.b16 %v1866, %v1858
    %v2531 = vpack.c.b16 %v1867, %v1859
    %v2532 = vpack.c.b16 %v1868, %v1860
    %v2533 = vpack.c.b16 %v1869, %v1861
    %v2534 = vpack.c.b16 %v1878, %v1870
    %v2535 = vpack.c.b16 %v1879, %v1871
    %v2536 = vpack.c.b16 %v1880, %v1872
    %v2537 = vpack.c.b16 %v1881, %v1873
    %v2538 = vpack.c.b16 %v1882, %v1874
    %v2539 = vpack.c.b16 %v1883, %v1875
    %v2540 = vpack.c.b16 %v1884, %v1876
    %v2541 = vpack.c.b16 %v1885, %v1877
    %v2542 = vpack.c.b16 %v1894, %v1886
    %v2543 = vpack.c.b16 %v1895, %v1887
    %v2544 = vpack.c.b16 %v1896, %v1888
    %v2545 = vpack.c.b16 %v1897, %v1889
    %v2546 = vpack.c.b16 %v1898, %v1890
    %v2547 = vpack.c.b16 %v1899, %v1891
    %v2548 = vpack.c.b16 %v1900, %v1892
    %v2549 = vpack.c.b16 %v1901, %v1893
    %v2550 = vpack.c.b16 %v1910, %v1902
    %v2551 = vpack.c.b16 %v1911, %v1903
    %v2552 = vpack.c.b16 %v1912, %v1904
    %v2553 = vpack.c.b16 %v1913, %v1905
    %v2554 = vpack.c.b16 %v1914, %v1906
    %v2555 = vpack.c.b16 %v1915, %v1907
    %v2556 = vpack.c.b16 %v1916, %v1908
    %v2557 = vpack.c.b16 %v1917, %v1909
    %v2558 = vpack.c.b16 %v1926, %v1918
    %v2559 = vpack.c.b16 %v1927, %v1919
    %v2560 = vpack.c.b16 %v1928, %v1920
    %v2561 = vpack.c.b16 %v1929, %v1921
    %v2562 = vpack.c.b16 %v1930, %v1922
    %v2563 = vpack.c.b16 %v1931, %v1923
    %v2564 = vpack.c.b16 %v1932, %v1924
    %v2565 = vpack.c.b16 %v1933, %v1925
    %v2566 = vpack.c.b16 %v1942, %v1934
    %v2567 = vpack.c.b16 %v1943, %v1935
    %v2568 = vpack.c.b16 %v1944, %v1936
    %v2569 = vpack.c.b16 %v1945, %v1937
    %v2570 = vpack.c.b16 %v1946, %v1938
    %v2571 = vpack.c.b16 %v1947, %v1939
    %v2572 = vpack.c.b16 %v1948, %v1940
    %v2573 = vpack.c.b16 %v1949, %v1941
    %v2574 = vpack.c.b16 %v1958, %v1950
    %v2575 = vpack.c.b16 %v1959, %v1951
    %v2576 = vpack.c.b16 %v1960, %v1952
    %v2577 = vpack.c.b16 %v1961, %v1953
    %v2578 = vpack.c.b16 %v1962, %v1954
    %v2579 = vpack.c.b16 %v1963, %v1955
    %v2580 = vpack.c.b16 %v1964, %v1956
    %v2581 = vpack.c.b16 %v1965, %v1957
    %v2582 = vpack.c.b16 %v1974, %v1966
    %v2583 = vpack.c.b16 %v1975, %v1967
    %v2584 = vpack.c.b16 %v1976, %v1968
    %v2585 = vpack.c.b16 %v1977, %v1969
    %v2586 = vpack.c.b16 %v1978, %v1970
    %v2587 = vpack.c.b16 %v1979, %v1971
    %v2588 = vpack.c.b16 %v1980, %v1972
    %v2589 = vpack.c.b16 %v1981, %v1973
    %v2590 = vpack.c.b16 %v1990, %v1982
    %v2591 = vpack.c.b16 %v1991, %v1983
    %v2592 = vpack.c.b16 %v1992, %v1984
    %v2593 = vpack.c.b16 %v1993, %v1985
    %v2594 = vpack.c.b16 %v1994, %v1986
    %v2595 = vpack.c.b16 %v1995, %v1987
    %v2596 = vpack.c.b16 %v1996, %v1988
    %v2597 = vpack.c.b16 %v1997, %v1989
    %v2598 = vpack.c.b16 %v2006, %v1998
    %v2599 = vpack.c.b16 %v2007, %v1999
    %v2600 = vpack.c.b16 %v2008, %v2000
    %v2601 = vpack.c.b16 %v2009, %v2001
    %v2602 = vpack.c.b16 %v2010, %v2002
    %v2603 = vpack.c.b16 %v2011, %v2003
    %v2604 = vpack.c.b16 %v2012, %v2004
    %v2605 = vpack.c.b16 %v2013, %v2005
    %v2606 = vpack.c.b16 %v2022, %v2014
    %v2607 = vpack.c.b16 %v2023, %v2015
    %v2608 = vpack.c.b16 %v2024, %v2016
    %v2609 = vpack.c.b16 %v2025, %v2017
    %v2610 = vpack.c.b16 %v2026, %v2018
    %v2611 = vpack.c.b16 %v2027, %v2019
    %v2612 = vpack.c.b16 %v2028, %v2020
    %v2613 = vpack.c.b16 %v2029, %v2021
    %v2614 = vpack.c.b16 %v2038, %v2030
    %v2615 = vpack.c.b16 %v2039, %v2031
    %v2616 = vpack.c.b16 %v2040, %v2032
    %v2617 = vpack.c.b16 %v2041, %v2033
    %v2618 = vpack.c.b16 %v2042, %v2034
    %v2619 = vpack.c.b16 %v2043, %v2035
    %v2620 = vpack.c.b16 %v2044, %v2036
    %v2621 = vpack.c.b16 %v2045, %v2037
    %v2622 = vpack.c.b16 %v2054, %v2046
    %v2623 = vpack.c.b16 %v2055, %v2047
    %v2624 = vpack.c.b16 %v2056, %v2048
    %v2625 = vpack.c.b16 %v2057, %v2049
    %v2626 = vpack.c.b16 %v2058, %v2050
    %v2627 = vpack.c.b16 %v2059, %v2051
    %v2628 = vpack.c.b16 %v2060, %v2052
    %v2629 = vpack.c.b16 %v2061, %v2053
    %v2630 = vpack.c.b16 %v2070, %v2062
    %v2631 = vpack.c.b16 %v2071, %v2063
    %v2632 = vpack.c.b16 %v2072, %v2064
    %v2633 = vpack.c.b16 %v2073, %v2065
    %v2634 = vpack.c.b16 %v2074, %v2066
    %v2635 = vpack.c.b16 %v2075, %v2067
    %v2636 = vpack.c.b16 %v2076, %v2068
    %v2637 = vpack.c.b16 %v2077, %v2069
    %v2638 = vpack.c.b16 %v2086, %v2078
    %v2639 = vpack.c.b16 %v2087, %v2079
    %v2640 = vpack.c.b16 %v2088, %v2080
    %v2641 = vpack.c.b16 %v2089, %v2081
    %v2642 = vpack.c.b16 %v2090, %v2082
    %v2643 = vpack.c.b16 %v2091, %v2083
    %v2644 = vpack.c.b16 %v2092, %v2084
    %v2645 = vpack.c.b16 %v2093, %v2085
    %v2646 = vpack.c.b16 %v2102, %v2094
    %v2647 = vpack.c.b16 %v2103, %v2095
    %v2648 = vpack.c.b16 %v2104, %v2096
    %v2649 = vpack.c.b16 %v2105, %v2097
    %v2650 = vpack.c.b16 %v2106, %v2098
    %v2651 = vpack.c.b16 %v2107, %v2099
    %v2652 = vpack.c.b16 %v2108, %v2100
    %v2653 = vpack.c.b16 %v2109, %v2101
    %v2654 = vpack.c.b16 %v2118, %v2110
    %v2655 = vpack.c.b16 %v2119, %v2111
    %v2656 = vpack.c.b16 %v2120, %v2112
    %v2657 = vpack.c.b16 %v2121, %v2113
    %v2658 = vpack.c.b16 %v2122, %v2114
    %v2659 = vpack.c.b16 %v2123, %v2115
    %v2660 = vpack.c.b16 %v2124, %v2116
    %v2661 = vpack.c.b16 %v2125, %v2117
    %v2662 = vpack.c.b16 %v2134, %v2126
    %v2663 = vpack.c.b16 %v2135, %v2127
    %v2664 = vpack.c.b16 %v2136, %v2128
    %v2665 = vpack.c.b16 %v2137, %v2129
    %v2666 = vpack.c.b16 %v2138, %v2130
    %v2667 = vpack.c.b16 %v2139, %v2131
    %v2668 = vpack.c.b16 %v2140, %v2132
    %v2669 = vpack.c.b16 %v2141, %v2133
    %v2670 = vpack.c.b16 %v2150, %v2142
    %v2671 = vpack.c.b16 %v2151, %v2143
    %v2672 = vpack.c.b16 %v2152, %v2144
    %v2673 = vpack.c.b16 %v2153, %v2145
    %v2674 = vpack.c.b16 %v2154, %v2146
    %v2675 = vpack.c.b16 %v2155, %v2147
    %v2676 = vpack.c.b16 %v2156, %v2148
    %v2677 = vpack.c.b16 %v2157, %v2149
    %v2678 = vpack.c.b16 %v2166, %v2158
    %v2679 = vpack.c.b16 %v2167, %v2159
    %v2680 = vpack.c.b16 %v2168, %v2160
    %v2681 = vpack.c.b16 %v2169, %v2161
    %v2682 = vpack.c.b16 %v2170, %v2162
    %v2683 = vpack.c.b16 %v2171, %v2163
    %v2684 = vpack.c.b16 %v2172, %v2164
    %v2685 = vpack.c.b16 %v2173, %v2165
    %3198 = vmatprep.subr.bf16.mxu0 %v2231
    %3199 = vmatpush1.bf16.msra.mxu0 %v2230
    %3200 = vmatprep.subr.bf16.mxu0 %v2223
    %3201 = vmatpush1.bf16.msra.mxu0 %v2222
    %3202 = vmatprep.subr.bf16.mxu0 %v2215
    %3203 = vmatpush1.bf16.msra.mxu0 %v2214
    %3204 = vmatprep.subr.bf16.mxu0 %v2207
    %3205 = vmatpush1.bf16.msra.mxu0 %v2206
    %3206 = vmatprep.subr.bf16.mxu0 %v2199
    %3207 = vmatpush1.bf16.msra.mxu0 %v2198
    %3208 = vmatprep.subr.bf16.mxu0 %v2191
    %3209 = vmatpush1.bf16.msra.mxu0 %v2190
    %3210 = vmatprep.subr.bf16.mxu0 %v2183
    %3211 = vmatpush1.bf16.msra.mxu0 %v2182
    %3212 = vmatprep.subr.bf16.mxu0 %v2175
    %3213 = vmatpush1.bf16.msra.mxu0 %v2174
    %3214 = vmatprep.subr.bf16.mxu0 %v2295
    %3215 = vmatpush2.bf16.msra.mxu0 %v2294
    %3216 = vmatprep.subr.bf16.mxu0 %v2287
    %3217 = vmatpush2.bf16.msra.mxu0 %v2286
    %3218 = vmatprep.subr.bf16.mxu0 %v2279
    %3219 = vmatpush2.bf16.msra.mxu0 %v2278
    %3220 = vmatprep.subr.bf16.mxu0 %v2271
    %3221 = vmatpush2.bf16.msra.mxu0 %v2270
    %3222 = vmatprep.subr.bf16.mxu0 %v2263
    %3223 = vmatpush2.bf16.msra.mxu0 %v2262
    %3224 = vmatprep.subr.bf16.mxu0 %v2255
    %3225 = vmatpush2.bf16.msra.mxu0 %v2254
    %3226 = vmatprep.subr.bf16.mxu0 %v2247
    %3227 = vmatpush2.bf16.msra.mxu0 %v2246
    %3228 = vmatprep.subr.bf16.mxu0 %v2239
    %3229 = vmatpush2.bf16.msra.mxu0 %v2238
    %3230 = vmatprep.mubr.bf16.mxu0 %v618
    %3231 = vmatmul.mubr.bf16.gmra.mxu0 %v604
    %v3232 = vpop.f32.mrf.mxu0
    %v3233 = vadd.f32 0.0, %v3232
    %v3234 = vpop.f32.mrf.mxu0
    %v3235 = vadd.f32 0.0, %v3234
    %v3236 = vpop.f32.mrf.mxu0
    %v3237 = vpop.f32.mrf.mxu0
    %3238 = vdwg.mxu0
    %3239 = vmatprep.subr.bf16.mxu0 %v2359
    %3240 = vmatpush1.bf16.msra.mxu0 %v2358
    %3241 = vmatprep.subr.bf16.mxu0 %v2351
    %3242 = vmatpush1.bf16.msra.mxu0 %v2350
    %3243 = vmatprep.subr.bf16.mxu0 %v2343
    %3244 = vmatpush1.bf16.msra.mxu0 %v2342
    %3245 = vmatprep.subr.bf16.mxu0 %v2335
    %3246 = vmatpush1.bf16.msra.mxu0 %v2334
    %3247 = vmatprep.subr.bf16.mxu0 %v2327
    %3248 = vmatpush1.bf16.msra.mxu0 %v2326
    %3249 = vmatprep.subr.bf16.mxu0 %v2319
    %3250 = vmatpush1.bf16.msra.mxu0 %v2318
    %3251 = vmatprep.subr.bf16.mxu0 %v2311
    %3252 = vmatpush1.bf16.msra.mxu0 %v2310
    %3253 = vmatprep.subr.bf16.mxu0 %v2303
    %3254 = vmatpush1.bf16.msra.mxu0 %v2302
    %3255 = vmatprep.subr.bf16.mxu0 %v2423
    %3256 = vmatpush2.bf16.msra.mxu0 %v2422
    %3257 = vmatprep.subr.bf16.mxu0 %v2415
    %3258 = vmatpush2.bf16.msra.mxu0 %v2414
    %3259 = vmatprep.subr.bf16.mxu0 %v2407
    %3260 = vmatpush2.bf16.msra.mxu0 %v2406
    %3261 = vmatprep.subr.bf16.mxu0 %v2399
    %3262 = vmatpush2.bf16.msra.mxu0 %v2398
    %3263 = vmatprep.subr.bf16.mxu0 %v2391
    %3264 = vmatpush2.bf16.msra.mxu0 %v2390
    %3265 = vmatprep.subr.bf16.mxu0 %v2383
    %3266 = vmatpush2.bf16.msra.mxu0 %v2382
    %3267 = vmatprep.subr.bf16.mxu0 %v2375
    %3268 = vmatpush2.bf16.msra.mxu0 %v2374
    %3269 = vmatprep.subr.bf16.mxu0 %v2367
    %3270 = vmatpush2.bf16.msra.mxu0 %v2366
    %3271 = vmatprep.mubr.bf16.mxu0 %v628
    %3272 = vmatmul.mubr.bf16.gmra.mxu0 %v626
    %v3273 = vpop.f32.mrf.mxu0
    %v3274 = vadd.f32 %v3233, %v3273
    %v3275 = vpop.f32.mrf.mxu0
    %v3276 = vadd.f32 %v3235, %v3275
    %v3277 = vpop.f32.mrf.mxu0
    %v3278 = vpop.f32.mrf.mxu0
    %3279 = vdwg.mxu0
    %3280 = vmatprep.subr.bf16.mxu0 %v2487
    %3281 = vmatpush1.bf16.msra.mxu0 %v2486
    %3282 = vmatprep.subr.bf16.mxu0 %v2479
    %3283 = vmatpush1.bf16.msra.mxu0 %v2478
    %3284 = vmatprep.subr.bf16.mxu0 %v2471
    %3285 = vmatpush1.bf16.msra.mxu0 %v2470
    %3286 = vmatprep.subr.bf16.mxu0 %v2463
    %3287 = vmatpush1.bf16.msra.mxu0 %v2462
    %3288 = vmatprep.subr.bf16.mxu0 %v2455
    %3289 = vmatpush1.bf16.msra.mxu0 %v2454
    %3290 = vmatprep.subr.bf16.mxu0 %v2447
    %3291 = vmatpush1.bf16.msra.mxu0 %v2446
    %3292 = vmatprep.subr.bf16.mxu0 %v2439
    %3293 = vmatpush1.bf16.msra.mxu0 %v2438
    %3294 = vmatprep.subr.bf16.mxu0 %v2431
    %3295 = vmatpush1.bf16.msra.mxu0 %v2430
    %3296 = vmatprep.subr.bf16.mxu0 %v2551
    %3297 = vmatpush2.bf16.msra.mxu0 %v2550
    %3298 = vmatprep.subr.bf16.mxu0 %v2543
    %3299 = vmatpush2.bf16.msra.mxu0 %v2542
    %3300 = vmatprep.subr.bf16.mxu0 %v2535
    %3301 = vmatpush2.bf16.msra.mxu0 %v2534
    %3302 = vmatprep.subr.bf16.mxu0 %v2527
    %3303 = vmatpush2.bf16.msra.mxu0 %v2526
    %3304 = vmatprep.subr.bf16.mxu0 %v2519
    %3305 = vmatpush2.bf16.msra.mxu0 %v2518
    %3306 = vmatprep.subr.bf16.mxu0 %v2511
    %3307 = vmatpush2.bf16.msra.mxu0 %v2510
    %3308 = vmatprep.subr.bf16.mxu0 %v2503
    %3309 = vmatpush2.bf16.msra.mxu0 %v2502
    %3310 = vmatprep.subr.bf16.mxu0 %v2495
    %3311 = vmatpush2.bf16.msra.mxu0 %v2494
    %3312 = vmatprep.mubr.bf16.mxu0 %v625
    %3313 = vmatmul.mubr.bf16.gmra.mxu0 %v611
    %v3314 = vpop.f32.mrf.mxu0
    %v3315 = vadd.f32 %v3274, %v3314
    %v3316 = vpop.f32.mrf.mxu0
    %v3317 = vadd.f32 %v3276, %v3316
    %v3318 = vpop.f32.mrf.mxu0
    %v3319 = vpop.f32.mrf.mxu0
    %3320 = vdwg.mxu0
    %3321 = vmatprep.subr.bf16.mxu0 %v2615
    %3322 = vmatpush1.bf16.msra.mxu0 %v2614
    %3323 = vmatprep.subr.bf16.mxu0 %v2607
    %3324 = vmatpush1.bf16.msra.mxu0 %v2606
    %3325 = vmatprep.subr.bf16.mxu0 %v2599
    %3326 = vmatpush1.bf16.msra.mxu0 %v2598
    %3327 = vmatprep.subr.bf16.mxu0 %v2591
    %3328 = vmatpush1.bf16.msra.mxu0 %v2590
    %3329 = vmatprep.subr.bf16.mxu0 %v2583
    %3330 = vmatpush1.bf16.msra.mxu0 %v2582
    %3331 = vmatprep.subr.bf16.mxu0 %v2575
    %3332 = vmatpush1.bf16.msra.mxu0 %v2574
    %3333 = vmatprep.subr.bf16.mxu0 %v2567
    %3334 = vmatpush1.bf16.msra.mxu0 %v2566
    %3335 = vmatprep.subr.bf16.mxu0 %v2559
    %3336 = vmatpush1.bf16.msra.mxu0 %v2558
    %3337 = vmatprep.subr.bf16.mxu0 %v2679
    %3338 = vmatpush2.bf16.msra.mxu0 %v2678
    %3339 = vmatprep.subr.bf16.mxu0 %v2671
    %3340 = vmatpush2.bf16.msra.mxu0 %v2670
    %3341 = vmatprep.subr.bf16.mxu0 %v2663
    %3342 = vmatpush2.bf16.msra.mxu0 %v2662
    %3343 = vmatprep.subr.bf16.mxu0 %v2655
    %3344 = vmatpush2.bf16.msra.mxu0 %v2654
    %3345 = vmatprep.subr.bf16.mxu0 %v2647
    %3346 = vmatpush2.bf16.msra.mxu0 %v2646
    %3347 = vmatprep.subr.bf16.mxu0 %v2639
    %3348 = vmatpush2.bf16.msra.mxu0 %v2638
    %3349 = vmatprep.subr.bf16.mxu0 %v2631
    %3350 = vmatpush2.bf16.msra.mxu0 %v2630
    %3351 = vmatprep.subr.bf16.mxu0 %v2623
    %3352 = vmatpush2.bf16.msra.mxu0 %v2622
    %3353 = vmatprep.mubr.bf16.mxu0 %v629
    %3354 = vmatmul.mubr.bf16.gmra.mxu0 %v627
    %v3355 = vpop.f32.mrf.mxu0
    %v3356 = vadd.f32 %v3315, %v3355
    %v3357 = vpop.f32.mrf.mxu0
    %v3358 = vadd.f32 %v3317, %v3357
    %v3359 = vpop.f32.mrf.mxu0
    %v3360 = vpop.f32.mrf.mxu0
    %3361 = vdwg.mxu0
    %3362 = vmatprep.subr.bf16.mxu0 %v2233
    %3363 = vmatpush1.bf16.msra.mxu0 %v2232
    %3364 = vmatprep.subr.bf16.mxu0 %v2225
    %3365 = vmatpush1.bf16.msra.mxu0 %v2224
    %3366 = vmatprep.subr.bf16.mxu0 %v2217
    %3367 = vmatpush1.bf16.msra.mxu0 %v2216
    %3368 = vmatprep.subr.bf16.mxu0 %v2209
    %3369 = vmatpush1.bf16.msra.mxu0 %v2208
    %3370 = vmatprep.subr.bf16.mxu0 %v2201
    %3371 = vmatpush1.bf16.msra.mxu0 %v2200
    %3372 = vmatprep.subr.bf16.mxu0 %v2193
    %3373 = vmatpush1.bf16.msra.mxu0 %v2192
    %3374 = vmatprep.subr.bf16.mxu0 %v2185
    %3375 = vmatpush1.bf16.msra.mxu0 %v2184
    %3376 = vmatprep.subr.bf16.mxu0 %v2177
    %3377 = vmatpush1.bf16.msra.mxu0 %v2176
    %3378 = vmatprep.subr.bf16.mxu0 %v2297
    %3379 = vmatpush2.bf16.msra.mxu0 %v2296
    %3380 = vmatprep.subr.bf16.mxu0 %v2289
    %3381 = vmatpush2.bf16.msra.mxu0 %v2288
    %3382 = vmatprep.subr.bf16.mxu0 %v2281
    %3383 = vmatpush2.bf16.msra.mxu0 %v2280
    %3384 = vmatprep.subr.bf16.mxu0 %v2273
    %3385 = vmatpush2.bf16.msra.mxu0 %v2272
    %3386 = vmatprep.subr.bf16.mxu0 %v2265
    %3387 = vmatpush2.bf16.msra.mxu0 %v2264
    %3388 = vmatprep.subr.bf16.mxu0 %v2257
    %3389 = vmatpush2.bf16.msra.mxu0 %v2256
    %3390 = vmatprep.subr.bf16.mxu0 %v2249
    %3391 = vmatpush2.bf16.msra.mxu0 %v2248
    %3392 = vmatprep.subr.bf16.mxu0 %v2241
    %3393 = vmatpush2.bf16.msra.mxu0 %v2240
    %3394 = vmatprep.mubr.bf16.mxu0 %v618
    %3395 = vmatmul.mubr.bf16.gmra.mxu0 %v604
    %v3396 = vpop.f32.mrf.mxu0
    %v3397 = vadd.f32 0.0, %v3396
    %v3398 = vpop.f32.mrf.mxu0
    %v3399 = vadd.f32 0.0, %v3398
    %v3400 = vpop.f32.mrf.mxu0
    %v3401 = vpop.f32.mrf.mxu0
    %3402 = vdwg.mxu0
    %3403 = vmatprep.subr.bf16.mxu0 %v2361
    %3404 = vmatpush1.bf16.msra.mxu0 %v2360
    %3405 = vmatprep.subr.bf16.mxu0 %v2353
    %3406 = vmatpush1.bf16.msra.mxu0 %v2352
    %3407 = vmatprep.subr.bf16.mxu0 %v2345
    %3408 = vmatpush1.bf16.msra.mxu0 %v2344
    %3409 = vmatprep.subr.bf16.mxu0 %v2337
    %3410 = vmatpush1.bf16.msra.mxu0 %v2336
    %3411 = vmatprep.subr.bf16.mxu0 %v2329
    %3412 = vmatpush1.bf16.msra.mxu0 %v2328
    %3413 = vmatprep.subr.bf16.mxu0 %v2321
    %3414 = vmatpush1.bf16.msra.mxu0 %v2320
    %3415 = vmatprep.subr.bf16.mxu0 %v2313
    %3416 = vmatpush1.bf16.msra.mxu0 %v2312
    %3417 = vmatprep.subr.bf16.mxu0 %v2305
    %3418 = vmatpush1.bf16.msra.mxu0 %v2304
    %3419 = vmatprep.subr.bf16.mxu0 %v2425
    %3420 = vmatpush2.bf16.msra.mxu0 %v2424
    %3421 = vmatprep.subr.bf16.mxu0 %v2417
    %3422 = vmatpush2.bf16.msra.mxu0 %v2416
    %3423 = vmatprep.subr.bf16.mxu0 %v2409
    %3424 = vmatpush2.bf16.msra.mxu0 %v2408
    %3425 = vmatprep.subr.bf16.mxu0 %v2401
    %3426 = vmatpush2.bf16.msra.mxu0 %v2400
    %3427 = vmatprep.subr.bf16.mxu0 %v2393
    %3428 = vmatpush2.bf16.msra.mxu0 %v2392
    %3429 = vmatprep.subr.bf16.mxu0 %v2385
    %3430 = vmatpush2.bf16.msra.mxu0 %v2384
    %3431 = vmatprep.subr.bf16.mxu0 %v2377
    %3432 = vmatpush2.bf16.msra.mxu0 %v2376
    %3433 = vmatprep.subr.bf16.mxu0 %v2369
    %3434 = vmatpush2.bf16.msra.mxu0 %v2368
    %3435 = vmatprep.mubr.bf16.mxu0 %v628
    %3436 = vmatmul.mubr.bf16.gmra.mxu0 %v626
    %v3437 = vpop.f32.mrf.mxu0
    %v3438 = vadd.f32 %v3397, %v3437
    %v3439 = vpop.f32.mrf.mxu0
    %v3440 = vadd.f32 %v3399, %v3439
    %v3441 = vpop.f32.mrf.mxu0
    %v3442 = vpop.f32.mrf.mxu0
    %3443 = vdwg.mxu0
    %3444 = vmatprep.subr.bf16.mxu0 %v2489
    %3445 = vmatpush1.bf16.msra.mxu0 %v2488
    %3446 = vmatprep.subr.bf16.mxu0 %v2481
    %3447 = vmatpush1.bf16.msra.mxu0 %v2480
    %3448 = vmatprep.subr.bf16.mxu0 %v2473
    %3449 = vmatpush1.bf16.msra.mxu0 %v2472
    %3450 = vmatprep.subr.bf16.mxu0 %v2465
    %3451 = vmatpush1.bf16.msra.mxu0 %v2464
    %3452 = vmatprep.subr.bf16.mxu0 %v2457
    %3453 = vmatpush1.bf16.msra.mxu0 %v2456
    %3454 = vmatprep.subr.bf16.mxu0 %v2449
    %3455 = vmatpush1.bf16.msra.mxu0 %v2448
    %3456 = vmatprep.subr.bf16.mxu0 %v2441
    %3457 = vmatpush1.bf16.msra.mxu0 %v2440
    %3458 = vmatprep.subr.bf16.mxu0 %v2433
    %3459 = vmatpush1.bf16.msra.mxu0 %v2432
    %3460 = vmatprep.subr.bf16.mxu0 %v2553
    %3461 = vmatpush2.bf16.msra.mxu0 %v2552
    %3462 = vmatprep.subr.bf16.mxu0 %v2545
    %3463 = vmatpush2.bf16.msra.mxu0 %v2544
    %3464 = vmatprep.subr.bf16.mxu0 %v2537
    %3465 = vmatpush2.bf16.msra.mxu0 %v2536
    %3466 = vmatprep.subr.bf16.mxu0 %v2529
    %3467 = vmatpush2.bf16.msra.mxu0 %v2528
    %3468 = vmatprep.subr.bf16.mxu0 %v2521
    %3469 = vmatpush2.bf16.msra.mxu0 %v2520
    %3470 = vmatprep.subr.bf16.mxu0 %v2513
    %3471 = vmatpush2.bf16.msra.mxu0 %v2512
    %3472 = vmatprep.subr.bf16.mxu0 %v2505
    %3473 = vmatpush2.bf16.msra.mxu0 %v2504
    %3474 = vmatprep.subr.bf16.mxu0 %v2497
    %3475 = vmatpush2.bf16.msra.mxu0 %v2496
    %3476 = vmatprep.mubr.bf16.mxu0 %v625
    %3477 = vmatmul.mubr.bf16.gmra.mxu0 %v611
    %v3478 = vpop.f32.mrf.mxu0
    %v3479 = vadd.f32 %v3438, %v3478
    %v3480 = vpop.f32.mrf.mxu0
    %v3481 = vadd.f32 %v3440, %v3480
    %v3482 = vpop.f32.mrf.mxu0
    %v3483 = vpop.f32.mrf.mxu0
    %3484 = vdwg.mxu0
    %3485 = vmatprep.subr.bf16.mxu0 %v2617
    %3486 = vmatpush1.bf16.msra.mxu0 %v2616
    %3487 = vmatprep.subr.bf16.mxu0 %v2609
    %3488 = vmatpush1.bf16.msra.mxu0 %v2608
    %3489 = vmatprep.subr.bf16.mxu0 %v2601
    %3490 = vmatpush1.bf16.msra.mxu0 %v2600
    %3491 = vmatprep.subr.bf16.mxu0 %v2593
    %3492 = vmatpush1.bf16.msra.mxu0 %v2592
    %3493 = vmatprep.subr.bf16.mxu0 %v2585
    %3494 = vmatpush1.bf16.msra.mxu0 %v2584
    %3495 = vmatprep.subr.bf16.mxu0 %v2577
    %3496 = vmatpush1.bf16.msra.mxu0 %v2576
    %3497 = vmatprep.subr.bf16.mxu0 %v2569
    %3498 = vmatpush1.bf16.msra.mxu0 %v2568
    %3499 = vmatprep.subr.bf16.mxu0 %v2561
    %3500 = vmatpush1.bf16.msra.mxu0 %v2560
    %3501 = vmatprep.subr.bf16.mxu0 %v2681
    %3502 = vmatpush2.bf16.msra.mxu0 %v2680
    %3503 = vmatprep.subr.bf16.mxu0 %v2673
    %3504 = vmatpush2.bf16.msra.mxu0 %v2672
    %3505 = vmatprep.subr.bf16.mxu0 %v2665
    %3506 = vmatpush2.bf16.msra.mxu0 %v2664
    %3507 = vmatprep.subr.bf16.mxu0 %v2657
    %3508 = vmatpush2.bf16.msra.mxu0 %v2656
    %3509 = vmatprep.subr.bf16.mxu0 %v2649
    %3510 = vmatpush2.bf16.msra.mxu0 %v2648
    %3511 = vmatprep.subr.bf16.mxu0 %v2641
    %3512 = vmatpush2.bf16.msra.mxu0 %v2640
    %3513 = vmatprep.subr.bf16.mxu0 %v2633
    %3514 = vmatpush2.bf16.msra.mxu0 %v2632
    %3515 = vmatprep.subr.bf16.mxu0 %v2625
    %3516 = vmatpush2.bf16.msra.mxu0 %v2624
    %3517 = vmatprep.mubr.bf16.mxu0 %v629
    %3518 = vmatmul.mubr.bf16.gmra.mxu0 %v627
    %v3519 = vpop.f32.mrf.mxu0
    %v3520 = vadd.f32 %v3479, %v3519
    %v3521 = vpop.f32.mrf.mxu0
    %v3522 = vadd.f32 %v3481, %v3521
    %v3523 = vpop.f32.mrf.mxu0
    %v3524 = vpop.f32.mrf.mxu0
    %3525 = vdwg.mxu0
    %3526 = vmatprep.subr.bf16.mxu0 %v2235
    %3527 = vmatpush1.bf16.msra.mxu0 %v2234
    %3528 = vmatprep.subr.bf16.mxu0 %v2227
    %3529 = vmatpush1.bf16.msra.mxu0 %v2226
    %3530 = vmatprep.subr.bf16.mxu0 %v2219
    %3531 = vmatpush1.bf16.msra.mxu0 %v2218
    %3532 = vmatprep.subr.bf16.mxu0 %v2211
    %3533 = vmatpush1.bf16.msra.mxu0 %v2210
    %3534 = vmatprep.subr.bf16.mxu0 %v2203
    %3535 = vmatpush1.bf16.msra.mxu0 %v2202
    %3536 = vmatprep.subr.bf16.mxu0 %v2195
    %3537 = vmatpush1.bf16.msra.mxu0 %v2194
    %3538 = vmatprep.subr.bf16.mxu0 %v2187
    %3539 = vmatpush1.bf16.msra.mxu0 %v2186
    %3540 = vmatprep.subr.bf16.mxu0 %v2179
    %3541 = vmatpush1.bf16.msra.mxu0 %v2178
    %3542 = vmatprep.subr.bf16.mxu0 %v2299
    %3543 = vmatpush2.bf16.msra.mxu0 %v2298
    %3544 = vmatprep.subr.bf16.mxu0 %v2291
    %3545 = vmatpush2.bf16.msra.mxu0 %v2290
    %3546 = vmatprep.subr.bf16.mxu0 %v2283
    %3547 = vmatpush2.bf16.msra.mxu0 %v2282
    %3548 = vmatprep.subr.bf16.mxu0 %v2275
    %3549 = vmatpush2.bf16.msra.mxu0 %v2274
    %3550 = vmatprep.subr.bf16.mxu0 %v2267
    %3551 = vmatpush2.bf16.msra.mxu0 %v2266
    %3552 = vmatprep.subr.bf16.mxu0 %v2259
    %3553 = vmatpush2.bf16.msra.mxu0 %v2258
    %3554 = vmatprep.subr.bf16.mxu0 %v2251
    %3555 = vmatpush2.bf16.msra.mxu0 %v2250
    %3556 = vmatprep.subr.bf16.mxu0 %v2243
    %3557 = vmatpush2.bf16.msra.mxu0 %v2242
    %3558 = vmatprep.mubr.bf16.mxu0 %v618
    %3559 = vmatmul.mubr.bf16.gmra.mxu0 %v604
    %v3560 = vpop.f32.mrf.mxu0
    %v3561 = vadd.f32 0.0, %v3560
    %v3562 = vpop.f32.mrf.mxu0
    %v3563 = vadd.f32 0.0, %v3562
    %v3564 = vpop.f32.mrf.mxu0
    %v3565 = vpop.f32.mrf.mxu0
    %3566 = vdwg.mxu0
    %3567 = vmatprep.subr.bf16.mxu0 %v2363
    %3568 = vmatpush1.bf16.msra.mxu0 %v2362
    %3569 = vmatprep.subr.bf16.mxu0 %v2355
    %3570 = vmatpush1.bf16.msra.mxu0 %v2354
    %3571 = vmatprep.subr.bf16.mxu0 %v2347
    %3572 = vmatpush1.bf16.msra.mxu0 %v2346
    %3573 = vmatprep.subr.bf16.mxu0 %v2339
    %3574 = vmatpush1.bf16.msra.mxu0 %v2338
    %3575 = vmatprep.subr.bf16.mxu0 %v2331
    %3576 = vmatpush1.bf16.msra.mxu0 %v2330
    %3577 = vmatprep.subr.bf16.mxu0 %v2323
    %3578 = vmatpush1.bf16.msra.mxu0 %v2322
    %3579 = vmatprep.subr.bf16.mxu0 %v2315
    %3580 = vmatpush1.bf16.msra.mxu0 %v2314
    %3581 = vmatprep.subr.bf16.mxu0 %v2307
    %3582 = vmatpush1.bf16.msra.mxu0 %v2306
    %3583 = vmatprep.subr.bf16.mxu0 %v2427
    %3584 = vmatpush2.bf16.msra.mxu0 %v2426
    %3585 = vmatprep.subr.bf16.mxu0 %v2419
    %3586 = vmatpush2.bf16.msra.mxu0 %v2418
    %3587 = vmatprep.subr.bf16.mxu0 %v2411
    %3588 = vmatpush2.bf16.msra.mxu0 %v2410
    %3589 = vmatprep.subr.bf16.mxu0 %v2403
    %3590 = vmatpush2.bf16.msra.mxu0 %v2402
    %3591 = vmatprep.subr.bf16.mxu0 %v2395
    %3592 = vmatpush2.bf16.msra.mxu0 %v2394
    %3593 = vmatprep.subr.bf16.mxu0 %v2387
    %3594 = vmatpush2.bf16.msra.mxu0 %v2386
    %3595 = vmatprep.subr.bf16.mxu0 %v2379
    %3596 = vmatpush2.bf16.msra.mxu0 %v2378
    %3597 = vmatprep.subr.bf16.mxu0 %v2371
    %3598 = vmatpush2.bf16.msra.mxu0 %v2370
    %3599 = vmatprep.mubr.bf16.mxu0 %v628
    %3600 = vmatmul.mubr.bf16.gmra.mxu0 %v626
    %v3601 = vpop.f32.mrf.mxu0
    %v3602 = vadd.f32 %v3561, %v3601
    %v3603 = vpop.f32.mrf.mxu0
    %v3604 = vadd.f32 %v3563, %v3603
    %v3605 = vpop.f32.mrf.mxu0
    %v3606 = vpop.f32.mrf.mxu0
    %3607 = vdwg.mxu0
    %3608 = vmatprep.subr.bf16.mxu0 %v2491
    %3609 = vmatpush1.bf16.msra.mxu0 %v2490
    %3610 = vmatprep.subr.bf16.mxu0 %v2483
    %3611 = vmatpush1.bf16.msra.mxu0 %v2482
    %3612 = vmatprep.subr.bf16.mxu0 %v2475
    %3613 = vmatpush1.bf16.msra.mxu0 %v2474
    %3614 = vmatprep.subr.bf16.mxu0 %v2467
    %3615 = vmatpush1.bf16.msra.mxu0 %v2466
    %3616 = vmatprep.subr.bf16.mxu0 %v2459
    %3617 = vmatpush1.bf16.msra.mxu0 %v2458
    %3618 = vmatprep.subr.bf16.mxu0 %v2451
    %3619 = vmatpush1.bf16.msra.mxu0 %v2450
    %3620 = vmatprep.subr.bf16.mxu0 %v2443
    %3621 = vmatpush1.bf16.msra.mxu0 %v2442
    %3622 = vmatprep.subr.bf16.mxu0 %v2435
    %3623 = vmatpush1.bf16.msra.mxu0 %v2434
    %3624 = vmatprep.subr.bf16.mxu0 %v2555
    %3625 = vmatpush2.bf16.msra.mxu0 %v2554
    %3626 = vmatprep.subr.bf16.mxu0 %v2547
    %3627 = vmatpush2.bf16.msra.mxu0 %v2546
    %3628 = vmatprep.subr.bf16.mxu0 %v2539
    %3629 = vmatpush2.bf16.msra.mxu0 %v2538
    %3630 = vmatprep.subr.bf16.mxu0 %v2531
    %3631 = vmatpush2.bf16.msra.mxu0 %v2530
    %3632 = vmatprep.subr.bf16.mxu0 %v2523
    %3633 = vmatpush2.bf16.msra.mxu0 %v2522
    %3634 = vmatprep.subr.bf16.mxu0 %v2515
    %3635 = vmatpush2.bf16.msra.mxu0 %v2514
    %3636 = vmatprep.subr.bf16.mxu0 %v2507
    %3637 = vmatpush2.bf16.msra.mxu0 %v2506
    %3638 = vmatprep.subr.bf16.mxu0 %v2499
    %3639 = vmatpush2.bf16.msra.mxu0 %v2498
    %3640 = vmatprep.mubr.bf16.mxu0 %v625
    %3641 = vmatmul.mubr.bf16.gmra.mxu0 %v611
    %v3642 = vpop.f32.mrf.mxu0
    %v3643 = vadd.f32 %v3602, %v3642
    %v3644 = vpop.f32.mrf.mxu0
    %v3645 = vadd.f32 %v3604, %v3644
    %v3646 = vpop.f32.mrf.mxu0
    %v3647 = vpop.f32.mrf.mxu0
    %3648 = vdwg.mxu0
    %3649 = vmatprep.subr.bf16.mxu0 %v2619
    %3650 = vmatpush1.bf16.msra.mxu0 %v2618
    %3651 = vmatprep.subr.bf16.mxu0 %v2611
    %3652 = vmatpush1.bf16.msra.mxu0 %v2610
    %3653 = vmatprep.subr.bf16.mxu0 %v2603
    %3654 = vmatpush1.bf16.msra.mxu0 %v2602
    %3655 = vmatprep.subr.bf16.mxu0 %v2595
    %3656 = vmatpush1.bf16.msra.mxu0 %v2594
    %3657 = vmatprep.subr.bf16.mxu0 %v2587
    %3658 = vmatpush1.bf16.msra.mxu0 %v2586
    %3659 = vmatprep.subr.bf16.mxu0 %v2579
    %3660 = vmatpush1.bf16.msra.mxu0 %v2578
    %3661 = vmatprep.subr.bf16.mxu0 %v2571
    %3662 = vmatpush1.bf16.msra.mxu0 %v2570
    %3663 = vmatprep.subr.bf16.mxu0 %v2563
    %3664 = vmatpush1.bf16.msra.mxu0 %v2562
    %3665 = vmatprep.subr.bf16.mxu0 %v2683
    %3666 = vmatpush2.bf16.msra.mxu0 %v2682
    %3667 = vmatprep.subr.bf16.mxu0 %v2675
    %3668 = vmatpush2.bf16.msra.mxu0 %v2674
    %3669 = vmatprep.subr.bf16.mxu0 %v2667
    %3670 = vmatpush2.bf16.msra.mxu0 %v2666
    %3671 = vmatprep.subr.bf16.mxu0 %v2659
    %3672 = vmatpush2.bf16.msra.mxu0 %v2658
    %3673 = vmatprep.subr.bf16.mxu0 %v2651
    %3674 = vmatpush2.bf16.msra.mxu0 %v2650
    %3675 = vmatprep.subr.bf16.mxu0 %v2643
    %3676 = vmatpush2.bf16.msra.mxu0 %v2642
    %3677 = vmatprep.subr.bf16.mxu0 %v2635
    %3678 = vmatpush2.bf16.msra.mxu0 %v2634
    %3679 = vmatprep.subr.bf16.mxu0 %v2627
    %3680 = vmatpush2.bf16.msra.mxu0 %v2626
    %3681 = vmatprep.mubr.bf16.mxu0 %v629
    %3682 = vmatmul.mubr.bf16.gmra.mxu0 %v627
    %v3683 = vpop.f32.mrf.mxu0
    %v3684 = vadd.f32 %v3643, %v3683
    %v3685 = vpop.f32.mrf.mxu0
    %v3686 = vadd.f32 %v3645, %v3685
    %v3687 = vpop.f32.mrf.mxu0
    %v3688 = vpop.f32.mrf.mxu0
    %3689 = vdwg.mxu0
    %3690 = vmatprep.subr.bf16.mxu0 %v2237
    %3691 = vmatpush1.bf16.msra.mxu0 %v2236
    %3692 = vmatprep.subr.bf16.mxu0 %v2229
    %3693 = vmatpush1.bf16.msra.mxu0 %v2228
    %3694 = vmatprep.subr.bf16.mxu0 %v2221
    %3695 = vmatpush1.bf16.msra.mxu0 %v2220
    %3696 = vmatprep.subr.bf16.mxu0 %v2213
    %3697 = vmatpush1.bf16.msra.mxu0 %v2212
    %3698 = vmatprep.subr.bf16.mxu0 %v2205
    %3699 = vmatpush1.bf16.msra.mxu0 %v2204
    %3700 = vmatprep.subr.bf16.mxu0 %v2197
    %3701 = vmatpush1.bf16.msra.mxu0 %v2196
    %3702 = vmatprep.subr.bf16.mxu0 %v2189
    %3703 = vmatpush1.bf16.msra.mxu0 %v2188
    %3704 = vmatprep.subr.bf16.mxu0 %v2181
    %3705 = vmatpush1.bf16.msra.mxu0 %v2180
    %3706 = vmatprep.subr.bf16.mxu0 %v2301
    %3707 = vmatpush2.bf16.msra.mxu0 %v2300
    %3708 = vmatprep.subr.bf16.mxu0 %v2293
    %3709 = vmatpush2.bf16.msra.mxu0 %v2292
    %3710 = vmatprep.subr.bf16.mxu0 %v2285
    %3711 = vmatpush2.bf16.msra.mxu0 %v2284
    %3712 = vmatprep.subr.bf16.mxu0 %v2277
    %3713 = vmatpush2.bf16.msra.mxu0 %v2276
    %3714 = vmatprep.subr.bf16.mxu0 %v2269
    %3715 = vmatpush2.bf16.msra.mxu0 %v2268
    %3716 = vmatprep.subr.bf16.mxu0 %v2261
    %3717 = vmatpush2.bf16.msra.mxu0 %v2260
    %3718 = vmatprep.subr.bf16.mxu0 %v2253
    %3719 = vmatpush2.bf16.msra.mxu0 %v2252
    %3720 = vmatprep.subr.bf16.mxu0 %v2245
    %3721 = vmatpush2.bf16.msra.mxu0 %v2244
    %3722 = vmatprep.mubr.bf16.mxu0 %v618
    %3723 = vmatmul.mubr.bf16.gmra.mxu0 %v604
    %v3724 = vpop.f32.mrf.mxu0
    %v3725 = vadd.f32 0.0, %v3724
    %v3726 = vpop.f32.mrf.mxu0
    %v3727 = vadd.f32 0.0, %v3726
    %v3728 = vpop.f32.mrf.mxu0
    %v3729 = vpop.f32.mrf.mxu0
    %3730 = vdwg.mxu0
    %3731 = vmatprep.subr.bf16.mxu0 %v2365
    %3732 = vmatpush1.bf16.msra.mxu0 %v2364
    %3733 = vmatprep.subr.bf16.mxu0 %v2357
    %3734 = vmatpush1.bf16.msra.mxu0 %v2356
    %3735 = vmatprep.subr.bf16.mxu0 %v2349
    %3736 = vmatpush1.bf16.msra.mxu0 %v2348
    %3737 = vmatprep.subr.bf16.mxu0 %v2341
    %3738 = vmatpush1.bf16.msra.mxu0 %v2340
    %3739 = vmatprep.subr.bf16.mxu0 %v2333
    %3740 = vmatpush1.bf16.msra.mxu0 %v2332
    %3741 = vmatprep.subr.bf16.mxu0 %v2325
    %3742 = vmatpush1.bf16.msra.mxu0 %v2324
    %3743 = vmatprep.subr.bf16.mxu0 %v2317
    %3744 = vmatpush1.bf16.msra.mxu0 %v2316
    %3745 = vmatprep.subr.bf16.mxu0 %v2309
    %3746 = vmatpush1.bf16.msra.mxu0 %v2308
    %3747 = vmatprep.subr.bf16.mxu0 %v2429
    %3748 = vmatpush2.bf16.msra.mxu0 %v2428
    %3749 = vmatprep.subr.bf16.mxu0 %v2421
    %3750 = vmatpush2.bf16.msra.mxu0 %v2420
    %3751 = vmatprep.subr.bf16.mxu0 %v2413
    %3752 = vmatpush2.bf16.msra.mxu0 %v2412
    %3753 = vmatprep.subr.bf16.mxu0 %v2405
    %3754 = vmatpush2.bf16.msra.mxu0 %v2404
    %3755 = vmatprep.subr.bf16.mxu0 %v2397
    %3756 = vmatpush2.bf16.msra.mxu0 %v2396
    %3757 = vmatprep.subr.bf16.mxu0 %v2389
    %3758 = vmatpush2.bf16.msra.mxu0 %v2388
    %3759 = vmatprep.subr.bf16.mxu0 %v2381
    %3760 = vmatpush2.bf16.msra.mxu0 %v2380
    %3761 = vmatprep.subr.bf16.mxu0 %v2373
    %3762 = vmatpush2.bf16.msra.mxu0 %v2372
    %3763 = vmatprep.mubr.bf16.mxu0 %v628
    %3764 = vmatmul.mubr.bf16.gmra.mxu0 %v626
    %v3765 = vpop.f32.mrf.mxu0
    %v3766 = vadd.f32 %v3725, %v3765
    %v3767 = vpop.f32.mrf.mxu0
    %v3768 = vadd.f32 %v3727, %v3767
    %v3769 = vpop.f32.mrf.mxu0
    %v3770 = vpop.f32.mrf.mxu0
    %3771 = vdwg.mxu0
    %3772 = vmatprep.subr.bf16.mxu0 %v2493
    %3773 = vmatpush1.bf16.msra.mxu0 %v2492
    %3774 = vmatprep.subr.bf16.mxu0 %v2485
    %3775 = vmatpush1.bf16.msra.mxu0 %v2484
    %3776 = vmatprep.subr.bf16.mxu0 %v2477
    %3777 = vmatpush1.bf16.msra.mxu0 %v2476
    %3778 = vmatprep.subr.bf16.mxu0 %v2469
    %3779 = vmatpush1.bf16.msra.mxu0 %v2468
    %3780 = vmatprep.subr.bf16.mxu0 %v2461
    %3781 = vmatpush1.bf16.msra.mxu0 %v2460
    %3782 = vmatprep.subr.bf16.mxu0 %v2453
    %3783 = vmatpush1.bf16.msra.mxu0 %v2452
    %3784 = vmatprep.subr.bf16.mxu0 %v2445
    %3785 = vmatpush1.bf16.msra.mxu0 %v2444
    %3786 = vmatprep.subr.bf16.mxu0 %v2437
    %3787 = vmatpush1.bf16.msra.mxu0 %v2436
    %3788 = vmatprep.subr.bf16.mxu0 %v2557
    %3789 = vmatpush2.bf16.msra.mxu0 %v2556
    %3790 = vmatprep.subr.bf16.mxu0 %v2549
    %3791 = vmatpush2.bf16.msra.mxu0 %v2548
    %3792 = vmatprep.subr.bf16.mxu0 %v2541
    %3793 = vmatpush2.bf16.msra.mxu0 %v2540
    %3794 = vmatprep.subr.bf16.mxu0 %v2533
    %3795 = vmatpush2.bf16.msra.mxu0 %v2532
    %3796 = vmatprep.subr.bf16.mxu0 %v2525
    %3797 = vmatpush2.bf16.msra.mxu0 %v2524
    %3798 = vmatprep.subr.bf16.mxu0 %v2517
    %3799 = vmatpush2.bf16.msra.mxu0 %v2516
    %3800 = vmatprep.subr.bf16.mxu0 %v2509
    %3801 = vmatpush2.bf16.msra.mxu0 %v2508
    %3802 = vmatprep.subr.bf16.mxu0 %v2501
    %3803 = vmatpush2.bf16.msra.mxu0 %v2500
    %3804 = vmatprep.mubr.bf16.mxu0 %v625
    %3805 = vmatmul.mubr.bf16.gmra.mxu0 %v611
    %v3806 = vpop.f32.mrf.mxu0
    %v3807 = vadd.f32 %v3766, %v3806
    %v3808 = vpop.f32.mrf.mxu0
    %v3809 = vadd.f32 %v3768, %v3808
    %v3810 = vpop.f32.mrf.mxu0
    %v3811 = vpop.f32.mrf.mxu0
    %3812 = vdwg.mxu0
    %3813 = vmatprep.subr.bf16.mxu0 %v2621
    %3814 = vmatpush1.bf16.msra.mxu0 %v2620
    %3815 = vmatprep.subr.bf16.mxu0 %v2613
    %3816 = vmatpush1.bf16.msra.mxu0 %v2612
    %3817 = vmatprep.subr.bf16.mxu0 %v2605
    %3818 = vmatpush1.bf16.msra.mxu0 %v2604
    %3819 = vmatprep.subr.bf16.mxu0 %v2597
    %3820 = vmatpush1.bf16.msra.mxu0 %v2596
    %3821 = vmatprep.subr.bf16.mxu0 %v2589
    %3822 = vmatpush1.bf16.msra.mxu0 %v2588
    %3823 = vmatprep.subr.bf16.mxu0 %v2581
    %3824 = vmatpush1.bf16.msra.mxu0 %v2580
    %3825 = vmatprep.subr.bf16.mxu0 %v2573
    %3826 = vmatpush1.bf16.msra.mxu0 %v2572
    %3827 = vmatprep.subr.bf16.mxu0 %v2565
    %3828 = vmatpush1.bf16.msra.mxu0 %v2564
    %3829 = vmatprep.subr.bf16.mxu0 %v2685
    %3830 = vmatpush2.bf16.msra.mxu0 %v2684
    %3831 = vmatprep.subr.bf16.mxu0 %v2677
    %3832 = vmatpush2.bf16.msra.mxu0 %v2676
    %3833 = vmatprep.subr.bf16.mxu0 %v2669
    %3834 = vmatpush2.bf16.msra.mxu0 %v2668
    %3835 = vmatprep.subr.bf16.mxu0 %v2661
    %3836 = vmatpush2.bf16.msra.mxu0 %v2660
    %3837 = vmatprep.subr.bf16.mxu0 %v2653
    %3838 = vmatpush2.bf16.msra.mxu0 %v2652
    %3839 = vmatprep.subr.bf16.mxu0 %v2645
    %3840 = vmatpush2.bf16.msra.mxu0 %v2644
    %3841 = vmatprep.subr.bf16.mxu0 %v2637
    %3842 = vmatpush2.bf16.msra.mxu0 %v2636
    %3843 = vmatprep.subr.bf16.mxu0 %v2629
    %3844 = vmatpush2.bf16.msra.mxu0 %v2628
    %3845 = vmatprep.mubr.bf16.mxu0 %v629
    %3846 = vmatmul.mubr.bf16.gmra.mxu0 %v627
    %v3847 = vpop.f32.mrf.mxu0
    %v3848 = vadd.f32 %v3807, %v3847
    %v3849 = vpop.f32.mrf.mxu0
    %v3850 = vadd.f32 %v3809, %v3849
    %v3851 = vpop.f32.mrf.mxu0
    %v3852 = vpop.f32.mrf.mxu0
    %3853 = vdwg.mxu0
    %v3854 = vmax.f32 %v3356, 0.0
    %v3855 = vmax.f32 %v3358, 0.0
    %v3856 = vmax.f32 %v3520, 0.0
    %v3857 = vmax.f32 %v3522, 0.0
    %v3858 = vmax.f32 %v3684, 0.0
    %v3859 = vmax.f32 %v3686, 0.0
    %v3860 = vmax.f32 %v3848, 0.0
    %v3861 = vmax.f32 %v3850, 0.0
    %v3862 = vld [vmem:[#allocation7] sm:$0xff]
    %v3864 = vlaneseq
    %v3865 = vshrl.u32 %v3864, 7
    %v3866 = vsub.s32 0, %v3865
    %v3867 = vrot.slane %v3862, %v3866
    %v3868 = vlaneseq
    %v3869 = vshrl.u32 %v3868, 7
    %v3870 = vsub.s32 1, %v3869
    %v3871 = vrot.slane %v3862, %v3870
    %v3872 = vlaneseq
    %v3873 = vshrl.u32 %v3872, 7
    %v3874 = vsub.s32 2, %v3873
    %v3875 = vrot.slane %v3862, %v3874
    %v3876 = vlaneseq
    %v3877 = vshrl.u32 %v3876, 7
    %v3878 = vsub.s32 3, %v3877
    %v3879 = vrot.slane %v3862, %v3878
    %v3880 = vlaneseq
    %v3881 = vshrl.u32 %v3880, 7
    %v3882 = vsub.s32 4, %v3881
    %v3883 = vrot.slane %v3862, %v3882
    %v3884 = vlaneseq
    %v3885 = vshrl.u32 %v3884, 7
    %v3886 = vsub.s32 5, %v3885
    %v3887 = vrot.slane %v3862, %v3886
    %v3888 = vlaneseq
    %v3889 = vshrl.u32 %v3888, 7
    %v3890 = vsub.s32 6, %v3889
    %v3891 = vrot.slane %v3862, %v3890
    %v3892 = vlaneseq
    %v3893 = vshrl.u32 %v3892, 7
    %v3894 = vsub.s32 7, %v3893
    %v3895 = vrot.slane %v3862, %v3894
    %v3904 = vmul.f32 %v3854, %v3867
    %v3905 = vmul.f32 %v3855, %v3871
    %v3906 = vmul.f32 %v3856, %v3875
    %v3907 = vmul.f32 %v3857, %v3879
    %v3908 = vmul.f32 %v3858, %v3883
    %v3909 = vmul.f32 %v3859, %v3887
    %v3910 = vmul.f32 %v3860, %v3891
    %v3911 = vmul.f32 %v3861, %v3895
    %v3912 = vld [vmem:[#allocation8] sm:$0xff]
    %v3914 = vlaneseq
    %v3915 = vshrl.u32 %v3914, 7
    %v3916 = vsub.s32 0, %v3915
    %v3917 = vrot.slane %v3912, %v3916
    %v3918 = vlaneseq
    %v3919 = vshrl.u32 %v3918, 7
    %v3920 = vsub.s32 1, %v3919
    %v3921 = vrot.slane %v3912, %v3920
    %v3922 = vlaneseq
    %v3923 = vshrl.u32 %v3922, 7
    %v3924 = vsub.s32 2, %v3923
    %v3925 = vrot.slane %v3912, %v3924
    %v3926 = vlaneseq
    %v3927 = vshrl.u32 %v3926, 7
    %v3928 = vsub.s32 3, %v3927
    %v3929 = vrot.slane %v3912, %v3928
    %v3930 = vlaneseq
    %v3931 = vshrl.u32 %v3930, 7
    %v3932 = vsub.s32 4, %v3931
    %v3933 = vrot.slane %v3912, %v3932
    %v3934 = vlaneseq
    %v3935 = vshrl.u32 %v3934, 7
    %v3936 = vsub.s32 5, %v3935
    %v3937 = vrot.slane %v3912, %v3936
    %v3938 = vlaneseq
    %v3939 = vshrl.u32 %v3938, 7
    %v3940 = vsub.s32 6, %v3939
    %v3941 = vrot.slane %v3912, %v3940
    %v3942 = vlaneseq
    %v3943 = vshrl.u32 %v3942, 7
    %v3944 = vsub.s32 7, %v3943
    %v3945 = vrot.slane %v3912, %v3944
    %v3954 = vadd.f32 %v3904, %v3917
    %v3955 = vadd.f32 %v3905, %v3921
    %v3956 = vadd.f32 %v3906, %v3925
    %v3957 = vadd.f32 %v3907, %v3929
    %v3958 = vadd.f32 %v3908, %v3933
    %v3959 = vadd.f32 %v3909, %v3937
    %v3960 = vadd.f32 %v3910, %v3941
    %v3961 = vadd.f32 %v3911, %v3945
    %v3970 = vcombine.low %v3954, %v3955
    %v3971 = vcombine.low %v3956, %v3957
    %v3973 = vunpack.c.l.s4 1983009808
    %v3974 = vunpack.c.0.s8 %v3973
    %v3975 = vlaneseq
    %v3976 = vshrl.u32 %v3975, 7
    %v3977 = vsub.s32 %v3974, %v3976
    %v3978 = vrot.slane %v3970, %v3977
    %v3980 = vunpack.c.l.s4 1983009808
    %v3981 = vunpack.c.0.s8 %v3980
    %v3982 = vlaneseq
    %v3983 = vshrl.u32 %v3982, 7
    %v3984 = vsub.s32 %v3981, %v3983
    %v3985 = vrot.slane %v3971, %v3984
    %v3986 = vcombine.low %v3978, %v3985
    %v3987 = vcombine.low %v3958, %v3959
    %v3988 = vcombine.low %v3960, %v3961
    %v3990 = vunpack.c.l.s4 1983009808
    %v3991 = vunpack.c.0.s8 %v3990
    %v3992 = vlaneseq
    %v3993 = vshrl.u32 %v3992, 7
    %v3994 = vsub.s32 %v3991, %v3993
    %v3995 = vrot.slane %v3987, %v3994
    %v3997 = vunpack.c.l.s4 1983009808
    %v3998 = vunpack.c.0.s8 %v3997
    %v3999 = vlaneseq
    %v4000 = vshrl.u32 %v3999, 7
    %v4001 = vsub.s32 %v3998, %v4000
    %v4002 = vrot.slane %v3988, %v4001
    %v4003 = vcombine.low %v3995, %v4002
    %4006 = vst [vmem:[#allocation10] sm:$0xff] %v3986
    %4007 = vst [vmem:[#allocation10 + $0x8] sm:$0xff] %v4003
    // Predicated region
    $region34: #{tpu_custom_call.1} parent=1 // pred_check
      _
    $region35: #{tpu_custom_call.1} parent=1 // pred_check_branch
      %4009 = sbr.rel (0) target = $region37
    $region36: #{tpu_custom_call.1} parent=1 // pred_region
      %s4011 = ssub.s32 256, 256
      %4012 = vsyncadd [#allocation4], %s4011
      %s4014 = sshll.u32 [#allocation10], 4
      %s4015 = int_to_ptr.vmem [resolvable:$true] %s4014
      %4017 = dma.vmem_to_hbm [thread:$0]  %s4015, 256, %s4, [#allocation4]
    $region37: #{tpu_custom_call.1} parent=1 // pred_fallthru
      _
    // Predicated region
    $region38: #{tpu_custom_call.1} parent=1 // pred_check
      _
    $region39: #{tpu_custom_call.1} parent=1 // pred_check_branch
      %4019 = sbr.rel (0) target = $region41
    $region40: #{tpu_custom_call.1} parent=1 // pred_region
      %4020 = dma.done [#allocation4], 256
    $region41: #{tpu_custom_call.1} parent=1 // pred_fallthru
      _
    %4021 = vsyncpa [#allocation3], 1
    %4022 = vsyncpa [#allocation6], 1
    %4023 = vsyncpa [#allocation9], 1
    %4024 = vsyncpa [#allocation4], 1

</llo_original>
